<compile_context>
chip_gen: v5e
topology: v5e:2x2
jax: 0.10.0
libtpu: 0.0.40
codegen_flags: <defaults>
</compile_context>

<pallas_src>
import functools

import jax
import jax.numpy as jnp
from jax.experimental import pallas as pl
from jax.experimental.pallas import tpu as pltpu

D_MODEL = 32
NHEAD = 4
TXT_DIM = 768
LN_EPS = 1e-5

# order of the prepared-weight arguments fed to the kernel
_KP_ORDER = (
    "proj_lng", "proj_lnb", "proj_w", "proj_b",
    "sa_wqkv", "sa_bqkv", "sa_wp", "sa_bp",
    "ln1_g", "ln1_b",
    "sa_mask0", "sa_mask1", "sa_mask2",
    "ca_wq", "ca_bq", "ca_wkv", "ca_bkv", "ca_wp", "ca_bp",
    "ca_ng", "ca_nb", "ca_w1", "ca_b1", "ca_w2", "ca_b2",
    "ca_mask",
    "lnf_g", "lnf_b",
)


# ------------------------------ the fused kernel -----------------------------

def disformer_kernel(
        # per-batch activations (one batch element per grid step)
        txt_ref, attq_ref, objq_ref, patch_ref,
        # fused text projection (stacked streams: LN row tables + lane-concat weights)
        proj_lng_ref, proj_lnb_ref, proj_w_ref, proj_b_ref,
        # stacked self-attention params (0=sa_a, 1=sa_o, 2=sa), QKV fused as (C,3C)
        sa_wqkv_ref, sa_bqkv_ref, sa_wp_ref, sa_bp_ref,
        # post-self-attention layernorms (0=norm_att1, 1=norm_obj1, 2=norm)
        ln1_g_ref, ln1_b_ref,
        # head-separation masks for the per-stream self-attentions
        sa_mask0_ref, sa_mask1_ref, sa_mask2_ref,
        # shared cross-attention layer (att_ca)
        ca_wq_ref, ca_bq_ref, ca_wkv_ref, ca_bkv_ref, ca_wp_ref, ca_bp_ref,
        ca_ng_ref, ca_nb_ref, ca_w1_ref, ca_b1_ref, ca_w2_ref, ca_b2_ref,
        ca_mask_ref,
        # final layernorms, expanded to per-row tables (att rows / obj rows / com rows)
        lnf_g_ref, lnf_b_ref,
        # packed output (1, N_total, C)
        out_ref,
        # VMEM scratch holding the stream-stacked activations
        x_sc,
        *, nhead):
    f32 = jnp.float32
    bf16 = jnp.bfloat16

    txt = txt_ref[0]      # (3T, 768) — att/obj/com text stacked along rows
    attq = attq_ref[0]    # (NA, C)
    objq = objq_ref[0]    # (NO, C)
    patch = patch_ref[0]  # (P,  C)

    T = txt.shape[0] // 3
    NA = attq.shape[0]
    NO = objq.shape[0]
    C = patch.shape[1]
    dh = C // nhead

    n_att = T + NA
    n_obj = T + NO
    base_com = n_att + n_obj
    n_total = base_com + T + NA + NO

    def layernorm(x, g, b):
        mean = jnp.mean(x, axis=-1, keepdims=True)
        var = jnp.mean(jnp.square(x - mean), axis=-1, keepdims=True)
        return (x - mean) * jax.lax.rsqrt(var + LN_EPS) * g + b

    def dot_bf16(x, w):
        # bf16 operands, f32 accumulation on the MXU
        return jnp.dot(x.astype(w.dtype), w, preferred_element_type=f32)

    def mha(q, k, v, head_mask, wp, bp):
        """Head-fused multi-head attention.

        q:(N,C) k,v:(M,C).  head_mask:(nhead*M, C) bf16, mask[h*M+m, c] = 1 iff
        c // dh == h.  The 1/sqrt(dh) scale is pre-folded into the Q weights.
        One scores matmul + one PV matmul per call; softmax max/sum are exact
        per-head lane-chunk reductions, normalization deferred past PV.
        """
        N, M = q.shape[0], k.shape[0]
        kb = k.astype(bf16)
        vb = v.astype(bf16)
        k_rep = jnp.concatenate([kb] * nhead, axis=0) * head_mask    # (nhead*M, C)
        v_rep = jnp.concatenate([vb] * nhead, axis=0) * head_mask    # (nhead*M, C)
        # scores: column block h holds Q_h @ K_h^T  (cross-head terms are zero)
        s = jax.lax.dot_general(q.astype(bf16), k_rep,
                                (((1,), (1,)), ((), ())),
                                preferred_element_type=f32)          # (N, nhead*M)
        # exact per-head max (softmax invariant to the constant, so errors harmless)
        mx = [jnp.max(s[:, h * M:(h + 1) * M], axis=-1, keepdims=True)
              for h in range(nhead)]
        mx_full = jnp.concatenate(
            [jnp.broadcast_to(m, (N, M)) for m in mx], axis=-1)      # (N, nhead*M)
        p = jnp.exp(s - mx_full)
        den = [jnp.sum(p[:, h * M:(h + 1) * M], axis=-1, keepdims=True)
               for h in range(nhead)]
        den_c = jnp.concatenate(
            [jnp.broadcast_to(d, (N, dh)) for d in den], axis=-1)    # (N, C)
        o = jnp.dot(p.astype(bf16), v_rep, preferred_element_type=f32)  # (N, C)
        o = o * pl.reciprocal(den_c, approx=True)
        return dot_bf16(o, wp) + bp

    # ---- Stage 1: fused text projections (one LN + one matmul for all 3 streams)
    ht = layernorm(txt, proj_lng_ref[...], proj_lnb_ref[...])        # (3T, 768)
    proj = dot_bf16(ht, proj_w_ref[...]) + proj_b_ref[...]           # (3T, 3C)

    # ---- Stage 2: assemble the stream-stacked (N_total, C) buffer in VMEM scratch
    x_sc[0:T, :] = proj[0:T, 0:C]                                    # att text
    x_sc[T:n_att, :] = attq                                          # att queries
    x_sc[n_att:n_att + T, :] = proj[T:2 * T, C:2 * C]                # obj text
    x_sc[n_att + T:base_com, :] = objq                               # obj queries
    x_sc[base_com:base_com + T, :] = proj[2 * T:3 * T, 2 * C:3 * C]  # com text
    x_sc[base_com + T:base_com + T + NA, :] = attq                   # com queries
    x_sc[base_com + T + NA:n_total, :] = objq

    # ---- Stage 3: per-stream self-attention (+ residual + LayerNorm), in place
    bounds = ((0, n_att), (n_att, base_com), (base_com, n_total))
    sa_masks = (sa_mask0_ref, sa_mask1_ref, sa_mask2_ref)
    for i, (lo, hi) in enumerate(bounds):                            # statically unrolled
        x = x_sc[lo:hi, :]
        qkv = dot_bf16(x, sa_wqkv_ref[i]) + sa_bqkv_ref[i]           # (Ni, 3C)
        sa_out = mha(qkv[:, :C], qkv[:, C:2 * C], qkv[:, 2 * C:],
                     sa_masks[i][...], sa_wp_ref[i], sa_bp_ref[i])
        x_sc[lo:hi, :] = layernorm(x + sa_out, ln1_g_ref[i], ln1_b_ref[i])

    # ---- Stage 4: shared cross-attention (att_ca), batched over all 3 streams
    x = x_sc[...]                                                    # (N_total, C)
    patch_kv = dot_bf16(patch, ca_wkv_ref[...]) + ca_bkv_ref[...]    # (P, 2C)
    q = dot_bf16(x, ca_wq_ref[...]) + ca_bq_ref[...]
    x = x + mha(q, patch_kv[:, :C], patch_kv[:, C:],
                ca_mask_ref[...], ca_wp_ref[...], ca_bp_ref[...])
    h = layernorm(x, ca_ng_ref[...], ca_nb_ref[...])
    h = dot_bf16(h, ca_w1_ref[...]) + ca_b1_ref[...]
    h = h * jax.nn.sigmoid(1.702 * h)                                # QuickGELU
    x = x + dot_bf16(h, ca_w2_ref[...]) + ca_b2_ref[...]

    # ---- Stage 5: per-stream final LayerNorm via per-row gamma/beta tables
    out_ref[0] = layernorm(x, lnf_g_ref[...], lnf_b_ref[...])


# ------------------------------- kernel wrapper -------------------------------

def _batched_spec(arr, batch):
    nd = arr.ndim
    if arr.shape[0] == 1 and batch > 1:
        # broadcast over batch via the index_map (replaces torch's .repeat)
        index_map = (lambda b, nd=nd: (0,) * nd)
    else:
        index_map = (lambda b, nd=nd: (b,) + (0,) * (nd - 1))
    return pl.BlockSpec((1,) + arr.shape[1:], index_map)


def _const_spec(arr):
    nd = arr.ndim
    return pl.BlockSpec(arr.shape, lambda b, nd=nd: (0,) * nd)


def disformer_forward(kparams, batch_patch, att_query, obj_query,
                      att_txt, obj_txt, com_txt, nhead=NHEAD):
    B, P, C = batch_patch.shape
    T = att_txt.shape[1]
    NA = att_query.shape[1]
    NO = obj_query.shape[1]

    # shape validation (Pallas has no runtime bounds checks on VMEM refs)
    assert C % nhead == 0
    assert att_query.shape[0] in (1, B) and obj_query.shape[0] in (1, B)
    assert att_txt.shape == obj_txt.shape == com_txt.shape
    assert att_txt.shape[0] == B and obj_txt.shape[0] == B and com_txt.shape[0] == B

    n_att, n_obj = T + NA, T + NO
    n_com = T + NA + NO
    n_total = n_att + n_obj + n_com

    # prepared-weight consistency with the runtime shapes
    assert kparams["proj_lng"].shape == (3 * T, att_txt.shape[-1])
    assert kparams["lnf_g"].shape == (n_total, C)
    assert kparams["sa_mask0"].shape == (nhead * n_att, C)
    assert kparams["sa_mask1"].shape == (nhead * n_obj, C)
    assert kparams["sa_mask2"].shape == (nhead * n_com, C)
    assert kparams["ca_mask"].shape == (nhead * P, C)

    # stack the three text streams once (layout plumbing outside the kernel)
    txt_all = jnp.concatenate([att_txt, obj_txt, com_txt], axis=1)   # (B, 3T, 768)

    acts = [txt_all, att_query, obj_query, batch_patch]
    weights = [kparams[k] for k in _KP_ORDER]
    in_specs = ([_batched_spec(a, B) for a in acts]
                + [_const_spec(w) for w in weights])

    packed = pl.pallas_call(
        functools.partial(disformer_kernel, nhead=nhead),
        out_shape=jax.ShapeDtypeStruct((B, n_total, C), jnp.float32),
        grid=(B,),
        in_specs=in_specs,
        out_specs=pl.BlockSpec((1, n_total, C), lambda b: (b, 0, 0)),
        scratch_shapes=[pltpu.VMEM((n_total, C), jnp.float32)],
        compiler_params=pltpu.CompilerParams(dimension_semantics=("parallel",)),
    )(*acts, *weights)

    att_feat = packed[:, :n_att]
    obj_feat = packed[:, n_att:n_att + n_obj]
    com_feat = packed[:, n_att + n_obj:]
    return com_feat, att_feat, obj_feat


# --------------------------- parameter initialization --------------------------

def init_linear(key, fan_in, fan_out):
    kw, kb = jax.random.split(key)
    w = jax.random.normal(kw, (fan_in, fan_out), jnp.float32) * 0.02
    b = jax.random.normal(kb, (1, fan_out), jnp.float32) * 0.02
    return w, b


def init_ln(key, dim):
    kg, kb = jax.random.split(key)
    g = 1.0 + jax.random.normal(kg, (1, dim), jnp.float32) * 0.02
    b = jax.random.normal(kb, (1, dim), jnp.float32) * 0.02
    return g, b


def init_mha(key, dim, qkv_bias):
    k0, k1, k2, k3 = jax.random.split(key, 4)
    wq, bq = init_linear(k0, dim, dim)
    wk, bk = init_linear(k1, dim, dim)
    wv, bv = init_linear(k2, dim, dim)
    wp, bp = init_linear(k3, dim, dim)
    if not qkv_bias:
        bq = jnp.zeros_like(bq)
        bk = jnp.zeros_like(bk)
        bv = jnp.zeros_like(bv)
    return dict(wq=wq, bq=bq, wk=wk, bk=bk, wv=wv, bv=bv, wp=wp, bp=bp)


def init_ca(key, d):
    k1, k2, k3, k4 = jax.random.split(key, 4)
    attn = init_mha(k1, d, qkv_bias=False)  # MulitHeadAttention(d, nhead, proj_drop=dropout)
    norm = init_ln(k2, d)
    w1, b1 = init_linear(k3, d, 4 * d)
    w2, b2 = init_linear(k4, 4 * d, d)
    return dict(attn=attn, norm=norm, w1=w1, b1=b1, w2=w2, b2=b2)


def init_proj(key, cin, cout):
    k1, k2 = jax.random.split(key)
    g, beta = init_ln(k1, cin)
    w, b = init_linear(k2, cin, cout)
    return dict(g=g, beta=beta, w=w, b=b)


def init_disformer(key, d, nhead):
    keys = jax.random.split(key, 14)
    p = {}
    # sa / sa_a / sa_o: MulitHeadAttention(d, nhead, dropout) -> qkv_bias = dropout (truthy)
    p["sa"] = init_mha(keys[0], d, qkv_bias=True)
    p["sa_a"] = init_mha(keys[1], d, qkv_bias=True)
    p["sa_o"] = init_mha(keys[2], d, qkv_bias=True)
    p["att_ca"] = init_ca(keys[3], d)
    # obj_ca / com_ca exist in the torch module but are never used in forward.
    p["norm"] = init_ln(keys[4], d)
    p["norm_att"] = init_ln(keys[5], d)
    p["norm_obj"] = init_ln(keys[6], d)
    p["norm_com"] = init_ln(keys[7], d)
    p["norm_att1"] = init_ln(keys[8], d)
    p["norm_obj1"] = init_ln(keys[9], d)
    p["norm_com1"] = init_ln(keys[10], d)  # unused in forward (matches torch)
    p["att_proj"] = init_proj(keys[11], TXT_DIM, d)
    p["obj_proj"] = init_proj(keys[12], TXT_DIM, d)
    p["com_proj"] = init_proj(keys[13], TXT_DIM, d)
    return p


def prepare_kernel_params(p, *, txt_len, n_att_q, n_obj_q, n_patch,
                          nhead=NHEAD, compute_dtype=jnp.bfloat16):
    """One-time fuse / stack / mask-build / cast of weights for the fused kernel."""
    cd = compute_dtype
    d = p["sa"]["wq"].shape[0]
    dh = d // nhead
    scale = float(dh) ** -0.5
    T = txt_len

    def fuse_qkv_scaled(m):
        # fold the 1/sqrt(dh) attention scale into the Q projection (exact)
        wqkv = jnp.concatenate([m["wq"] * scale, m["wk"], m["wv"]], axis=1).astype(cd)
        bqkv = jnp.concatenate([m["bq"] * scale, m["bk"], m["bv"]], axis=1)
        return wqkv, bqkv, m["wp"].astype(cd), m["bp"]

    sa_fused = [fuse_qkv_scaled(p[k]) for k in ("sa_a", "sa_o", "sa")]  # stream order

    def head_mask(M):
        # mask[h*M + m, c] = 1 iff c // dh == h  (block-diagonal head separation)
        rows = jnp.arange(nhead * M) // M
        cols = jnp.arange(d) // dh
        return (rows[:, None] == cols[None, :]).astype(cd)

    # per-row LayerNorm tables for the fused text projection and final LNs
    projs = [p[k] for k in ("att_proj", "obj_proj", "com_proj")]
    txt_dim = projs[0]["g"].shape[-1]
    proj_lng = jnp.concatenate([jnp.broadcast_to(q["g"], (T, txt_dim)) for q in projs], axis=0)
    proj_lnb = jnp.concatenate([jnp.broadcast_to(q["beta"], (T, txt_dim)) for q in projs], axis=0)

    n_att, n_obj = T + n_att_q, T + n_obj_q
    n_com = T + n_att_q + n_obj_q
    lnf = ((p["norm_att"], n_att), (p["norm_obj"], n_obj), (p["norm_com"], n_com))
    lnf_g = jnp.concatenate([jnp.broadcast_to(ln[0], (n, d)) for ln, n in lnf], axis=0)
    lnf_b = jnp.concatenate([jnp.broadcast_to(ln[1], (n, d)) for ln, n in lnf], axis=0)

    ca = p["att_ca"]
    a = ca["attn"]
    kp = dict(
        proj_lng=proj_lng, proj_lnb=proj_lnb,                              # (3T, 768)
        proj_w=jnp.concatenate([q["w"] for q in projs], axis=1).astype(cd),  # (768, 3C)
        proj_b=jnp.concatenate([q["b"] for q in projs], axis=1),           # (1, 3C)
        sa_wqkv=jnp.stack([t[0] for t in sa_fused]),                       # (3,C,3C) bf16
        sa_bqkv=jnp.stack([t[1] for t in sa_fused]),                       # (3,1,3C)
        sa_wp=jnp.stack([t[2] for t in sa_fused]),                         # (3,C,C) bf16
        sa_bp=jnp.stack([t[3] for t in sa_fused]),                         # (3,1,C)
        ln1_g=jnp.stack([p["norm_att1"][0], p["norm_obj1"][0], p["norm"][0]]),
        ln1_b=jnp.stack([p["norm_att1"][1], p["norm_obj1"][1], p["norm"][1]]),
        sa_mask0=head_mask(n_att), sa_mask1=head_mask(n_obj), sa_mask2=head_mask(n_com),
        ca_wq=(a["wq"] * scale).astype(cd), ca_bq=a["bq"] * scale,
        ca_wkv=jnp.concatenate([a["wk"], a["wv"]], axis=1).astype(cd),
        ca_bkv=jnp.concatenate([a["bk"], a["bv"]], axis=1),
        ca_wp=a["wp"].astype(cd), ca_bp=a["bp"],
        ca_ng=ca["norm"][0], ca_nb=ca["norm"][1],
        ca_w1=ca["w1"].astype(cd), ca_b1=ca["b1"],
        ca_w2=ca["w2"].astype(cd), ca_b2=ca["b2"],
        ca_mask=head_mask(n_patch),
        lnf_g=lnf_g, lnf_b=lnf_b,
    )
    return kp


# ----------------------------- pure-JAX f32 reference --------------------------

def ref_ln(ln, x):
    g, b = ln
    mean = x.mean(-1, keepdims=True)
    var = jnp.mean((x - mean) ** 2, -1, keepdims=True)
    return (x - mean) / jnp.sqrt(var + LN_EPS) * g + b


def ref_mha(p, q, k, v, nhead):
    B, N, C = q.shape
    M = k.shape[1]
    dh = C // nhead
    scale = float(dh) ** (-0.5)
    qp = (q @ p["wq"] + p["bq"]).reshape(B, N, nhead, dh).transpose(0, 2, 1, 3)
    kp = (k @ p["wk"] + p["bk"]).reshape(B, M, nhead, dh).transpose(0, 2, 1, 3)
    vp = (v @ p["wv"] + p["bv"]).reshape(B, M, nhead, dh).transpose(0, 2, 1, 3)
    att = jnp.einsum("bhnd,bhmd->bhnm", qp, kp) * scale
    att = jax.nn.softmax(att, axis=-1)
    x = jnp.einsum("bhnm,bhmd->bhnd", att, vp).transpose(0, 2, 1, 3).reshape(B, N, C)
    return x @ p["wp"] + p["bp"]


def ref_mlp(p, x):
    h = x @ p["w1"] + p["b1"]
    h = h * jax.nn.sigmoid(1.702 * h)
    return h @ p["w2"] + p["b2"]


def ref_ca(p, q, kv, nhead):
    q = q + ref_mha(p["attn"], q, kv, kv, nhead)
    q = q + ref_mlp(p, ref_ln(p["norm"], q))
    return q


def ref_proj(p, x):
    return ref_ln((p["g"], p["beta"]), x) @ p["w"] + p["b"]


def ref_forward(params, batch_patch, att_query, obj_query, att_txt, obj_txt, com_txt,
                nhead=NHEAD):
    b = batch_patch.shape[0]
    if att_query.shape[0] == 1:
        att_query = jnp.tile(att_query, (b, 1, 1))
        obj_query = jnp.tile(obj_query, (b, 1, 1))
    com_query = jnp.concatenate([att_query, obj_query], axis=1)
    att_query = jnp.concatenate([ref_proj(params["att_proj"], att_txt), att_query], axis=1)
    obj_query = jnp.concatenate([ref_proj(params["obj_proj"], obj_txt), obj_query], axis=1)
    com_query = jnp.concatenate([ref_proj(params["com_proj"], com_txt), com_query], axis=1)
    com_query = ref_ln(params["norm"],
                       com_query + ref_mha(params["sa"], com_query, com_query, com_query, nhead))
    att_query = ref_ln(params["norm_att1"],
                       att_query + ref_mha(params["sa_a"], att_query, att_query, att_query, nhead))
    obj_query = ref_ln(params["norm_obj1"],
                       obj_query + ref_mha(params["sa_o"], obj_query, obj_query, obj_query, nhead))
    att_feat = ref_ln(params["norm_att"], ref_ca(params["att_ca"], att_query, batch_patch, nhead))
    obj_feat = ref_ln(params["norm_obj"], ref_ca(params["att_ca"], obj_query, batch_patch, nhead))
    com_feat = ref_ln(params["norm_com"], ref_ca(params["att_ca"], com_query, batch_patch, nhead))
    return com_feat, att_feat, obj_feat


# --------------------------------------- main -----------------------------------------

if __name__ == "__main__":
    key = jax.random.PRNGKey(0)
    kparams_key, kdata = jax.random.split(key)
    params = init_disformer(kparams_key, D_MODEL, NHEAD)

    B, P, NA, NO, T = 2, 16, 4, 4, 2
    kernel_params = prepare_kernel_params(
        params, txt_len=T, n_att_q=NA, n_obj_q=NO, n_patch=P)  # one-time fuse/stack/bf16

    ks = jax.random.split(kdata, 6)
    batch_patch = jax.random.normal(ks[0], (B, P, D_MODEL), jnp.float32)
    att_query = jax.random.normal(ks[1], (1, NA, D_MODEL), jnp.float32)
    obj_query = jax.random.normal(ks[2], (1, NO, D_MODEL), jnp.float32)
    att_txt = jax.random.normal(ks[3], (B, T, TXT_DIM), jnp.float32)
    obj_txt = jax.random.normal(ks[4], (B, T, TXT_DIM), jnp.float32)
    com_txt = jax.random.normal(ks[5], (B, T, TXT_DIM), jnp.float32)

    com_feat, att_feat, obj_feat = disformer_forward(
        kernel_params, batch_patch, att_query, obj_query, att_txt, obj_txt, com_txt)
    jax.block_until_ready((com_feat, att_feat, obj_feat))

    assert com_feat.shape == (B, T + NA + NO, D_MODEL)
    assert att_feat.shape == (B, T + NA, D_MODEL)
    assert obj_feat.shape == (B, T + NO, D_MODEL)

    rc, ra, ro = ref_forward(params, batch_patch, att_query, obj_query, att_txt, obj_txt, com_txt)
    # Kernel weight and attention matmuls run in bf16 with f32 accumulation; softmax
    # stats/normalization stay f32 (approx reciprocal), hence the 3e-2 tolerance.
    for got, want in ((com_feat, rc), (att_feat, ra), (obj_feat, ro)):
        assert bool(jnp.all(jnp.isfinite(got)))
        assert bool(jnp.allclose(got, want, rtol=3e-2, atol=3e-2))

    print("KERNEL_OK")
</pallas_src>

<mosaic_0001>
module attributes {stable_mosaic.version = 11 : i64} {
  func.func @disformer_kernel(%arg0: i32, %arg1: memref<1x6x768xf32, #tpu.memory_space<vmem>>, %arg2: memref<1x4x32xf32, #tpu.memory_space<vmem>>, %arg3: memref<1x4x32xf32, #tpu.memory_space<vmem>>, %arg4: memref<1x16x32xf32, #tpu.memory_space<vmem>>, %arg5: memref<6x768xf32, #tpu.memory_space<vmem>>, %arg6: memref<6x768xf32, #tpu.memory_space<vmem>>, %arg7: memref<768x96xbf16, #tpu.memory_space<vmem>>, %arg8: memref<1x96xf32, #tpu.memory_space<vmem>>, %arg9: memref<3x32x96xbf16, #tpu.memory_space<vmem>>, %arg10: memref<3x1x96xf32, #tpu.memory_space<vmem>>, %arg11: memref<3x32x32xbf16, #tpu.memory_space<vmem>>, %arg12: memref<3x1x32xf32, #tpu.memory_space<vmem>>, %arg13: memref<3x1x32xf32, #tpu.memory_space<vmem>>, %arg14: memref<3x1x32xf32, #tpu.memory_space<vmem>>, %arg15: memref<24x32xbf16, #tpu.memory_space<vmem>>, %arg16: memref<24x32xbf16, #tpu.memory_space<vmem>>, %arg17: memref<40x32xbf16, #tpu.memory_space<vmem>>, %arg18: memref<32x32xbf16, #tpu.memory_space<vmem>>, %arg19: memref<1x32xf32, #tpu.memory_space<vmem>>, %arg20: memref<32x64xbf16, #tpu.memory_space<vmem>>, %arg21: memref<1x64xf32, #tpu.memory_space<vmem>>, %arg22: memref<32x32xbf16, #tpu.memory_space<vmem>>, %arg23: memref<1x32xf32, #tpu.memory_space<vmem>>, %arg24: memref<1x32xf32, #tpu.memory_space<vmem>>, %arg25: memref<1x32xf32, #tpu.memory_space<vmem>>, %arg26: memref<32x128xbf16, #tpu.memory_space<vmem>>, %arg27: memref<1x128xf32, #tpu.memory_space<vmem>>, %arg28: memref<128x32xbf16, #tpu.memory_space<vmem>>, %arg29: memref<1x32xf32, #tpu.memory_space<vmem>>, %arg30: memref<64x32xbf16, #tpu.memory_space<vmem>>, %arg31: memref<22x32xf32, #tpu.memory_space<vmem>>, %arg32: memref<22x32xf32, #tpu.memory_space<vmem>>, %arg33: memref<1x22x32xf32, #tpu.memory_space<vmem>>, %arg34: memref<22x32xf32, #tpu.memory_space<vmem>>) attributes {dimension_semantics = [#tpu.dimension_semantics<parallel>], iteration_bounds = array<i64: 2>, scalar_prefetch = 0 : i64, scratch_operands = 1 : i64, tpu.core_type = #tpu.core_type<tc>, window_params = [{transform_indices = @transform_0, window_bounds = array<i64: 1, 6, 768>}, {pipeline_mode = #tpu.pipeline_mode<synchronous>, transform_indices = @transform_1, window_bounds = array<i64: 1, 4, 32>}, {pipeline_mode = #tpu.pipeline_mode<synchronous>, transform_indices = @transform_2, window_bounds = array<i64: 1, 4, 32>}, {transform_indices = @transform_3, window_bounds = array<i64: 1, 16, 32>}, {pipeline_mode = #tpu.pipeline_mode<synchronous>, transform_indices = @transform_4, window_bounds = array<i64: 6, 768>}, {pipeline_mode = #tpu.pipeline_mode<synchronous>, transform_indices = @transform_5, window_bounds = array<i64: 6, 768>}, {pipeline_mode = #tpu.pipeline_mode<synchronous>, transform_indices = @transform_6, window_bounds = array<i64: 768, 96>}, {pipeline_mode = #tpu.pipeline_mode<synchronous>, transform_indices = @transform_7, window_bounds = array<i64: 1, 96>}, {pipeline_mode = #tpu.pipeline_mode<synchronous>, transform_indices = @transform_8, window_bounds = array<i64: 3, 32, 96>}, {pipeline_mode = #tpu.pipeline_mode<synchronous>, transform_indices = @transform_9, window_bounds = array<i64: 3, 1, 96>}, {pipeline_mode = #tpu.pipeline_mode<synchronous>, transform_indices = @transform_10, window_bounds = array<i64: 3, 32, 32>}, {pipeline_mode = #tpu.pipeline_mode<synchronous>, transform_indices = @transform_11, window_bounds = array<i64: 3, 1, 32>}, {pipeline_mode = #tpu.pipeline_mode<synchronous>, transform_indices = @transform_12, window_bounds = array<i64: 3, 1, 32>}, {pipeline_mode = #tpu.pipeline_mode<synchronous>, transform_indices = @transform_13, window_bounds = array<i64: 3, 1, 32>}, {pipeline_mode = #tpu.pipeline_mode<synchronous>, transform_indices = @transform_14, window_bounds = array<i64: 24, 32>}, {pipeline_mode = #tpu.pipeline_mode<synchronous>, transform_indices = @transform_15, window_bounds = array<i64: 24, 32>}, {pipeline_mode = #tpu.pipeline_mode<synchronous>, transform_indices = @transform_16, window_bounds = array<i64: 40, 32>}, {pipeline_mode = #tpu.pipeline_mode<synchronous>, transform_indices = @transform_17, window_bounds = array<i64: 32, 32>}, {pipeline_mode = #tpu.pipeline_mode<synchronous>, transform_indices = @transform_18, window_bounds = array<i64: 1, 32>}, {pipeline_mode = #tpu.pipeline_mode<synchronous>, transform_indices = @transform_19, window_bounds = array<i64: 32, 64>}, {pipeline_mode = #tpu.pipeline_mode<synchronous>, transform_indices = @transform_20, window_bounds = array<i64: 1, 64>}, {pipeline_mode = #tpu.pipeline_mode<synchronous>, transform_indices = @transform_21, window_bounds = array<i64: 32, 32>}, {pipeline_mode = #tpu.pipeline_mode<synchronous>, transform_indices = @transform_22, window_bounds = array<i64: 1, 32>}, {pipeline_mode = #tpu.pipeline_mode<synchronous>, transform_indices = @transform_23, window_bounds = array<i64: 1, 32>}, {pipeline_mode = #tpu.pipeline_mode<synchronous>, transform_indices = @transform_24, window_bounds = array<i64: 1, 32>}, {pipeline_mode = #tpu.pipeline_mode<synchronous>, transform_indices = @transform_25, window_bounds = array<i64: 32, 128>}, {pipeline_mode = #tpu.pipeline_mode<synchronous>, transform_indices = @transform_26, window_bounds = array<i64: 1, 128>}, {pipeline_mode = #tpu.pipeline_mode<synchronous>, transform_indices = @transform_27, window_bounds = array<i64: 128, 32>}, {pipeline_mode = #tpu.pipeline_mode<synchronous>, transform_indices = @transform_28, window_bounds = array<i64: 1, 32>}, {pipeline_mode = #tpu.pipeline_mode<synchronous>, transform_indices = @transform_29, window_bounds = array<i64: 64, 32>}, {pipeline_mode = #tpu.pipeline_mode<synchronous>, transform_indices = @transform_30, window_bounds = array<i64: 22, 32>}, {pipeline_mode = #tpu.pipeline_mode<synchronous>, transform_indices = @transform_31, window_bounds = array<i64: 22, 32>}, {transform_indices = @transform_32, window_bounds = array<i64: 1, 22, 32>}]} {
    %c0 = arith.constant 0 : index
    %c0_0 = arith.constant 0 : index
    %c0_1 = arith.constant 0 : index
    %0 = vector.load %arg1[%c0, %c0_0, %c0_1] : memref<1x6x768xf32, #tpu.memory_space<vmem>>, vector<1x6x768xf32>
    %1 = vector.shape_cast %0 : vector<1x6x768xf32> to vector<6x768xf32>
    %c0_2 = arith.constant 0 : index
    %c0_3 = arith.constant 0 : index
    %c0_4 = arith.constant 0 : index
    %2 = vector.load %arg2[%c0_2, %c0_3, %c0_4] : memref<1x4x32xf32, #tpu.memory_space<vmem>>, vector<1x4x32xf32>
    %3 = vector.shape_cast %2 : vector<1x4x32xf32> to vector<4x32xf32>
    %c0_5 = arith.constant 0 : index
    %c0_6 = arith.constant 0 : index
    %c0_7 = arith.constant 0 : index
    %4 = vector.load %arg3[%c0_5, %c0_6, %c0_7] : memref<1x4x32xf32, #tpu.memory_space<vmem>>, vector<1x4x32xf32>
    %5 = vector.shape_cast %4 : vector<1x4x32xf32> to vector<4x32xf32>
    %c0_8 = arith.constant 0 : index
    %c0_9 = arith.constant 0 : index
    %c0_10 = arith.constant 0 : index
    %6 = vector.load %arg4[%c0_8, %c0_9, %c0_10] : memref<1x16x32xf32, #tpu.memory_space<vmem>>, vector<1x16x32xf32>
    %7 = vector.shape_cast %6 : vector<1x16x32xf32> to vector<16x32xf32>
    %c0_11 = arith.constant 0 : index
    %c0_12 = arith.constant 0 : index
    %8 = vector.load %arg5[%c0_11, %c0_12] : memref<6x768xf32, #tpu.memory_space<vmem>>, vector<6x768xf32>
    %c0_13 = arith.constant 0 : index
    %c0_14 = arith.constant 0 : index
    %9 = vector.load %arg6[%c0_13, %c0_14] : memref<6x768xf32, #tpu.memory_space<vmem>>, vector<6x768xf32>
    %cst = arith.constant dense<0.000000e+00> : vector<6xf32>
    %10 = vector.multi_reduction <add>, %1, %cst [1] : vector<6x768xf32> to vector<6xf32>
    %11 = vector.shape_cast %10 : vector<6xf32> to vector<6x1xf32>
    %cst_15 = arith.constant 7.680000e+02 : f32
    %12 = vector.broadcast %cst_15 : f32 to vector<6x1xf32>
    %13 = arith.divf %11, %12 : vector<6x1xf32>
    %14 = vector.broadcast %13 : vector<6x1xf32> to vector<6x768xf32>
    %15 = arith.subf %1, %14 : vector<6x768xf32>
    %16 = arith.mulf %15, %15 : vector<6x768xf32>
    %cst_16 = arith.constant dense<0.000000e+00> : vector<6xf32>
    %17 = vector.multi_reduction <add>, %16, %cst_16 [1] : vector<6x768xf32> to vector<6xf32>
    %18 = vector.shape_cast %17 : vector<6xf32> to vector<6x1xf32>
    %cst_17 = arith.constant 7.680000e+02 : f32
    %19 = vector.broadcast %cst_17 : f32 to vector<6x1xf32>
    %20 = arith.divf %18, %19 : vector<6x1xf32>
    %21 = vector.broadcast %13 : vector<6x1xf32> to vector<6x768xf32>
    %22 = arith.subf %1, %21 : vector<6x768xf32>
    %cst_18 = arith.constant 9.99999974E-6 : f32
    %23 = vector.broadcast %cst_18 : f32 to vector<6x1xf32>
    %24 = arith.addf %20, %23 : vector<6x1xf32>
    %25 = math.rsqrt %24 : vector<6x1xf32>
    %26 = vector.broadcast %25 : vector<6x1xf32> to vector<6x768xf32>
    %27 = arith.mulf %22, %26 : vector<6x768xf32>
    %28 = arith.mulf %27, %8 : vector<6x768xf32>
    %29 = arith.addf %28, %9 : vector<6x768xf32>
    %c0_19 = arith.constant 0 : index
    %c0_20 = arith.constant 0 : index
    %30 = vector.load %arg7[%c0_19, %c0_20] : memref<768x96xbf16, #tpu.memory_space<vmem>>, vector<768x96xbf16>
    %31 = arith.truncf %29 : vector<6x768xf32> to vector<6x768xbf16>
    %cst_21 = arith.constant dense<0.000000e+00> : vector<6x96xf32>
    %32 = tpu.matmul %31, %30, %cst_21 {dimension_numbers = #tpu.dot_dimension_numbers<[1], [0], [0], [1], [0, 0, 1, 1], [], []>} : vector<6x768xbf16>, vector<768x96xbf16>, vector<6x96xf32> -> vector<6x96xf32>
    %c0_22 = arith.constant 0 : index
    %c0_23 = arith.constant 0 : index
    %33 = vector.load %arg8[%c0_22, %c0_23] : memref<1x96xf32, #tpu.memory_space<vmem>>, vector<1x96xf32>
    %34 = vector.broadcast %33 : vector<1x96xf32> to vector<6x96xf32>
    %35 = arith.addf %32, %34 : vector<6x96xf32>
    %36 = vector.extract_strided_slice %35 {offsets = [0, 0], sizes = [2, 32], strides = [1, 1]} : vector<6x96xf32> to vector<2x32xf32>
    %c0_24 = arith.constant 0 : index
    %c0_25 = arith.constant 0 : index
    %37 = vector.load %arg34[%c0_24, %c0_25] : memref<22x32xf32, #tpu.memory_space<vmem>>, vector<2x32xf32>
    tpu.vector_store %arg34[%c0_24, %c0_25], %36 {strides = array<i32>} : memref<22x32xf32, #tpu.memory_space<vmem>>, vector<2x32xf32>,
    %c2 = arith.constant 2 : index
    %c0_26 = arith.constant 0 : index
    %38 = vector.load %arg34[%c2, %c0_26] : memref<22x32xf32, #tpu.memory_space<vmem>>, vector<4x32xf32>
    tpu.vector_store %arg34[%c2, %c0_26], %3 {strides = array<i32>} : memref<22x32xf32, #tpu.memory_space<vmem>>, vector<4x32xf32>,
    %39 = vector.extract_strided_slice %35 {offsets = [2, 32], sizes = [2, 32], strides = [1, 1]} : vector<6x96xf32> to vector<2x32xf32>
    %c6 = arith.constant 6 : index
    %c0_27 = arith.constant 0 : index
    %40 = vector.load %arg34[%c6, %c0_27] : memref<22x32xf32, #tpu.memory_space<vmem>>, vector<2x32xf32>
    tpu.vector_store %arg34[%c6, %c0_27], %39 {strides = array<i32>} : memref<22x32xf32, #tpu.memory_space<vmem>>, vector<2x32xf32>,
    %c8 = arith.constant 8 : index
    %c0_28 = arith.constant 0 : index
    %41 = vector.load %arg34[%c8, %c0_28] : memref<22x32xf32, #tpu.memory_space<vmem>>, vector<4x32xf32>
    tpu.vector_store %arg34[%c8, %c0_28], %5 {strides = array<i32>} : memref<22x32xf32, #tpu.memory_space<vmem>>, vector<4x32xf32>,
    %42 = vector.extract_strided_slice %35 {offsets = [4, 64], sizes = [2, 32], strides = [1, 1]} : vector<6x96xf32> to vector<2x32xf32>
    %c12 = arith.constant 12 : index
    %c0_29 = arith.constant 0 : index
    %43 = vector.load %arg34[%c12, %c0_29] : memref<22x32xf32, #tpu.memory_space<vmem>>, vector<2x32xf32>
    tpu.vector_store %arg34[%c12, %c0_29], %42 {strides = array<i32>} : memref<22x32xf32, #tpu.memory_space<vmem>>, vector<2x32xf32>,
    %c14 = arith.constant 14 : index
    %c0_30 = arith.constant 0 : index
    %44 = vector.load %arg34[%c14, %c0_30] : memref<22x32xf32, #tpu.memory_space<vmem>>, vector<4x32xf32>
    tpu.vector_store %arg34[%c14, %c0_30], %3 {strides = array<i32>} : memref<22x32xf32, #tpu.memory_space<vmem>>, vector<4x32xf32>,
    %c18 = arith.constant 18 : index
    %c0_31 = arith.constant 0 : index
    %45 = vector.load %arg34[%c18, %c0_31] : memref<22x32xf32, #tpu.memory_space<vmem>>, vector<4x32xf32>
    tpu.vector_store %arg34[%c18, %c0_31], %5 {strides = array<i32>} : memref<22x32xf32, #tpu.memory_space<vmem>>, vector<4x32xf32>,
    %c0_32 = arith.constant 0 : index
    %c0_33 = arith.constant 0 : index
    %46 = vector.load %arg34[%c0_32, %c0_33] : memref<22x32xf32, #tpu.memory_space<vmem>>, vector<6x32xf32>
    %c0_34 = arith.constant 0 : index
    %c0_35 = arith.constant 0 : index
    %c0_36 = arith.constant 0 : index
    %47 = vector.load %arg9[%c0_34, %c0_35, %c0_36] : memref<3x32x96xbf16, #tpu.memory_space<vmem>>, vector<1x32x96xbf16>
    %48 = vector.shape_cast %47 : vector<1x32x96xbf16> to vector<32x96xbf16>
    %49 = arith.truncf %46 : vector<6x32xf32> to vector<6x32xbf16>
    %cst_37 = arith.constant dense<0.000000e+00> : vector<6x96xf32>
    %50 = tpu.matmul %49, %48, %cst_37 {dimension_numbers = #tpu.dot_dimension_numbers<[1], [0], [0], [1], [0, 0, 1, 1], [], []>} : vector<6x32xbf16>, vector<32x96xbf16>, vector<6x96xf32> -> vector<6x96xf32>
    %c0_38 = arith.constant 0 : index
    %c0_39 = arith.constant 0 : index
    %c0_40 = arith.constant 0 : index
    %51 = vector.load %arg10[%c0_38, %c0_39, %c0_40] : memref<3x1x96xf32, #tpu.memory_space<vmem>>, vector<1x1x96xf32>
    %52 = vector.shape_cast %51 : vector<1x1x96xf32> to vector<1x96xf32>
    %53 = vector.broadcast %52 : vector<1x96xf32> to vector<6x96xf32>
    %54 = arith.addf %50, %53 : vector<6x96xf32>
    %55 = vector.extract_strided_slice %54 {offsets = [0, 0], sizes = [6, 32], strides = [1, 1]} : vector<6x96xf32> to vector<6x32xf32>
    %56 = vector.extract_strided_slice %54 {offsets = [0, 32], sizes = [6, 32], strides = [1, 1]} : vector<6x96xf32> to vector<6x32xf32>
    %57 = vector.extract_strided_slice %54 {offsets = [0, 64], sizes = [6, 32], strides = [1, 1]} : vector<6x96xf32> to vector<6x32xf32>
    %c0_41 = arith.constant 0 : index
    %c0_42 = arith.constant 0 : index
    %58 = vector.load %arg15[%c0_41, %c0_42] : memref<24x32xbf16, #tpu.memory_space<vmem>>, vector<24x32xbf16>
    %c0_43 = arith.constant 0 : index
    %c0_44 = arith.constant 0 : index
    %c0_45 = arith.constant 0 : index
    %59 = vector.load %arg11[%c0_43, %c0_44, %c0_45] : memref<3x32x32xbf16, #tpu.memory_space<vmem>>, vector<1x32x32xbf16>
    %60 = vector.shape_cast %59 : vector<1x32x32xbf16> to vector<32x32xbf16>
    %c0_46 = arith.constant 0 : index
    %c0_47 = arith.constant 0 : index
    %c0_48 = arith.constant 0 : index
    %61 = vector.load %arg12[%c0_46, %c0_47, %c0_48] : memref<3x1x32xf32, #tpu.memory_space<vmem>>, vector<1x1x32xf32>
    %62 = vector.shape_cast %61 : vector<1x1x32xf32> to vector<1x32xf32>
    %63 = arith.truncf %56 : vector<6x32xf32> to vector<6x32xbf16>
    %64 = arith.truncf %57 : vector<6x32xf32> to vector<6x32xbf16>
    %65 = tpu.concatenate %63, %63, %63, %63 in 0 : vector<6x32xbf16>, vector<6x32xbf16>, vector<6x32xbf16>, vector<6x32xbf16> -> vector<24x32xbf16>
    %66 = arith.mulf %65, %58 : vector<24x32xbf16>
    %67 = tpu.concatenate %64, %64, %64, %64 in 0 : vector<6x32xbf16>, vector<6x32xbf16>, vector<6x32xbf16>, vector<6x32xbf16> -> vector<24x32xbf16>
    %68 = arith.mulf %67, %58 : vector<24x32xbf16>
    %69 = arith.truncf %55 : vector<6x32xf32> to vector<6x32xbf16>
    %cst_49 = arith.constant dense<0.000000e+00> : vector<6x24xf32>
    %70 = tpu.matmul %69, %66, %cst_49 {dimension_numbers = #tpu.dot_dimension_numbers<[1], [1], [0], [0], [0, 0, 1, 0], [], []>} : vector<6x32xbf16>, vector<24x32xbf16>, vector<6x24xf32> -> vector<6x24xf32>
    %71 = vector.extract_strided_slice %70 {offsets = [0, 0], sizes = [6, 6], strides = [1, 1]} : vector<6x24xf32> to vector<6x6xf32>
    %cst_50 = arith.constant dense<0xFF800000> : vector<6xf32>
    %72 = vector.multi_reduction <maximumf>, %71, %cst_50 [1] : vector<6x6xf32> to vector<6xf32>
    %73 = vector.shape_cast %72 : vector<6xf32> to vector<6x1xf32>
    %74 = vector.extract_strided_slice %70 {offsets = [0, 6], sizes = [6, 6], strides = [1, 1]} : vector<6x24xf32> to vector<6x6xf32>
    %cst_51 = arith.constant dense<0xFF800000> : vector<6xf32>
    %75 = vector.multi_reduction <maximumf>, %74, %cst_51 [1] : vector<6x6xf32> to vector<6xf32>
    %76 = vector.shape_cast %75 : vector<6xf32> to vector<6x1xf32>
    %77 = vector.extract_strided_slice %70 {offsets = [0, 12], sizes = [6, 6], strides = [1, 1]} : vector<6x24xf32> to vector<6x6xf32>
    %cst_52 = arith.constant dense<0xFF800000> : vector<6xf32>
    %78 = vector.multi_reduction <maximumf>, %77, %cst_52 [1] : vector<6x6xf32> to vector<6xf32>
    %79 = vector.shape_cast %78 : vector<6xf32> to vector<6x1xf32>
    %80 = vector.extract_strided_slice %70 {offsets = [0, 18], sizes = [6, 6], strides = [1, 1]} : vector<6x24xf32> to vector<6x6xf32>
    %cst_53 = arith.constant dense<0xFF800000> : vector<6xf32>
    %81 = vector.multi_reduction <maximumf>, %80, %cst_53 [1] : vector<6x6xf32> to vector<6xf32>
    %82 = vector.shape_cast %81 : vector<6xf32> to vector<6x1xf32>
    %83 = vector.shape_cast %73 : vector<6x1xf32> to vector<6x1xf32>
    %84 = vector.broadcast %83 : vector<6x1xf32> to vector<6x6xf32>
    %85 = vector.shape_cast %76 : vector<6x1xf32> to vector<6x1xf32>
    %86 = vector.broadcast %85 : vector<6x1xf32> to vector<6x6xf32>
    %87 = vector.shape_cast %79 : vector<6x1xf32> to vector<6x1xf32>
    %88 = vector.broadcast %87 : vector<6x1xf32> to vector<6x6xf32>
    %89 = vector.shape_cast %82 : vector<6x1xf32> to vector<6x1xf32>
    %90 = vector.broadcast %89 : vector<6x1xf32> to vector<6x6xf32>
    %91 = tpu.concatenate %84, %86, %88, %90 in 1 : vector<6x6xf32>, vector<6x6xf32>, vector<6x6xf32>, vector<6x6xf32> -> vector<6x24xf32>
    %92 = arith.subf %70, %91 : vector<6x24xf32>
    %93 = math.exp %92 : vector<6x24xf32>
    %94 = vector.extract_strided_slice %93 {offsets = [0, 0], sizes = [6, 6], strides = [1, 1]} : vector<6x24xf32> to vector<6x6xf32>
    %cst_54 = arith.constant dense<0.000000e+00> : vector<6xf32>
    %95 = vector.multi_reduction <add>, %94, %cst_54 [1] : vector<6x6xf32> to vector<6xf32>
    %96 = vector.shape_cast %95 : vector<6xf32> to vector<6x1xf32>
    %97 = vector.extract_strided_slice %93 {offsets = [0, 6], sizes = [6, 6], strides = [1, 1]} : vector<6x24xf32> to vector<6x6xf32>
    %cst_55 = arith.constant dense<0.000000e+00> : vector<6xf32>
    %98 = vector.multi_reduction <add>, %97, %cst_55 [1] : vector<6x6xf32> to vector<6xf32>
    %99 = vector.shape_cast %98 : vector<6xf32> to vector<6x1xf32>
    %100 = vector.extract_strided_slice %93 {offsets = [0, 12], sizes = [6, 6], strides = [1, 1]} : vector<6x24xf32> to vector<6x6xf32>
    %cst_56 = arith.constant dense<0.000000e+00> : vector<6xf32>
    %101 = vector.multi_reduction <add>, %100, %cst_56 [1] : vector<6x6xf32> to vector<6xf32>
    %102 = vector.shape_cast %101 : vector<6xf32> to vector<6x1xf32>
    %103 = vector.extract_strided_slice %93 {offsets = [0, 18], sizes = [6, 6], strides = [1, 1]} : vector<6x24xf32> to vector<6x6xf32>
    %cst_57 = arith.constant dense<0.000000e+00> : vector<6xf32>
    %104 = vector.multi_reduction <add>, %103, %cst_57 [1] : vector<6x6xf32> to vector<6xf32>
    %105 = vector.shape_cast %104 : vector<6xf32> to vector<6x1xf32>
    %106 = vector.shape_cast %96 : vector<6x1xf32> to vector<6x1xf32>
    %107 = vector.broadcast %106 : vector<6x1xf32> to vector<6x8xf32>
    %108 = vector.shape_cast %99 : vector<6x1xf32> to vector<6x1xf32>
    %109 = vector.broadcast %108 : vector<6x1xf32> to vector<6x8xf32>
    %110 = vector.shape_cast %102 : vector<6x1xf32> to vector<6x1xf32>
    %111 = vector.broadcast %110 : vector<6x1xf32> to vector<6x8xf32>
    %112 = vector.shape_cast %105 : vector<6x1xf32> to vector<6x1xf32>
    %113 = vector.broadcast %112 : vector<6x1xf32> to vector<6x8xf32>
    %114 = tpu.concatenate %107, %109, %111, %113 in 1 : vector<6x8xf32>, vector<6x8xf32>, vector<6x8xf32>, vector<6x8xf32> -> vector<6x32xf32>
    %115 = arith.truncf %93 : vector<6x24xf32> to vector<6x24xbf16>
    %cst_58 = arith.constant dense<0.000000e+00> : vector<6x32xf32>
    %116 = tpu.matmul %115, %68, %cst_58 {dimension_numbers = #tpu.dot_dimension_numbers<[1], [0], [0], [1], [0, 0, 1, 1], [], []>} : vector<6x24xbf16>, vector<24x32xbf16>, vector<6x32xf32> -> vector<6x32xf32>
    %117 = tpu.reciprocal %114 {approx = true} : vector<6x32xf32> -> vector<6x32xf32>
    %118 = arith.mulf %116, %117 : vector<6x32xf32>
    %119 = arith.truncf %118 : vector<6x32xf32> to vector<6x32xbf16>
    %cst_59 = arith.constant dense<0.000000e+00> : vector<6x32xf32>
    %120 = tpu.matmul %119, %60, %cst_59 {dimension_numbers = #tpu.dot_dimension_numbers<[1], [0], [0], [1], [0, 0, 1, 1], [], []>} : vector<6x32xbf16>, vector<32x32xbf16>, vector<6x32xf32> -> vector<6x32xf32>
    %121 = vector.broadcast %62 : vector<1x32xf32> to vector<6x32xf32>
    %122 = arith.addf %120, %121 : vector<6x32xf32>
    %123 = arith.addf %46, %122 : vector<6x32xf32>
    %c0_60 = arith.constant 0 : index
    %c0_61 = arith.constant 0 : index
    %c0_62 = arith.constant 0 : index
    %124 = vector.load %arg13[%c0_60, %c0_61, %c0_62] : memref<3x1x32xf32, #tpu.memory_space<vmem>>, vector<1x1x32xf32>
    %125 = vector.shape_cast %124 : vector<1x1x32xf32> to vector<1x32xf32>
    %c0_63 = arith.constant 0 : index
    %c0_64 = arith.constant 0 : index
    %c0_65 = arith.constant 0 : index
    %126 = vector.load %arg14[%c0_63, %c0_64, %c0_65] : memref<3x1x32xf32, #tpu.memory_space<vmem>>, vector<1x1x32xf32>
    %127 = vector.shape_cast %126 : vector<1x1x32xf32> to vector<1x32xf32>
    %cst_66 = arith.constant dense<0.000000e+00> : vector<6xf32>
    %128 = vector.multi_reduction <add>, %123, %cst_66 [1] : vector<6x32xf32> to vector<6xf32>
    %129 = vector.shape_cast %128 : vector<6xf32> to vector<6x1xf32>
    %cst_67 = arith.constant 3.200000e+01 : f32
    %130 = vector.broadcast %cst_67 : f32 to vector<6x1xf32>
    %131 = arith.divf %129, %130 : vector<6x1xf32>
    %132 = vector.broadcast %131 : vector<6x1xf32> to vector<6x32xf32>
    %133 = arith.subf %123, %132 : vector<6x32xf32>
    %134 = arith.mulf %133, %133 : vector<6x32xf32>
    %cst_68 = arith.constant dense<0.000000e+00> : vector<6xf32>
    %135 = vector.multi_reduction <add>, %134, %cst_68 [1] : vector<6x32xf32> to vector<6xf32>
    %136 = vector.shape_cast %135 : vector<6xf32> to vector<6x1xf32>
    %cst_69 = arith.constant 3.200000e+01 : f32
    %137 = vector.broadcast %cst_69 : f32 to vector<6x1xf32>
    %138 = arith.divf %136, %137 : vector<6x1xf32>
    %139 = vector.broadcast %131 : vector<6x1xf32> to vector<6x32xf32>
    %140 = arith.subf %123, %139 : vector<6x32xf32>
    %cst_70 = arith.constant 9.99999974E-6 : f32
    %141 = vector.broadcast %cst_70 : f32 to vector<6x1xf32>
    %142 = arith.addf %138, %141 : vector<6x1xf32>
    %143 = math.rsqrt %142 : vector<6x1xf32>
    %144 = vector.broadcast %143 : vector<6x1xf32> to vector<6x32xf32>
    %145 = arith.mulf %140, %144 : vector<6x32xf32>
    %146 = vector.broadcast %125 : vector<1x32xf32> to vector<6x32xf32>
    %147 = arith.mulf %145, %146 : vector<6x32xf32>
    %148 = vector.broadcast %127 : vector<1x32xf32> to vector<6x32xf32>
    %149 = arith.addf %147, %148 : vector<6x32xf32>
    %c0_71 = arith.constant 0 : index
    %c0_72 = arith.constant 0 : index
    %150 = vector.load %arg34[%c0_71, %c0_72] : memref<22x32xf32, #tpu.memory_space<vmem>>, vector<6x32xf32>
    tpu.vector_store %arg34[%c0_71, %c0_72], %149 {strides = array<i32>} : memref<22x32xf32, #tpu.memory_space<vmem>>, vector<6x32xf32>,
    %c6_73 = arith.constant 6 : index
    %c0_74 = arith.constant 0 : index
    %151 = vector.load %arg34[%c6_73, %c0_74] : memref<22x32xf32, #tpu.memory_space<vmem>>, vector<6x32xf32>
    %c1 = arith.constant 1 : index
    %c0_75 = arith.constant 0 : index
    %c0_76 = arith.constant 0 : index
    %152 = vector.load %arg9[%c1, %c0_75, %c0_76] : memref<3x32x96xbf16, #tpu.memory_space<vmem>>, vector<1x32x96xbf16>
    %153 = vector.shape_cast %152 : vector<1x32x96xbf16> to vector<32x96xbf16>
    %154 = arith.truncf %151 : vector<6x32xf32> to vector<6x32xbf16>
    %cst_77 = arith.constant dense<0.000000e+00> : vector<6x96xf32>
    %155 = tpu.matmul %154, %153, %cst_77 {dimension_numbers = #tpu.dot_dimension_numbers<[1], [0], [0], [1], [0, 0, 1, 1], [], []>} : vector<6x32xbf16>, vector<32x96xbf16>, vector<6x96xf32> -> vector<6x96xf32>
    %c1_78 = arith.constant 1 : index
    %c0_79 = arith.constant 0 : index
    %c0_80 = arith.constant 0 : index
    %156 = vector.load %arg10[%c1_78, %c0_79, %c0_80] : memref<3x1x96xf32, #tpu.memory_space<vmem>>, vector<1x1x96xf32>
    %157 = vector.shape_cast %156 : vector<1x1x96xf32> to vector<1x96xf32>
    %158 = vector.broadcast %157 : vector<1x96xf32> to vector<6x96xf32>
    %159 = arith.addf %155, %158 : vector<6x96xf32>
    %160 = vector.extract_strided_slice %159 {offsets = [0, 0], sizes = [6, 32], strides = [1, 1]} : vector<6x96xf32> to vector<6x32xf32>
    %161 = vector.extract_strided_slice %159 {offsets = [0, 32], sizes = [6, 32], strides = [1, 1]} : vector<6x96xf32> to vector<6x32xf32>
    %162 = vector.extract_strided_slice %159 {offsets = [0, 64], sizes = [6, 32], strides = [1, 1]} : vector<6x96xf32> to vector<6x32xf32>
    %c0_81 = arith.constant 0 : index
    %c0_82 = arith.constant 0 : index
    %163 = vector.load %arg16[%c0_81, %c0_82] : memref<24x32xbf16, #tpu.memory_space<vmem>>, vector<24x32xbf16>
    %c1_83 = arith.constant 1 : index
    %c0_84 = arith.constant 0 : index
    %c0_85 = arith.constant 0 : index
    %164 = vector.load %arg11[%c1_83, %c0_84, %c0_85] : memref<3x32x32xbf16, #tpu.memory_space<vmem>>, vector<1x32x32xbf16>
    %165 = vector.shape_cast %164 : vector<1x32x32xbf16> to vector<32x32xbf16>
    %c1_86 = arith.constant 1 : index
    %c0_87 = arith.constant 0 : index
    %c0_88 = arith.constant 0 : index
    %166 = vector.load %arg12[%c1_86, %c0_87, %c0_88] : memref<3x1x32xf32, #tpu.memory_space<vmem>>, vector<1x1x32xf32>
    %167 = vector.shape_cast %166 : vector<1x1x32xf32> to vector<1x32xf32>
    %168 = arith.truncf %161 : vector<6x32xf32> to vector<6x32xbf16>
    %169 = arith.truncf %162 : vector<6x32xf32> to vector<6x32xbf16>
    %170 = tpu.concatenate %168, %168, %168, %168 in 0 : vector<6x32xbf16>, vector<6x32xbf16>, vector<6x32xbf16>, vector<6x32xbf16> -> vector<24x32xbf16>
    %171 = arith.mulf %170, %163 : vector<24x32xbf16>
    %172 = tpu.concatenate %169, %169, %169, %169 in 0 : vector<6x32xbf16>, vector<6x32xbf16>, vector<6x32xbf16>, vector<6x32xbf16> -> vector<24x32xbf16>
    %173 = arith.mulf %172, %163 : vector<24x32xbf16>
    %174 = arith.truncf %160 : vector<6x32xf32> to vector<6x32xbf16>
    %cst_89 = arith.constant dense<0.000000e+00> : vector<6x24xf32>
    %175 = tpu.matmul %174, %171, %cst_89 {dimension_numbers = #tpu.dot_dimension_numbers<[1], [1], [0], [0], [0, 0, 1, 0], [], []>} : vector<6x32xbf16>, vector<24x32xbf16>, vector<6x24xf32> -> vector<6x24xf32>
    %176 = vector.extract_strided_slice %175 {offsets = [0, 0], sizes = [6, 6], strides = [1, 1]} : vector<6x24xf32> to vector<6x6xf32>
    %cst_90 = arith.constant dense<0xFF800000> : vector<6xf32>
    %177 = vector.multi_reduction <maximumf>, %176, %cst_90 [1] : vector<6x6xf32> to vector<6xf32>
    %178 = vector.shape_cast %177 : vector<6xf32> to vector<6x1xf32>
    %179 = vector.extract_strided_slice %175 {offsets = [0, 6], sizes = [6, 6], strides = [1, 1]} : vector<6x24xf32> to vector<6x6xf32>
    %cst_91 = arith.constant dense<0xFF800000> : vector<6xf32>
    %180 = vector.multi_reduction <maximumf>, %179, %cst_91 [1] : vector<6x6xf32> to vector<6xf32>
    %181 = vector.shape_cast %180 : vector<6xf32> to vector<6x1xf32>
    %182 = vector.extract_strided_slice %175 {offsets = [0, 12], sizes = [6, 6], strides = [1, 1]} : vector<6x24xf32> to vector<6x6xf32>
    %cst_92 = arith.constant dense<0xFF800000> : vector<6xf32>
    %183 = vector.multi_reduction <maximumf>, %182, %cst_92 [1] : vector<6x6xf32> to vector<6xf32>
    %184 = vector.shape_cast %183 : vector<6xf32> to vector<6x1xf32>
    %185 = vector.extract_strided_slice %175 {offsets = [0, 18], sizes = [6, 6], strides = [1, 1]} : vector<6x24xf32> to vector<6x6xf32>
    %cst_93 = arith.constant dense<0xFF800000> : vector<6xf32>
    %186 = vector.multi_reduction <maximumf>, %185, %cst_93 [1] : vector<6x6xf32> to vector<6xf32>
    %187 = vector.shape_cast %186 : vector<6xf32> to vector<6x1xf32>
    %188 = vector.shape_cast %178 : vector<6x1xf32> to vector<6x1xf32>
    %189 = vector.broadcast %188 : vector<6x1xf32> to vector<6x6xf32>
    %190 = vector.shape_cast %181 : vector<6x1xf32> to vector<6x1xf32>
    %191 = vector.broadcast %190 : vector<6x1xf32> to vector<6x6xf32>
    %192 = vector.shape_cast %184 : vector<6x1xf32> to vector<6x1xf32>
    %193 = vector.broadcast %192 : vector<6x1xf32> to vector<6x6xf32>
    %194 = vector.shape_cast %187 : vector<6x1xf32> to vector<6x1xf32>
    %195 = vector.broadcast %194 : vector<6x1xf32> to vector<6x6xf32>
    %196 = tpu.concatenate %189, %191, %193, %195 in 1 : vector<6x6xf32>, vector<6x6xf32>, vector<6x6xf32>, vector<6x6xf32> -> vector<6x24xf32>
    %197 = arith.subf %175, %196 : vector<6x24xf32>
    %198 = math.exp %197 : vector<6x24xf32>
    %199 = vector.extract_strided_slice %198 {offsets = [0, 0], sizes = [6, 6], strides = [1, 1]} : vector<6x24xf32> to vector<6x6xf32>
    %cst_94 = arith.constant dense<0.000000e+00> : vector<6xf32>
    %200 = vector.multi_reduction <add>, %199, %cst_94 [1] : vector<6x6xf32> to vector<6xf32>
    %201 = vector.shape_cast %200 : vector<6xf32> to vector<6x1xf32>
    %202 = vector.extract_strided_slice %198 {offsets = [0, 6], sizes = [6, 6], strides = [1, 1]} : vector<6x24xf32> to vector<6x6xf32>
    %cst_95 = arith.constant dense<0.000000e+00> : vector<6xf32>
    %203 = vector.multi_reduction <add>, %202, %cst_95 [1] : vector<6x6xf32> to vector<6xf32>
    %204 = vector.shape_cast %203 : vector<6xf32> to vector<6x1xf32>
    %205 = vector.extract_strided_slice %198 {offsets = [0, 12], sizes = [6, 6], strides = [1, 1]} : vector<6x24xf32> to vector<6x6xf32>
    %cst_96 = arith.constant dense<0.000000e+00> : vector<6xf32>
    %206 = vector.multi_reduction <add>, %205, %cst_96 [1] : vector<6x6xf32> to vector<6xf32>
    %207 = vector.shape_cast %206 : vector<6xf32> to vector<6x1xf32>
    %208 = vector.extract_strided_slice %198 {offsets = [0, 18], sizes = [6, 6], strides = [1, 1]} : vector<6x24xf32> to vector<6x6xf32>
    %cst_97 = arith.constant dense<0.000000e+00> : vector<6xf32>
    %209 = vector.multi_reduction <add>, %208, %cst_97 [1] : vector<6x6xf32> to vector<6xf32>
    %210 = vector.shape_cast %209 : vector<6xf32> to vector<6x1xf32>
    %211 = vector.shape_cast %201 : vector<6x1xf32> to vector<6x1xf32>
    %212 = vector.broadcast %211 : vector<6x1xf32> to vector<6x8xf32>
    %213 = vector.shape_cast %204 : vector<6x1xf32> to vector<6x1xf32>
    %214 = vector.broadcast %213 : vector<6x1xf32> to vector<6x8xf32>
    %215 = vector.shape_cast %207 : vector<6x1xf32> to vector<6x1xf32>
    %216 = vector.broadcast %215 : vector<6x1xf32> to vector<6x8xf32>
    %217 = vector.shape_cast %210 : vector<6x1xf32> to vector<6x1xf32>
    %218 = vector.broadcast %217 : vector<6x1xf32> to vector<6x8xf32>
    %219 = tpu.concatenate %212, %214, %216, %218 in 1 : vector<6x8xf32>, vector<6x8xf32>, vector<6x8xf32>, vector<6x8xf32> -> vector<6x32xf32>
    %220 = arith.truncf %198 : vector<6x24xf32> to vector<6x24xbf16>
    %cst_98 = arith.constant dense<0.000000e+00> : vector<6x32xf32>
    %221 = tpu.matmul %220, %173, %cst_98 {dimension_numbers = #tpu.dot_dimension_numbers<[1], [0], [0], [1], [0, 0, 1, 1], [], []>} : vector<6x24xbf16>, vector<24x32xbf16>, vector<6x32xf32> -> vector<6x32xf32>
    %222 = tpu.reciprocal %219 {approx = true} : vector<6x32xf32> -> vector<6x32xf32>
    %223 = arith.mulf %221, %222 : vector<6x32xf32>
    %224 = arith.truncf %223 : vector<6x32xf32> to vector<6x32xbf16>
    %cst_99 = arith.constant dense<0.000000e+00> : vector<6x32xf32>
    %225 = tpu.matmul %224, %165, %cst_99 {dimension_numbers = #tpu.dot_dimension_numbers<[1], [0], [0], [1], [0, 0, 1, 1], [], []>} : vector<6x32xbf16>, vector<32x32xbf16>, vector<6x32xf32> -> vector<6x32xf32>
    %226 = vector.broadcast %167 : vector<1x32xf32> to vector<6x32xf32>
    %227 = arith.addf %225, %226 : vector<6x32xf32>
    %228 = arith.addf %151, %227 : vector<6x32xf32>
    %c1_100 = arith.constant 1 : index
    %c0_101 = arith.constant 0 : index
    %c0_102 = arith.constant 0 : index
    %229 = vector.load %arg13[%c1_100, %c0_101, %c0_102] : memref<3x1x32xf32, #tpu.memory_space<vmem>>, vector<1x1x32xf32>
    %230 = vector.shape_cast %229 : vector<1x1x32xf32> to vector<1x32xf32>
    %c1_103 = arith.constant 1 : index
    %c0_104 = arith.constant 0 : index
    %c0_105 = arith.constant 0 : index
    %231 = vector.load %arg14[%c1_103, %c0_104, %c0_105] : memref<3x1x32xf32, #tpu.memory_space<vmem>>, vector<1x1x32xf32>
    %232 = vector.shape_cast %231 : vector<1x1x32xf32> to vector<1x32xf32>
    %cst_106 = arith.constant dense<0.000000e+00> : vector<6xf32>
    %233 = vector.multi_reduction <add>, %228, %cst_106 [1] : vector<6x32xf32> to vector<6xf32>
    %234 = vector.shape_cast %233 : vector<6xf32> to vector<6x1xf32>
    %cst_107 = arith.constant 3.200000e+01 : f32
    %235 = vector.broadcast %cst_107 : f32 to vector<6x1xf32>
    %236 = arith.divf %234, %235 : vector<6x1xf32>
    %237 = vector.broadcast %236 : vector<6x1xf32> to vector<6x32xf32>
    %238 = arith.subf %228, %237 : vector<6x32xf32>
    %239 = arith.mulf %238, %238 : vector<6x32xf32>
    %cst_108 = arith.constant dense<0.000000e+00> : vector<6xf32>
    %240 = vector.multi_reduction <add>, %239, %cst_108 [1] : vector<6x32xf32> to vector<6xf32>
    %241 = vector.shape_cast %240 : vector<6xf32> to vector<6x1xf32>
    %cst_109 = arith.constant 3.200000e+01 : f32
    %242 = vector.broadcast %cst_109 : f32 to vector<6x1xf32>
    %243 = arith.divf %241, %242 : vector<6x1xf32>
    %244 = vector.broadcast %236 : vector<6x1xf32> to vector<6x32xf32>
    %245 = arith.subf %228, %244 : vector<6x32xf32>
    %cst_110 = arith.constant 9.99999974E-6 : f32
    %246 = vector.broadcast %cst_110 : f32 to vector<6x1xf32>
    %247 = arith.addf %243, %246 : vector<6x1xf32>
    %248 = math.rsqrt %247 : vector<6x1xf32>
    %249 = vector.broadcast %248 : vector<6x1xf32> to vector<6x32xf32>
    %250 = arith.mulf %245, %249 : vector<6x32xf32>
    %251 = vector.broadcast %230 : vector<1x32xf32> to vector<6x32xf32>
    %252 = arith.mulf %250, %251 : vector<6x32xf32>
    %253 = vector.broadcast %232 : vector<1x32xf32> to vector<6x32xf32>
    %254 = arith.addf %252, %253 : vector<6x32xf32>
    %c6_111 = arith.constant 6 : index
    %c0_112 = arith.constant 0 : index
    %255 = vector.load %arg34[%c6_111, %c0_112] : memref<22x32xf32, #tpu.memory_space<vmem>>, vector<6x32xf32>
    tpu.vector_store %arg34[%c6_111, %c0_112], %254 {strides = array<i32>} : memref<22x32xf32, #tpu.memory_space<vmem>>, vector<6x32xf32>,
    %c12_113 = arith.constant 12 : index
    %c0_114 = arith.constant 0 : index
    %256 = vector.load %arg34[%c12_113, %c0_114] : memref<22x32xf32, #tpu.memory_space<vmem>>, vector<10x32xf32>
    %c2_115 = arith.constant 2 : index
    %c0_116 = arith.constant 0 : index
    %c0_117 = arith.constant 0 : index
    %257 = vector.load %arg9[%c2_115, %c0_116, %c0_117] : memref<3x32x96xbf16, #tpu.memory_space<vmem>>, vector<1x32x96xbf16>
    %258 = vector.shape_cast %257 : vector<1x32x96xbf16> to vector<32x96xbf16>
    %259 = arith.truncf %256 : vector<10x32xf32> to vector<10x32xbf16>
    %cst_118 = arith.constant dense<0.000000e+00> : vector<10x96xf32>
    %260 = tpu.matmul %259, %258, %cst_118 {dimension_numbers = #tpu.dot_dimension_numbers<[1], [0], [0], [1], [0, 0, 1, 1], [], []>} : vector<10x32xbf16>, vector<32x96xbf16>, vector<10x96xf32> -> vector<10x96xf32>
    %c2_119 = arith.constant 2 : index
    %c0_120 = arith.constant 0 : index
    %c0_121 = arith.constant 0 : index
    %261 = vector.load %arg10[%c2_119, %c0_120, %c0_121] : memref<3x1x96xf32, #tpu.memory_space<vmem>>, vector<1x1x96xf32>
    %262 = vector.shape_cast %261 : vector<1x1x96xf32> to vector<1x96xf32>
    %263 = vector.broadcast %262 : vector<1x96xf32> to vector<10x96xf32>
    %264 = arith.addf %260, %263 : vector<10x96xf32>
    %265 = vector.extract_strided_slice %264 {offsets = [0, 0], sizes = [10, 32], strides = [1, 1]} : vector<10x96xf32> to vector<10x32xf32>
    %266 = vector.extract_strided_slice %264 {offsets = [0, 32], sizes = [10, 32], strides = [1, 1]} : vector<10x96xf32> to vector<10x32xf32>
    %267 = vector.extract_strided_slice %264 {offsets = [0, 64], sizes = [10, 32], strides = [1, 1]} : vector<10x96xf32> to vector<10x32xf32>
    %c0_122 = arith.constant 0 : index
    %c0_123 = arith.constant 0 : index
    %268 = vector.load %arg17[%c0_122, %c0_123] : memref<40x32xbf16, #tpu.memory_space<vmem>>, vector<40x32xbf16>
    %c2_124 = arith.constant 2 : index
    %c0_125 = arith.constant 0 : index
    %c0_126 = arith.constant 0 : index
    %269 = vector.load %arg11[%c2_124, %c0_125, %c0_126] : memref<3x32x32xbf16, #tpu.memory_space<vmem>>, vector<1x32x32xbf16>
    %270 = vector.shape_cast %269 : vector<1x32x32xbf16> to vector<32x32xbf16>
    %c2_127 = arith.constant 2 : index
    %c0_128 = arith.constant 0 : index
    %c0_129 = arith.constant 0 : index
    %271 = vector.load %arg12[%c2_127, %c0_128, %c0_129] : memref<3x1x32xf32, #tpu.memory_space<vmem>>, vector<1x1x32xf32>
    %272 = vector.shape_cast %271 : vector<1x1x32xf32> to vector<1x32xf32>
    %273 = arith.truncf %266 : vector<10x32xf32> to vector<10x32xbf16>
    %274 = arith.truncf %267 : vector<10x32xf32> to vector<10x32xbf16>
    %275 = tpu.concatenate %273, %273, %273, %273 in 0 : vector<10x32xbf16>, vector<10x32xbf16>, vector<10x32xbf16>, vector<10x32xbf16> -> vector<40x32xbf16>
    %276 = arith.mulf %275, %268 : vector<40x32xbf16>
    %277 = tpu.concatenate %274, %274, %274, %274 in 0 : vector<10x32xbf16>, vector<10x32xbf16>, vector<10x32xbf16>, vector<10x32xbf16> -> vector<40x32xbf16>
    %278 = arith.mulf %277, %268 : vector<40x32xbf16>
    %279 = arith.truncf %265 : vector<10x32xf32> to vector<10x32xbf16>
    %cst_130 = arith.constant dense<0.000000e+00> : vector<10x40xf32>
    %280 = tpu.matmul %279, %276, %cst_130 {dimension_numbers = #tpu.dot_dimension_numbers<[1], [1], [0], [0], [0, 0, 1, 0], [], []>} : vector<10x32xbf16>, vector<40x32xbf16>, vector<10x40xf32> -> vector<10x40xf32>
    %281 = vector.extract_strided_slice %280 {offsets = [0, 0], sizes = [10, 10], strides = [1, 1]} : vector<10x40xf32> to vector<10x10xf32>
    %cst_131 = arith.constant dense<0xFF800000> : vector<10xf32>
    %282 = vector.multi_reduction <maximumf>, %281, %cst_131 [1] : vector<10x10xf32> to vector<10xf32>
    %283 = vector.shape_cast %282 : vector<10xf32> to vector<10x1xf32>
    %284 = vector.extract_strided_slice %280 {offsets = [0, 10], sizes = [10, 10], strides = [1, 1]} : vector<10x40xf32> to vector<10x10xf32>
    %cst_132 = arith.constant dense<0xFF800000> : vector<10xf32>
    %285 = vector.multi_reduction <maximumf>, %284, %cst_132 [1] : vector<10x10xf32> to vector<10xf32>
    %286 = vector.shape_cast %285 : vector<10xf32> to vector<10x1xf32>
    %287 = vector.extract_strided_slice %280 {offsets = [0, 20], sizes = [10, 10], strides = [1, 1]} : vector<10x40xf32> to vector<10x10xf32>
    %cst_133 = arith.constant dense<0xFF800000> : vector<10xf32>
    %288 = vector.multi_reduction <maximumf>, %287, %cst_133 [1] : vector<10x10xf32> to vector<10xf32>
    %289 = vector.shape_cast %288 : vector<10xf32> to vector<10x1xf32>
    %290 = vector.extract_strided_slice %280 {offsets = [0, 30], sizes = [10, 10], strides = [1, 1]} : vector<10x40xf32> to vector<10x10xf32>
    %cst_134 = arith.constant dense<0xFF800000> : vector<10xf32>
    %291 = vector.multi_reduction <maximumf>, %290, %cst_134 [1] : vector<10x10xf32> to vector<10xf32>
    %292 = vector.shape_cast %291 : vector<10xf32> to vector<10x1xf32>
    %293 = vector.shape_cast %283 : vector<10x1xf32> to vector<10x1xf32>
    %294 = vector.broadcast %293 : vector<10x1xf32> to vector<10x10xf32>
    %295 = vector.shape_cast %286 : vector<10x1xf32> to vector<10x1xf32>
    %296 = vector.broadcast %295 : vector<10x1xf32> to vector<10x10xf32>
    %297 = vector.shape_cast %289 : vector<10x1xf32> to vector<10x1xf32>
    %298 = vector.broadcast %297 : vector<10x1xf32> to vector<10x10xf32>
    %299 = vector.shape_cast %292 : vector<10x1xf32> to vector<10x1xf32>
    %300 = vector.broadcast %299 : vector<10x1xf32> to vector<10x10xf32>
    %301 = tpu.concatenate %294, %296, %298, %300 in 1 : vector<10x10xf32>, vector<10x10xf32>, vector<10x10xf32>, vector<10x10xf32> -> vector<10x40xf32>
    %302 = arith.subf %280, %301 : vector<10x40xf32>
    %303 = math.exp %302 : vector<10x40xf32>
    %304 = vector.extract_strided_slice %303 {offsets = [0, 0], sizes = [10, 10], strides = [1, 1]} : vector<10x40xf32> to vector<10x10xf32>
    %cst_135 = arith.constant dense<0.000000e+00> : vector<10xf32>
    %305 = vector.multi_reduction <add>, %304, %cst_135 [1] : vector<10x10xf32> to vector<10xf32>
    %306 = vector.shape_cast %305 : vector<10xf32> to vector<10x1xf32>
    %307 = vector.extract_strided_slice %303 {offsets = [0, 10], sizes = [10, 10], strides = [1, 1]} : vector<10x40xf32> to vector<10x10xf32>
    %cst_136 = arith.constant dense<0.000000e+00> : vector<10xf32>
    %308 = vector.multi_reduction <add>, %307, %cst_136 [1] : vector<10x10xf32> to vector<10xf32>
    %309 = vector.shape_cast %308 : vector<10xf32> to vector<10x1xf32>
    %310 = vector.extract_strided_slice %303 {offsets = [0, 20], sizes = [10, 10], strides = [1, 1]} : vector<10x40xf32> to vector<10x10xf32>
    %cst_137 = arith.constant dense<0.000000e+00> : vector<10xf32>
    %311 = vector.multi_reduction <add>, %310, %cst_137 [1] : vector<10x10xf32> to vector<10xf32>
    %312 = vector.shape_cast %311 : vector<10xf32> to vector<10x1xf32>
    %313 = vector.extract_strided_slice %303 {offsets = [0, 30], sizes = [10, 10], strides = [1, 1]} : vector<10x40xf32> to vector<10x10xf32>
    %cst_138 = arith.constant dense<0.000000e+00> : vector<10xf32>
    %314 = vector.multi_reduction <add>, %313, %cst_138 [1] : vector<10x10xf32> to vector<10xf32>
    %315 = vector.shape_cast %314 : vector<10xf32> to vector<10x1xf32>
    %316 = vector.shape_cast %306 : vector<10x1xf32> to vector<10x1xf32>
    %317 = vector.broadcast %316 : vector<10x1xf32> to vector<10x8xf32>
    %318 = vector.shape_cast %309 : vector<10x1xf32> to vector<10x1xf32>
    %319 = vector.broadcast %318 : vector<10x1xf32> to vector<10x8xf32>
    %320 = vector.shape_cast %312 : vector<10x1xf32> to vector<10x1xf32>
    %321 = vector.broadcast %320 : vector<10x1xf32> to vector<10x8xf32>
    %322 = vector.shape_cast %315 : vector<10x1xf32> to vector<10x1xf32>
    %323 = vector.broadcast %322 : vector<10x1xf32> to vector<10x8xf32>
    %324 = tpu.concatenate %317, %319, %321, %323 in 1 : vector<10x8xf32>, vector<10x8xf32>, vector<10x8xf32>, vector<10x8xf32> -> vector<10x32xf32>
    %325 = arith.truncf %303 : vector<10x40xf32> to vector<10x40xbf16>
    %cst_139 = arith.constant dense<0.000000e+00> : vector<10x32xf32>
    %326 = tpu.matmul %325, %278, %cst_139 {dimension_numbers = #tpu.dot_dimension_numbers<[1], [0], [0], [1], [0, 0, 1, 1], [], []>} : vector<10x40xbf16>, vector<40x32xbf16>, vector<10x32xf32> -> vector<10x32xf32>
    %327 = tpu.reciprocal %324 {approx = true} : vector<10x32xf32> -> vector<10x32xf32>
    %328 = arith.mulf %326, %327 : vector<10x32xf32>
    %329 = arith.truncf %328 : vector<10x32xf32> to vector<10x32xbf16>
    %cst_140 = arith.constant dense<0.000000e+00> : vector<10x32xf32>
    %330 = tpu.matmul %329, %270, %cst_140 {dimension_numbers = #tpu.dot_dimension_numbers<[1], [0], [0], [1], [0, 0, 1, 1], [], []>} : vector<10x32xbf16>, vector<32x32xbf16>, vector<10x32xf32> -> vector<10x32xf32>
    %331 = vector.broadcast %272 : vector<1x32xf32> to vector<10x32xf32>
    %332 = arith.addf %330, %331 : vector<10x32xf32>
    %333 = arith.addf %256, %332 : vector<10x32xf32>
    %c2_141 = arith.constant 2 : index
    %c0_142 = arith.constant 0 : index
    %c0_143 = arith.constant 0 : index
    %334 = vector.load %arg13[%c2_141, %c0_142, %c0_143] : memref<3x1x32xf32, #tpu.memory_space<vmem>>, vector<1x1x32xf32>
    %335 = vector.shape_cast %334 : vector<1x1x32xf32> to vector<1x32xf32>
    %c2_144 = arith.constant 2 : index
    %c0_145 = arith.constant 0 : index
    %c0_146 = arith.constant 0 : index
    %336 = vector.load %arg14[%c2_144, %c0_145, %c0_146] : memref<3x1x32xf32, #tpu.memory_space<vmem>>, vector<1x1x32xf32>
    %337 = vector.shape_cast %336 : vector<1x1x32xf32> to vector<1x32xf32>
    %cst_147 = arith.constant dense<0.000000e+00> : vector<10xf32>
    %338 = vector.multi_reduction <add>, %333, %cst_147 [1] : vector<10x32xf32> to vector<10xf32>
    %339 = vector.shape_cast %338 : vector<10xf32> to vector<10x1xf32>
    %cst_148 = arith.constant 3.200000e+01 : f32
    %340 = vector.broadcast %cst_148 : f32 to vector<10x1xf32>
    %341 = arith.divf %339, %340 : vector<10x1xf32>
    %342 = vector.broadcast %341 : vector<10x1xf32> to vector<10x32xf32>
    %343 = arith.subf %333, %342 : vector<10x32xf32>
    %344 = arith.mulf %343, %343 : vector<10x32xf32>
    %cst_149 = arith.constant dense<0.000000e+00> : vector<10xf32>
    %345 = vector.multi_reduction <add>, %344, %cst_149 [1] : vector<10x32xf32> to vector<10xf32>
    %346 = vector.shape_cast %345 : vector<10xf32> to vector<10x1xf32>
    %cst_150 = arith.constant 3.200000e+01 : f32
    %347 = vector.broadcast %cst_150 : f32 to vector<10x1xf32>
    %348 = arith.divf %346, %347 : vector<10x1xf32>
    %349 = vector.broadcast %341 : vector<10x1xf32> to vector<10x32xf32>
    %350 = arith.subf %333, %349 : vector<10x32xf32>
    %cst_151 = arith.constant 9.99999974E-6 : f32
    %351 = vector.broadcast %cst_151 : f32 to vector<10x1xf32>
    %352 = arith.addf %348, %351 : vector<10x1xf32>
    %353 = math.rsqrt %352 : vector<10x1xf32>
    %354 = vector.broadcast %353 : vector<10x1xf32> to vector<10x32xf32>
    %355 = arith.mulf %350, %354 : vector<10x32xf32>
    %356 = vector.broadcast %335 : vector<1x32xf32> to vector<10x32xf32>
    %357 = arith.mulf %355, %356 : vector<10x32xf32>
    %358 = vector.broadcast %337 : vector<1x32xf32> to vector<10x32xf32>
    %359 = arith.addf %357, %358 : vector<10x32xf32>
    %c12_152 = arith.constant 12 : index
    %c0_153 = arith.constant 0 : index
    %360 = vector.load %arg34[%c12_152, %c0_153] : memref<22x32xf32, #tpu.memory_space<vmem>>, vector<10x32xf32>
    tpu.vector_store %arg34[%c12_152, %c0_153], %359 {strides = array<i32>} : memref<22x32xf32, #tpu.memory_space<vmem>>, vector<10x32xf32>,
    %c0_154 = arith.constant 0 : index
    %c0_155 = arith.constant 0 : index
    %361 = vector.load %arg34[%c0_154, %c0_155] : memref<22x32xf32, #tpu.memory_space<vmem>>, vector<22x32xf32>
    %c0_156 = arith.constant 0 : index
    %c0_157 = arith.constant 0 : index
    %362 = vector.load %arg20[%c0_156, %c0_157] : memref<32x64xbf16, #tpu.memory_space<vmem>>, vector<32x64xbf16>
    %363 = arith.truncf %7 : vector<16x32xf32> to vector<16x32xbf16>
    %cst_158 = arith.constant dense<0.000000e+00> : vector<16x64xf32>
    %364 = tpu.matmul %363, %362, %cst_158 {dimension_numbers = #tpu.dot_dimension_numbers<[1], [0], [0], [1], [0, 0, 1, 1], [], []>} : vector<16x32xbf16>, vector<32x64xbf16>, vector<16x64xf32> -> vector<16x64xf32>
    %c0_159 = arith.constant 0 : index
    %c0_160 = arith.constant 0 : index
    %365 = vector.load %arg21[%c0_159, %c0_160] : memref<1x64xf32, #tpu.memory_space<vmem>>, vector<1x64xf32>
    %366 = vector.broadcast %365 : vector<1x64xf32> to vector<16x64xf32>
    %367 = arith.addf %364, %366 : vector<16x64xf32>
    %c0_161 = arith.constant 0 : index
    %c0_162 = arith.constant 0 : index
    %368 = vector.load %arg18[%c0_161, %c0_162] : memref<32x32xbf16, #tpu.memory_space<vmem>>, vector<32x32xbf16>
    %369 = arith.truncf %361 : vector<22x32xf32> to vector<22x32xbf16>
    %cst_163 = arith.constant dense<0.000000e+00> : vector<22x32xf32>
    %370 = tpu.matmul %369, %368, %cst_163 {dimension_numbers = #tpu.dot_dimension_numbers<[1], [0], [0], [1], [0, 0, 1, 1], [], []>} : vector<22x32xbf16>, vector<32x32xbf16>, vector<22x32xf32> -> vector<22x32xf32>
    %c0_164 = arith.constant 0 : index
    %c0_165 = arith.constant 0 : index
    %371 = vector.load %arg19[%c0_164, %c0_165] : memref<1x32xf32, #tpu.memory_space<vmem>>, vector<1x32xf32>
    %372 = vector.broadcast %371 : vector<1x32xf32> to vector<22x32xf32>
    %373 = arith.addf %370, %372 : vector<22x32xf32>
    %374 = vector.extract_strided_slice %367 {offsets = [0, 0], sizes = [16, 32], strides = [1, 1]} : vector<16x64xf32> to vector<16x32xf32>
    %375 = vector.extract_strided_slice %367 {offsets = [0, 32], sizes = [16, 32], strides = [1, 1]} : vector<16x64xf32> to vector<16x32xf32>
    %c0_166 = arith.constant 0 : index
    %c0_167 = arith.constant 0 : index
    %376 = vector.load %arg30[%c0_166, %c0_167] : memref<64x32xbf16, #tpu.memory_space<vmem>>, vector<64x32xbf16>
    %c0_168 = arith.constant 0 : index
    %c0_169 = arith.constant 0 : index
    %377 = vector.load %arg22[%c0_168, %c0_169] : memref<32x32xbf16, #tpu.memory_space<vmem>>, vector<32x32xbf16>
    %c0_170 = arith.constant 0 : index
    %c0_171 = arith.constant 0 : index
    %378 = vector.load %arg23[%c0_170, %c0_171] : memref<1x32xf32, #tpu.memory_space<vmem>>, vector<1x32xf32>
    %379 = arith.truncf %374 : vector<16x32xf32> to vector<16x32xbf16>
    %380 = arith.truncf %375 : vector<16x32xf32> to vector<16x32xbf16>
    %381 = tpu.concatenate %379, %379, %379, %379 in 0 : vector<16x32xbf16>, vector<16x32xbf16>, vector<16x32xbf16>, vector<16x32xbf16> -> vector<64x32xbf16>
    %382 = arith.mulf %381, %376 : vector<64x32xbf16>
    %383 = tpu.concatenate %380, %380, %380, %380 in 0 : vector<16x32xbf16>, vector<16x32xbf16>, vector<16x32xbf16>, vector<16x32xbf16> -> vector<64x32xbf16>
    %384 = arith.mulf %383, %376 : vector<64x32xbf16>
    %385 = arith.truncf %373 : vector<22x32xf32> to vector<22x32xbf16>
    %cst_172 = arith.constant dense<0.000000e+00> : vector<22x64xf32>
    %386 = tpu.matmul %385, %382, %cst_172 {dimension_numbers = #tpu.dot_dimension_numbers<[1], [1], [0], [0], [0, 0, 1, 0], [], []>} : vector<22x32xbf16>, vector<64x32xbf16>, vector<22x64xf32> -> vector<22x64xf32>
    %387 = vector.extract_strided_slice %386 {offsets = [0, 0], sizes = [22, 16], strides = [1, 1]} : vector<22x64xf32> to vector<22x16xf32>
    %cst_173 = arith.constant dense<0xFF800000> : vector<22xf32>
    %388 = vector.multi_reduction <maximumf>, %387, %cst_173 [1] : vector<22x16xf32> to vector<22xf32>
    %389 = vector.shape_cast %388 : vector<22xf32> to vector<22x1xf32>
    %390 = vector.extract_strided_slice %386 {offsets = [0, 16], sizes = [22, 16], strides = [1, 1]} : vector<22x64xf32> to vector<22x16xf32>
    %cst_174 = arith.constant dense<0xFF800000> : vector<22xf32>
    %391 = vector.multi_reduction <maximumf>, %390, %cst_174 [1] : vector<22x16xf32> to vector<22xf32>
    %392 = vector.shape_cast %391 : vector<22xf32> to vector<22x1xf32>
    %393 = vector.extract_strided_slice %386 {offsets = [0, 32], sizes = [22, 16], strides = [1, 1]} : vector<22x64xf32> to vector<22x16xf32>
    %cst_175 = arith.constant dense<0xFF800000> : vector<22xf32>
    %394 = vector.multi_reduction <maximumf>, %393, %cst_175 [1] : vector<22x16xf32> to vector<22xf32>
    %395 = vector.shape_cast %394 : vector<22xf32> to vector<22x1xf32>
    %396 = vector.extract_strided_slice %386 {offsets = [0, 48], sizes = [22, 16], strides = [1, 1]} : vector<22x64xf32> to vector<22x16xf32>
    %cst_176 = arith.constant dense<0xFF800000> : vector<22xf32>
    %397 = vector.multi_reduction <maximumf>, %396, %cst_176 [1] : vector<22x16xf32> to vector<22xf32>
    %398 = vector.shape_cast %397 : vector<22xf32> to vector<22x1xf32>
    %399 = vector.shape_cast %389 : vector<22x1xf32> to vector<22x1xf32>
    %400 = vector.broadcast %399 : vector<22x1xf32> to vector<22x16xf32>
    %401 = vector.shape_cast %392 : vector<22x1xf32> to vector<22x1xf32>
    %402 = vector.broadcast %401 : vector<22x1xf32> to vector<22x16xf32>
    %403 = vector.shape_cast %395 : vector<22x1xf32> to vector<22x1xf32>
    %404 = vector.broadcast %403 : vector<22x1xf32> to vector<22x16xf32>
    %405 = vector.shape_cast %398 : vector<22x1xf32> to vector<22x1xf32>
    %406 = vector.broadcast %405 : vector<22x1xf32> to vector<22x16xf32>
    %407 = tpu.concatenate %400, %402, %404, %406 in 1 : vector<22x16xf32>, vector<22x16xf32>, vector<22x16xf32>, vector<22x16xf32> -> vector<22x64xf32>
    %408 = arith.subf %386, %407 : vector<22x64xf32>
    %409 = math.exp %408 : vector<22x64xf32>
    %410 = vector.extract_strided_slice %409 {offsets = [0, 0], sizes = [22, 16], strides = [1, 1]} : vector<22x64xf32> to vector<22x16xf32>
    %cst_177 = arith.constant dense<0.000000e+00> : vector<22xf32>
    %411 = vector.multi_reduction <add>, %410, %cst_177 [1] : vector<22x16xf32> to vector<22xf32>
    %412 = vector.shape_cast %411 : vector<22xf32> to vector<22x1xf32>
    %413 = vector.extract_strided_slice %409 {offsets = [0, 16], sizes = [22, 16], strides = [1, 1]} : vector<22x64xf32> to vector<22x16xf32>
    %cst_178 = arith.constant dense<0.000000e+00> : vector<22xf32>
    %414 = vector.multi_reduction <add>, %413, %cst_178 [1] : vector<22x16xf32> to vector<22xf32>
    %415 = vector.shape_cast %414 : vector<22xf32> to vector<22x1xf32>
    %416 = vector.extract_strided_slice %409 {offsets = [0, 32], sizes = [22, 16], strides = [1, 1]} : vector<22x64xf32> to vector<22x16xf32>
    %cst_179 = arith.constant dense<0.000000e+00> : vector<22xf32>
    %417 = vector.multi_reduction <add>, %416, %cst_179 [1] : vector<22x16xf32> to vector<22xf32>
    %418 = vector.shape_cast %417 : vector<22xf32> to vector<22x1xf32>
    %419 = vector.extract_strided_slice %409 {offsets = [0, 48], sizes = [22, 16], strides = [1, 1]} : vector<22x64xf32> to vector<22x16xf32>
    %cst_180 = arith.constant dense<0.000000e+00> : vector<22xf32>
    %420 = vector.multi_reduction <add>, %419, %cst_180 [1] : vector<22x16xf32> to vector<22xf32>
    %421 = vector.shape_cast %420 : vector<22xf32> to vector<22x1xf32>
    %422 = vector.shape_cast %412 : vector<22x1xf32> to vector<22x1xf32>
    %423 = vector.broadcast %422 : vector<22x1xf32> to vector<22x8xf32>
    %424 = vector.shape_cast %415 : vector<22x1xf32> to vector<22x1xf32>
    %425 = vector.broadcast %424 : vector<22x1xf32> to vector<22x8xf32>
    %426 = vector.shape_cast %418 : vector<22x1xf32> to vector<22x1xf32>
    %427 = vector.broadcast %426 : vector<22x1xf32> to vector<22x8xf32>
    %428 = vector.shape_cast %421 : vector<22x1xf32> to vector<22x1xf32>
    %429 = vector.broadcast %428 : vector<22x1xf32> to vector<22x8xf32>
    %430 = tpu.concatenate %423, %425, %427, %429 in 1 : vector<22x8xf32>, vector<22x8xf32>, vector<22x8xf32>, vector<22x8xf32> -> vector<22x32xf32>
    %431 = arith.truncf %409 : vector<22x64xf32> to vector<22x64xbf16>
    %cst_181 = arith.constant dense<0.000000e+00> : vector<22x32xf32>
    %432 = tpu.matmul %431, %384, %cst_181 {dimension_numbers = #tpu.dot_dimension_numbers<[1], [0], [0], [1], [0, 0, 1, 1], [], []>} : vector<22x64xbf16>, vector<64x32xbf16>, vector<22x32xf32> -> vector<22x32xf32>
    %433 = tpu.reciprocal %430 {approx = true} : vector<22x32xf32> -> vector<22x32xf32>
    %434 = arith.mulf %432, %433 : vector<22x32xf32>
    %435 = arith.truncf %434 : vector<22x32xf32> to vector<22x32xbf16>
    %cst_182 = arith.constant dense<0.000000e+00> : vector<22x32xf32>
    %436 = tpu.matmul %435, %377, %cst_182 {dimension_numbers = #tpu.dot_dimension_numbers<[1], [0], [0], [1], [0, 0, 1, 1], [], []>} : vector<22x32xbf16>, vector<32x32xbf16>, vector<22x32xf32> -> vector<22x32xf32>
    %437 = vector.broadcast %378 : vector<1x32xf32> to vector<22x32xf32>
    %438 = arith.addf %436, %437 : vector<22x32xf32>
    %439 = arith.addf %361, %438 : vector<22x32xf32>
    %c0_183 = arith.constant 0 : index
    %c0_184 = arith.constant 0 : index
    %440 = vector.load %arg24[%c0_183, %c0_184] : memref<1x32xf32, #tpu.memory_space<vmem>>, vector<1x32xf32>
    %c0_185 = arith.constant 0 : index
    %c0_186 = arith.constant 0 : index
    %441 = vector.load %arg25[%c0_185, %c0_186] : memref<1x32xf32, #tpu.memory_space<vmem>>, vector<1x32xf32>
    %cst_187 = arith.constant dense<0.000000e+00> : vector<22xf32>
    %442 = vector.multi_reduction <add>, %439, %cst_187 [1] : vector<22x32xf32> to vector<22xf32>
    %443 = vector.shape_cast %442 : vector<22xf32> to vector<22x1xf32>
    %cst_188 = arith.constant 3.200000e+01 : f32
    %444 = vector.broadcast %cst_188 : f32 to vector<22x1xf32>
    %445 = arith.divf %443, %444 : vector<22x1xf32>
    %446 = vector.broadcast %445 : vector<22x1xf32> to vector<22x32xf32>
    %447 = arith.subf %439, %446 : vector<22x32xf32>
    %448 = arith.mulf %447, %447 : vector<22x32xf32>
    %cst_189 = arith.constant dense<0.000000e+00> : vector<22xf32>
    %449 = vector.multi_reduction <add>, %448, %cst_189 [1] : vector<22x32xf32> to vector<22xf32>
    %450 = vector.shape_cast %449 : vector<22xf32> to vector<22x1xf32>
    %cst_190 = arith.constant 3.200000e+01 : f32
    %451 = vector.broadcast %cst_190 : f32 to vector<22x1xf32>
    %452 = arith.divf %450, %451 : vector<22x1xf32>
    %453 = vector.broadcast %445 : vector<22x1xf32> to vector<22x32xf32>
    %454 = arith.subf %439, %453 : vector<22x32xf32>
    %cst_191 = arith.constant 9.99999974E-6 : f32
    %455 = vector.broadcast %cst_191 : f32 to vector<22x1xf32>
    %456 = arith.addf %452, %455 : vector<22x1xf32>
    %457 = math.rsqrt %456 : vector<22x1xf32>
    %458 = vector.broadcast %457 : vector<22x1xf32> to vector<22x32xf32>
    %459 = arith.mulf %454, %458 : vector<22x32xf32>
    %460 = vector.broadcast %440 : vector<1x32xf32> to vector<22x32xf32>
    %461 = arith.mulf %459, %460 : vector<22x32xf32>
    %462 = vector.broadcast %441 : vector<1x32xf32> to vector<22x32xf32>
    %463 = arith.addf %461, %462 : vector<22x32xf32>
    %c0_192 = arith.constant 0 : index
    %c0_193 = arith.constant 0 : index
    %464 = vector.load %arg26[%c0_192, %c0_193] : memref<32x128xbf16, #tpu.memory_space<vmem>>, vector<32x128xbf16>
    %465 = arith.truncf %463 : vector<22x32xf32> to vector<22x32xbf16>
    %cst_194 = arith.constant dense<0.000000e+00> : vector<22x128xf32>
    %466 = tpu.matmul %465, %464, %cst_194 {dimension_numbers = #tpu.dot_dimension_numbers<[1], [0], [0], [1], [0, 0, 1, 1], [], []>} : vector<22x32xbf16>, vector<32x128xbf16>, vector<22x128xf32> -> vector<22x128xf32>
    %c0_195 = arith.constant 0 : index
    %c0_196 = arith.constant 0 : index
    %467 = vector.load %arg27[%c0_195, %c0_196] : memref<1x128xf32, #tpu.memory_space<vmem>>, vector<1x128xf32>
    %468 = vector.broadcast %467 : vector<1x128xf32> to vector<22x128xf32>
    %469 = arith.addf %466, %468 : vector<22x128xf32>
    %cst_197 = arith.constant 1.702000e+00 : f32
    %470 = vector.broadcast %cst_197 : f32 to vector<22x128xf32>
    %471 = arith.mulf %470, %469 : vector<22x128xf32>
    %472 = arith.negf %471 : vector<22x128xf32>
    %473 = math.exp %472 : vector<22x128xf32>
    %cst_198 = arith.constant 1.000000e+00 : f32
    %474 = vector.broadcast %cst_198 : f32 to vector<22x128xf32>
    %475 = arith.addf %474, %473 : vector<22x128xf32>
    %476 = arith.divf %474, %475 : vector<22x128xf32>
    %477 = arith.mulf %469, %476 : vector<22x128xf32>
    %c0_199 = arith.constant 0 : index
    %c0_200 = arith.constant 0 : index
    %478 = vector.load %arg28[%c0_199, %c0_200] : memref<128x32xbf16, #tpu.memory_space<vmem>>, vector<128x32xbf16>
    %479 = arith.truncf %477 : vector<22x128xf32> to vector<22x128xbf16>
    %cst_201 = arith.constant dense<0.000000e+00> : vector<22x32xf32>
    %480 = tpu.matmul %479, %478, %cst_201 {dimension_numbers = #tpu.dot_dimension_numbers<[1], [0], [0], [1], [0, 0, 1, 1], [], []>} : vector<22x128xbf16>, vector<128x32xbf16>, vector<22x32xf32> -> vector<22x32xf32>
    %481 = arith.addf %439, %480 : vector<22x32xf32>
    %c0_202 = arith.constant 0 : index
    %c0_203 = arith.constant 0 : index
    %482 = vector.load %arg29[%c0_202, %c0_203] : memref<1x32xf32, #tpu.memory_space<vmem>>, vector<1x32xf32>
    %483 = vector.broadcast %482 : vector<1x32xf32> to vector<22x32xf32>
    %484 = arith.addf %481, %483 : vector<22x32xf32>
    %c0_204 = arith.constant 0 : index
    %c0_205 = arith.constant 0 : index
    %485 = vector.load %arg31[%c0_204, %c0_205] : memref<22x32xf32, #tpu.memory_space<vmem>>, vector<22x32xf32>
    %c0_206 = arith.constant 0 : index
    %c0_207 = arith.constant 0 : index
    %486 = vector.load %arg32[%c0_206, %c0_207] : memref<22x32xf32, #tpu.memory_space<vmem>>, vector<22x32xf32>
    %cst_208 = arith.constant dense<0.000000e+00> : vector<22xf32>
    %487 = vector.multi_reduction <add>, %484, %cst_208 [1] : vector<22x32xf32> to vector<22xf32>
    %488 = vector.shape_cast %487 : vector<22xf32> to vector<22x1xf32>
    %cst_209 = arith.constant 3.200000e+01 : f32
    %489 = vector.broadcast %cst_209 : f32 to vector<22x1xf32>
    %490 = arith.divf %488, %489 : vector<22x1xf32>
    %491 = vector.broadcast %490 : vector<22x1xf32> to vector<22x32xf32>
    %492 = arith.subf %484, %491 : vector<22x32xf32>
    %493 = arith.mulf %492, %492 : vector<22x32xf32>
    %cst_210 = arith.constant dense<0.000000e+00> : vector<22xf32>
    %494 = vector.multi_reduction <add>, %493, %cst_210 [1] : vector<22x32xf32> to vector<22xf32>
    %495 = vector.shape_cast %494 : vector<22xf32> to vector<22x1xf32>
    %cst_211 = arith.constant 3.200000e+01 : f32
    %496 = vector.broadcast %cst_211 : f32 to vector<22x1xf32>
    %497 = arith.divf %495, %496 : vector<22x1xf32>
    %498 = vector.broadcast %490 : vector<22x1xf32> to vector<22x32xf32>
    %499 = arith.subf %484, %498 : vector<22x32xf32>
    %cst_212 = arith.constant 9.99999974E-6 : f32
    %500 = vector.broadcast %cst_212 : f32 to vector<22x1xf32>
    %501 = arith.addf %497, %500 : vector<22x1xf32>
    %502 = math.rsqrt %501 : vector<22x1xf32>
    %503 = vector.broadcast %502 : vector<22x1xf32> to vector<22x32xf32>
    %504 = arith.mulf %499, %503 : vector<22x32xf32>
    %505 = arith.mulf %504, %485 : vector<22x32xf32>
    %506 = arith.addf %505, %486 : vector<22x32xf32>
    %c0_213 = arith.constant 0 : index
    %c0_214 = arith.constant 0 : index
    %c0_215 = arith.constant 0 : index
    %507 = vector.load %arg33[%c0_213, %c0_214, %c0_215] : memref<1x22x32xf32, #tpu.memory_space<vmem>>, vector<1x22x32xf32>
    %508 = vector.shape_cast %507 : vector<1x22x32xf32> to vector<22x32xf32>
    %509 = vector.shape_cast %506 : vector<22x32xf32> to vector<1x22x32xf32>
    tpu.vector_store %arg33[%c0_213, %c0_214, %c0_215], %509 {strides = array<i32>} : memref<1x22x32xf32, #tpu.memory_space<vmem>>, vector<1x22x32xf32>,
    return
  }
  func.func @transform_0(%arg0: i32) -> (i32, i32, i32) {
    %c0_i32 = arith.constant 0 : i32
    %c0_i32_0 = arith.constant 0 : i32
    %c0_i32_1 = arith.constant 0 : i32
    return %arg0, %c0_i32, %c0_i32_0 : i32, i32, i32
  }
  func.func @transform_1(%arg0: i32) -> (i32, i32, i32) {
    %c0_i32 = arith.constant 0 : i32
    %c0_i32_0 = arith.constant 0 : i32
    %c0_i32_1 = arith.constant 0 : i32
    %c0_i32_2 = arith.constant 0 : i32
    return %c0_i32, %c0_i32_0, %c0_i32_1 : i32, i32, i32
  }
  func.func @transform_2(%arg0: i32) -> (i32, i32, i32) {
    %c0_i32 = arith.constant 0 : i32
    %c0_i32_0 = arith.constant 0 : i32
    %c0_i32_1 = arith.constant 0 : i32
    %c0_i32_2 = arith.constant 0 : i32
    return %c0_i32, %c0_i32_0, %c0_i32_1 : i32, i32, i32
  }
  func.func @transform_3(%arg0: i32) -> (i32, i32, i32) {
    %c0_i32 = arith.constant 0 : i32
    %c0_i32_0 = arith.constant 0 : i32
    %c0_i32_1 = arith.constant 0 : i32
    return %arg0, %c0_i32, %c0_i32_0 : i32, i32, i32
  }
  func.func @transform_4(%arg0: i32) -> (i32, i32) {
    %c0_i32 = arith.constant 0 : i32
    %c0_i32_0 = arith.constant 0 : i32
    %c0_i32_1 = arith.constant 0 : i32
    return %c0_i32, %c0_i32_0 : i32, i32
  }
  func.func @transform_5(%arg0: i32) -> (i32, i32) {
    %c0_i32 = arith.constant 0 : i32
    %c0_i32_0 = arith.constant 0 : i32
    %c0_i32_1 = arith.constant 0 : i32
    return %c0_i32, %c0_i32_0 : i32, i32
  }
  func.func @transform_6(%arg0: i32) -> (i32, i32) {
    %c0_i32 = arith.constant 0 : i32
    %c0_i32_0 = arith.constant 0 : i32
    %c0_i32_1 = arith.constant 0 : i32
    return %c0_i32, %c0_i32_0 : i32, i32
  }
  func.func @transform_7(%arg0: i32) -> (i32, i32) {
    %c0_i32 = arith.constant 0 : i32
    %c0_i32_0 = arith.constant 0 : i32
    %c0_i32_1 = arith.constant 0 : i32
    return %c0_i32, %c0_i32_0 : i32, i32
  }
  func.func @transform_8(%arg0: i32) -> (i32, i32, i32) {
    %c0_i32 = arith.constant 0 : i32
    %c0_i32_0 = arith.constant 0 : i32
    %c0_i32_1 = arith.constant 0 : i32
    %c0_i32_2 = arith.constant 0 : i32
    return %c0_i32, %c0_i32_0, %c0_i32_1 : i32, i32, i32
  }
  func.func @transform_9(%arg0: i32) -> (i32, i32, i32) {
    %c0_i32 = arith.constant 0 : i32
    %c0_i32_0 = arith.constant 0 : i32
    %c0_i32_1 = arith.constant 0 : i32
    %c0_i32_2 = arith.constant 0 : i32
    return %c0_i32, %c0_i32_0, %c0_i32_1 : i32, i32, i32
  }
  func.func @transform_10(%arg0: i32) -> (i32, i32, i32) {
    %c0_i32 = arith.constant 0 : i32
    %c0_i32_0 = arith.constant 0 : i32
    %c0_i32_1 = arith.constant 0 : i32
    %c0_i32_2 = arith.constant 0 : i32
    return %c0_i32, %c0_i32_0, %c0_i32_1 : i32, i32, i32
  }
  func.func @transform_11(%arg0: i32) -> (i32, i32, i32) {
    %c0_i32 = arith.constant 0 : i32
    %c0_i32_0 = arith.constant 0 : i32
    %c0_i32_1 = arith.constant 0 : i32
    %c0_i32_2 = arith.constant 0 : i32
    return %c0_i32, %c0_i32_0, %c0_i32_1 : i32, i32, i32
  }
  func.func @transform_12(%arg0: i32) -> (i32, i32, i32) {
    %c0_i32 = arith.constant 0 : i32
    %c0_i32_0 = arith.constant 0 : i32
    %c0_i32_1 = arith.constant 0 : i32
    %c0_i32_2 = arith.constant 0 : i32
    return %c0_i32, %c0_i32_0, %c0_i32_1 : i32, i32, i32
  }
  func.func @transform_13(%arg0: i32) -> (i32, i32, i32) {
    %c0_i32 = arith.constant 0 : i32
    %c0_i32_0 = arith.constant 0 : i32
    %c0_i32_1 = arith.constant 0 : i32
    %c0_i32_2 = arith.constant 0 : i32
    return %c0_i32, %c0_i32_0, %c0_i32_1 : i32, i32, i32
  }
  func.func @transform_14(%arg0: i32) -> (i32, i32) {
    %c0_i32 = arith.constant 0 : i32
    %c0_i32_0 = arith.constant 0 : i32
    %c0_i32_1 = arith.constant 0 : i32
    return %c0_i32, %c0_i32_0 : i32, i32
  }
  func.func @transform_15(%arg0: i32) -> (i32, i32) {
    %c0_i32 = arith.constant 0 : i32
    %c0_i32_0 = arith.constant 0 : i32
    %c0_i32_1 = arith.constant 0 : i32
    return %c0_i32, %c0_i32_0 : i32, i32
  }
  func.func @transform_16(%arg0: i32) -> (i32, i32) {
    %c0_i32 = arith.constant 0 : i32
    %c0_i32_0 = arith.constant 0 : i32
    %c0_i32_1 = arith.constant 0 : i32
    return %c0_i32, %c0_i32_0 : i32, i32
  }
  func.func @transform_17(%arg0: i32) -> (i32, i32) {
    %c0_i32 = arith.constant 0 : i32
    %c0_i32_0 = arith.constant 0 : i32
    %c0_i32_1 = arith.constant 0 : i32
    return %c0_i32, %c0_i32_0 : i32, i32
  }
  func.func @transform_18(%arg0: i32) -> (i32, i32) {
    %c0_i32 = arith.constant 0 : i32
    %c0_i32_0 = arith.constant 0 : i32
    %c0_i32_1 = arith.constant 0 : i32
    return %c0_i32, %c0_i32_0 : i32, i32
  }
  func.func @transform_19(%arg0: i32) -> (i32, i32) {
    %c0_i32 = arith.constant 0 : i32
    %c0_i32_0 = arith.constant 0 : i32
    %c0_i32_1 = arith.constant 0 : i32
    return %c0_i32, %c0_i32_0 : i32, i32
  }
  func.func @transform_20(%arg0: i32) -> (i32, i32) {
    %c0_i32 = arith.constant 0 : i32
    %c0_i32_0 = arith.constant 0 : i32
    %c0_i32_1 = arith.constant 0 : i32
    return %c0_i32, %c0_i32_0 : i32, i32
  }
  func.func @transform_21(%arg0: i32) -> (i32, i32) {
    %c0_i32 = arith.constant 0 : i32
    %c0_i32_0 = arith.constant 0 : i32
    %c0_i32_1 = arith.constant 0 : i32
    return %c0_i32, %c0_i32_0 : i32, i32
  }
  func.func @transform_22(%arg0: i32) -> (i32, i32) {
    %c0_i32 = arith.constant 0 : i32
    %c0_i32_0 = arith.constant 0 : i32
    %c0_i32_1 = arith.constant 0 : i32
    return %c0_i32, %c0_i32_0 : i32, i32
  }
  func.func @transform_23(%arg0: i32) -> (i32, i32) {
    %c0_i32 = arith.constant 0 : i32
    %c0_i32_0 = arith.constant 0 : i32
    %c0_i32_1 = arith.constant 0 : i32
    return %c0_i32, %c0_i32_0 : i32, i32
  }
  func.func @transform_24(%arg0: i32) -> (i32, i32) {
    %c0_i32 = arith.constant 0 : i32
    %c0_i32_0 = arith.constant 0 : i32
    %c0_i32_1 = arith.constant 0 : i32
    return %c0_i32, %c0_i32_0 : i32, i32
  }
  func.func @transform_25(%arg0: i32) -> (i32, i32) {
    %c0_i32 = arith.constant 0 : i32
    %c0_i32_0 = arith.constant 0 : i32
    %c0_i32_1 = arith.constant 0 : i32
    return %c0_i32, %c0_i32_0 : i32, i32
  }
  func.func @transform_26(%arg0: i32) -> (i32, i32) {
    %c0_i32 = arith.constant 0 : i32
    %c0_i32_0 = arith.constant 0 : i32
    %c0_i32_1 = arith.constant 0 : i32
    return %c0_i32, %c0_i32_0 : i32, i32
  }
  func.func @transform_27(%arg0: i32) -> (i32, i32) {
    %c0_i32 = arith.constant 0 : i32
    %c0_i32_0 = arith.constant 0 : i32
    %c0_i32_1 = arith.constant 0 : i32
    return %c0_i32, %c0_i32_0 : i32, i32
  }
  func.func @transform_28(%arg0: i32) -> (i32, i32) {
    %c0_i32 = arith.constant 0 : i32
    %c0_i32_0 = arith.constant 0 : i32
    %c0_i32_1 = arith.constant 0 : i32
    return %c0_i32, %c0_i32_0 : i32, i32
  }
  func.func @transform_29(%arg0: i32) -> (i32, i32) {
    %c0_i32 = arith.constant 0 : i32
    %c0_i32_0 = arith.constant 0 : i32
    %c0_i32_1 = arith.constant 0 : i32
    return %c0_i32, %c0_i32_0 : i32, i32
  }
  func.func @transform_30(%arg0: i32) -> (i32, i32) {
    %c0_i32 = arith.constant 0 : i32
    %c0_i32_0 = arith.constant 0 : i32
    %c0_i32_1 = arith.constant 0 : i32
    return %c0_i32, %c0_i32_0 : i32, i32
  }
  func.func @transform_31(%arg0: i32) -> (i32, i32) {
    %c0_i32 = arith.constant 0 : i32
    %c0_i32_0 = arith.constant 0 : i32
    %c0_i32_1 = arith.constant 0 : i32
    return %c0_i32, %c0_i32_0 : i32, i32
  }
  func.func @transform_32(%arg0: i32) -> (i32, i32, i32) {
    %c0_i32 = arith.constant 0 : i32
    %c0_i32_0 = arith.constant 0 : i32
    %c0_i32_1 = arith.constant 0 : i32
    return %arg0, %c0_i32, %c0_i32_0 : i32, i32, i32
  }
}

</mosaic_0001>

<llo_original>
// kernel: tpu_custom_call.1
$region0: #{tpu_custom_call.1}
  #allocation0 [shape = 'u32[]', space=smem, size = 0x4, offset = 0x4, fixed_abs, tag = 'smem constant byte address 0x4 - core index']
  #allocation1 [shape = 'u32[72,128]{1,0:T(1,128)}', space=vmem, size = 0x9000, scoped, tag = 'internal scratch']
  #allocation2 [shape = 'f32[22,32]{1,0:T(8,128)}', space=vmem, size = 0x3000, scoped, tag = 'scratch operand']
  %s0 = inlined_call_operand.smem [shape: u32[33], index: -1, kind: input, shape index: {}]
  %s1 = sld [smem:[%s0]]
  %s2 = scalar_lea.smem %s0, 1
  %s3 = sld [smem:[%s2]]
  %s4 = scalar_lea.smem %s0, 2
  %s5 = sld [smem:[%s4]]
  %s6 = scalar_lea.smem %s0, 3
  %s7 = sld [smem:[%s6]]
  %s8 = scalar_lea.smem %s0, 4
  %s9 = sld [smem:[%s8]]
  %s10 = scalar_lea.smem %s0, 5
  %s11 = sld [smem:[%s10]]
  %s12 = scalar_lea.smem %s0, 6
  %s13 = sld [smem:[%s12]]
  %s14 = scalar_lea.smem %s0, 7
  %s15 = sld [smem:[%s14]]
  %s16 = scalar_lea.smem %s0, 8
  %s17 = sld [smem:[%s16]]
  %s18 = scalar_lea.smem %s0, 9
  %s19 = sld [smem:[%s18]]
  %s20 = scalar_lea.smem %s0, 10
  %s21 = sld [smem:[%s20]]
  %s22 = scalar_lea.smem %s0, 11
  %s23 = sld [smem:[%s22]]
  %s24 = scalar_lea.smem %s0, 12
  %s25 = sld [smem:[%s24]]
  %s26 = scalar_lea.smem %s0, 13
  %s27 = sld [smem:[%s26]]
  %s28 = scalar_lea.smem %s0, 14
  %s29 = sld [smem:[%s28]]
  %s30 = scalar_lea.smem %s0, 15
  %s31 = sld [smem:[%s30]]
  %s32 = scalar_lea.smem %s0, 16
  %s33 = sld [smem:[%s32]]
  %s34 = scalar_lea.smem %s0, 17
  %s35 = sld [smem:[%s34]]
  %s36 = scalar_lea.smem %s0, 18
  %s37 = sld [smem:[%s36]]
  %s38 = scalar_lea.smem %s0, 19
  %s39 = sld [smem:[%s38]]
  %s40 = scalar_lea.smem %s0, 20
  %s41 = sld [smem:[%s40]]
  %s42 = scalar_lea.smem %s0, 21
  %s43 = sld [smem:[%s42]]
  %s44 = scalar_lea.smem %s0, 22
  %s45 = sld [smem:[%s44]]
  %s46 = scalar_lea.smem %s0, 23
  %s47 = sld [smem:[%s46]]
  %s48 = scalar_lea.smem %s0, 24
  %s49 = sld [smem:[%s48]]
  %s50 = scalar_lea.smem %s0, 25
  %s51 = sld [smem:[%s50]]
  %s52 = scalar_lea.smem %s0, 26
  %s53 = sld [smem:[%s52]]
  %s54 = scalar_lea.smem %s0, 27
  %s55 = sld [smem:[%s54]]
  %s56 = scalar_lea.smem %s0, 28
  %s57 = sld [smem:[%s56]]
  %s58 = scalar_lea.smem %s0, 29
  %s59 = sld [smem:[%s58]]
  %s60 = scalar_lea.smem %s0, 30
  %s61 = sld [smem:[%s60]]
  %s62 = scalar_lea.smem %s0, 31
  %s63 = sld [smem:[%s62]]
  %s64 = scalar_lea.smem %s0, 32
  %s65 = sld [smem:[%s64]]
  %s66 = sld [smem:[#allocation0]]
  $region161: #{tpu_custom_call.1} parent=0
    _
  %s68 = ssub.s32 1, %s66
  %s69 = scalar_select 0, %s68, %s66
  loop: start=0, step=1, limit=4
  $region2: #{tpu_custom_call.1} parent=0 // loop_pre_header
    _
  $region3: #{tpu_custom_call.1} parent=0 // loop_header
    %s71 = sphi 0, %s75
    %p72 = scmp.ge.s32.totalorder %s71, 4
    %s81 = sphi 0, %s83
    %s84 = sphi 0, %s81
    %s85 = sphi 0, %s84
    %s101 = sphi 0, %s85
    %s105 = sphi 0, %s105
    %s107 = sphi 0, %s105
    %s108 = sphi 0, %s107
    %s122 = sphi 0, %s108
    %s126 = sphi 0, %s126
    %s128 = sphi 0, %s126
    %s129 = sphi 0, %s128
    %s143 = sphi 0, %s129
    %s149 = sphi 0, %s151
    %s152 = sphi 0, %s149
    %s153 = sphi 0, %s152
    %s169 = sphi 0, %s153
    %s173 = sphi 0, %s173
    %s175 = sphi 0, %s173
    %s176 = sphi 0, %s175
    %s190 = sphi 0, %s176
    %s194 = sphi 0, %s194
    %s196 = sphi 0, %s194
    %s197 = sphi 0, %s196
    %s211 = sphi 0, %s197
    %s215 = sphi 0, %s215
    %s217 = sphi 0, %s215
    %s218 = sphi 0, %s217
    %s232 = sphi 0, %s218
    %s236 = sphi 0, %s236
    %s238 = sphi 0, %s236
    %s239 = sphi 0, %s238
    %s253 = sphi 0, %s239
    %s257 = sphi 0, %s257
    %s259 = sphi 0, %s257
    %s260 = sphi 0, %s259
    %s274 = sphi 0, %s260
    %s278 = sphi 0, %s278
    %s280 = sphi 0, %s278
    %s281 = sphi 0, %s280
    %s295 = sphi 0, %s281
    %s299 = sphi 0, %s299
    %s301 = sphi 0, %s299
    %s302 = sphi 0, %s301
    %s316 = sphi 0, %s302
    %s320 = sphi 0, %s320
    %s322 = sphi 0, %s320
    %s323 = sphi 0, %s322
    %s337 = sphi 0, %s323
    %s341 = sphi 0, %s341
    %s343 = sphi 0, %s341
    %s344 = sphi 0, %s343
    %s358 = sphi 0, %s344
    %s362 = sphi 0, %s362
    %s364 = sphi 0, %s362
    %s365 = sphi 0, %s364
    %s379 = sphi 0, %s365
    %s383 = sphi 0, %s383
    %s385 = sphi 0, %s383
    %s386 = sphi 0, %s385
    %s400 = sphi 0, %s386
    %s404 = sphi 0, %s404
    %s406 = sphi 0, %s404
    %s407 = sphi 0, %s406
    %s421 = sphi 0, %s407
    %s425 = sphi 0, %s425
    %s427 = sphi 0, %s425
    %s428 = sphi 0, %s427
    %s442 = sphi 0, %s428
    %s446 = sphi 0, %s446
    %s448 = sphi 0, %s446
    %s449 = sphi 0, %s448
    %s463 = sphi 0, %s449
    %s467 = sphi 0, %s467
    %s469 = sphi 0, %s467
    %s470 = sphi 0, %s469
    %s484 = sphi 0, %s470
    %s488 = sphi 0, %s488
    %s490 = sphi 0, %s488
    %s491 = sphi 0, %s490
    %s505 = sphi 0, %s491
    %s509 = sphi 0, %s509
    %s511 = sphi 0, %s509
    %s512 = sphi 0, %s511
    %s526 = sphi 0, %s512
    %s530 = sphi 0, %s530
    %s532 = sphi 0, %s530
    %s533 = sphi 0, %s532
    %s547 = sphi 0, %s533
    %s551 = sphi 0, %s551
    %s553 = sphi 0, %s551
    %s554 = sphi 0, %s553
    %s568 = sphi 0, %s554
    %s572 = sphi 0, %s572
    %s574 = sphi 0, %s572
    %s575 = sphi 0, %s574
    %s589 = sphi 0, %s575
    %s593 = sphi 0, %s593
    %s595 = sphi 0, %s593
    %s596 = sphi 0, %s595
    %s610 = sphi 0, %s596
    %s614 = sphi 0, %s614
    %s616 = sphi 0, %s614
    %s617 = sphi 0, %s616
    %s631 = sphi 0, %s617
    %s635 = sphi 0, %s635
    %s637 = sphi 0, %s635
    %s638 = sphi 0, %s637
    %s652 = sphi 0, %s638
    %s656 = sphi 0, %s656
    %s658 = sphi 0, %s656
    %s659 = sphi 0, %s658
    %s673 = sphi 0, %s659
    %s677 = sphi 0, %s677
    %s679 = sphi 0, %s677
    %s680 = sphi 0, %s679
    %s694 = sphi 0, %s680
    %s698 = sphi 0, %s698
    %s700 = sphi 0, %s698
    %s701 = sphi 0, %s700
    %s715 = sphi 0, %s701
    %s719 = sphi 0, %s719
    %s721 = sphi 0, %s719
    %s722 = sphi 0, %s721
    %s736 = sphi 0, %s722
    %s740 = sphi 0, %s740
    %s742 = sphi 0, %s740
    %s743 = sphi 0, %s742
    %s757 = sphi 0, %s743
    %s763 = sphi 0, %s765
    %s766 = sphi 0, %s763
    %s767 = sphi 0, %s766
    %s783 = sphi 0, %s767
  $region4: #{tpu_custom_call.1} parent=0 // loop_header_branch
    %74 = sbr.rel (%p72) target = $region8
  $region5: #{tpu_custom_call.1} parent=0 // loop_body
    %s76 = ssub.s32 %s71, 1
    %s77 = ssub.s32 %s71, 2
    %s78 = sadd.s32 %s71, 1
    %s79 = ssub.s32 %s71, %s78
    %p80 = scmp.eq.s32.totalorder %s79, 0
    %s82 = sadd.s32 %s81, 1
    %s83 = scalar_select %p80, %s81, %s82
    %p86 = pneg %p80
    %p87 = scmp.eq.s32.totalorder %s71, 1
    %p88 = por %p86, %p87
    %p89 = scmp.ne.s32.totalorder %s81, %s84
    %p90 = scmp.eq.s32.totalorder %s71, 0
    %p91 = por %p89, %p90
    %p92 = scmp.ne.s32.totalorder %s81, %s84
    %p93 = scmp.eq.s32.totalorder %s76, 1
    %p94 = por %p92, %p93
    %p95 = scmp.ne.s32.totalorder %s84, %s85
    %p96 = scmp.eq.s32.totalorder %s76, 0
    %p97 = por %p95, %p96
    %p98 = scmp.ne.s32.totalorder %s84, %s85
    %p99 = scmp.eq.s32.totalorder %s77, 1
    %p100 = por %p98, %p99
    %p102 = scmp.ne.s32.totalorder %s85, %s101
    %p103 = scmp.eq.s32.totalorder %s77, 0
    %p104 = por %p102, %p103
    %s106 = sadd.s32 %s105, 1
    %p109 = scmp.eq.s32.totalorder %s71, 1
    %p110 = scmp.ne.s32.totalorder %s105, %s107
    %p111 = scmp.eq.s32.totalorder %s71, 0
    %p112 = por %p110, %p111
    %p113 = scmp.ne.s32.totalorder %s105, %s107
    %p114 = scmp.eq.s32.totalorder %s76, 1
    %p115 = por %p113, %p114
    %p116 = scmp.ne.s32.totalorder %s107, %s108
    %p117 = scmp.eq.s32.totalorder %s76, 0
    %p118 = por %p116, %p117
    %p119 = scmp.ne.s32.totalorder %s107, %s108
    %p120 = scmp.eq.s32.totalorder %s77, 1
    %p121 = por %p119, %p120
    %p123 = scmp.ne.s32.totalorder %s108, %s122
    %p124 = scmp.eq.s32.totalorder %s77, 0
    %p125 = por %p123, %p124
    %s127 = sadd.s32 %s126, 1
    %p130 = scmp.eq.s32.totalorder %s71, 1
    %p131 = scmp.ne.s32.totalorder %s126, %s128
    %p132 = scmp.eq.s32.totalorder %s71, 0
    %p133 = por %p131, %p132
    %p134 = scmp.ne.s32.totalorder %s126, %s128
    %p135 = scmp.eq.s32.totalorder %s76, 1
    %p136 = por %p134, %p135
    %p137 = scmp.ne.s32.totalorder %s128, %s129
    %p138 = scmp.eq.s32.totalorder %s76, 0
    %p139 = por %p137, %p138
    %p140 = scmp.ne.s32.totalorder %s128, %s129
    %p141 = scmp.eq.s32.totalorder %s77, 1
    %p142 = por %p140, %p141
    %p144 = scmp.ne.s32.totalorder %s129, %s143
    %p145 = scmp.eq.s32.totalorder %s77, 0
    %p146 = por %p144, %p145
    %s147 = ssub.s32 %s71, %s78
    %p148 = scmp.eq.s32.totalorder %s147, 0
    %s150 = sadd.s32 %s149, 1
    %s151 = scalar_select %p148, %s149, %s150
    %p154 = pneg %p148
    %p155 = scmp.eq.s32.totalorder %s71, 1
    %p156 = por %p154, %p155
    %p157 = scmp.ne.s32.totalorder %s149, %s152
    %p158 = scmp.eq.s32.totalorder %s71, 0
    %p159 = por %p157, %p158
    %p160 = scmp.ne.s32.totalorder %s149, %s152
    %p161 = scmp.eq.s32.totalorder %s76, 1
    %p162 = por %p160, %p161
    %p163 = scmp.ne.s32.totalorder %s152, %s153
    %p164 = scmp.eq.s32.totalorder %s76, 0
    %p165 = por %p163, %p164
    %p166 = scmp.ne.s32.totalorder %s152, %s153
    %p167 = scmp.eq.s32.totalorder %s77, 1
    %p168 = por %p166, %p167
    %p170 = scmp.ne.s32.totalorder %s153, %s169
    %p171 = scmp.eq.s32.totalorder %s77, 0
    %p172 = por %p170, %p171
    %s174 = sadd.s32 %s173, 1
    %p177 = scmp.eq.s32.totalorder %s71, 1
    %p178 = scmp.ne.s32.totalorder %s173, %s175
    %p179 = scmp.eq.s32.totalorder %s71, 0
    %p180 = por %p178, %p179
    %p181 = scmp.ne.s32.totalorder %s173, %s175
    %p182 = scmp.eq.s32.totalorder %s76, 1
    %p183 = por %p181, %p182
    %p184 = scmp.ne.s32.totalorder %s175, %s176
    %p185 = scmp.eq.s32.totalorder %s76, 0
    %p186 = por %p184, %p185
    %p187 = scmp.ne.s32.totalorder %s175, %s176
    %p188 = scmp.eq.s32.totalorder %s77, 1
    %p189 = por %p187, %p188
    %p191 = scmp.ne.s32.totalorder %s176, %s190
    %p192 = scmp.eq.s32.totalorder %s77, 0
    %p193 = por %p191, %p192
    %s195 = sadd.s32 %s194, 1
    %p198 = scmp.eq.s32.totalorder %s71, 1
    %p199 = scmp.ne.s32.totalorder %s194, %s196
    %p200 = scmp.eq.s32.totalorder %s71, 0
    %p201 = por %p199, %p200
    %p202 = scmp.ne.s32.totalorder %s194, %s196
    %p203 = scmp.eq.s32.totalorder %s76, 1
    %p204 = por %p202, %p203
    %p205 = scmp.ne.s32.totalorder %s196, %s197
    %p206 = scmp.eq.s32.totalorder %s76, 0
    %p207 = por %p205, %p206
    %p208 = scmp.ne.s32.totalorder %s196, %s197
    %p209 = scmp.eq.s32.totalorder %s77, 1
    %p210 = por %p208, %p209
    %p212 = scmp.ne.s32.totalorder %s197, %s211
    %p213 = scmp.eq.s32.totalorder %s77, 0
    %p214 = por %p212, %p213
    %s216 = sadd.s32 %s215, 1
    %p219 = scmp.eq.s32.totalorder %s71, 1
    %p220 = scmp.ne.s32.totalorder %s215, %s217
    %p221 = scmp.eq.s32.totalorder %s71, 0
    %p222 = por %p220, %p221
    %p223 = scmp.ne.s32.totalorder %s215, %s217
    %p224 = scmp.eq.s32.totalorder %s76, 1
    %p225 = por %p223, %p224
    %p226 = scmp.ne.s32.totalorder %s217, %s218
    %p227 = scmp.eq.s32.totalorder %s76, 0
    %p228 = por %p226, %p227
    %p229 = scmp.ne.s32.totalorder %s217, %s218
    %p230 = scmp.eq.s32.totalorder %s77, 1
    %p231 = por %p229, %p230
    %p233 = scmp.ne.s32.totalorder %s218, %s232
    %p234 = scmp.eq.s32.totalorder %s77, 0
    %p235 = por %p233, %p234
    %s237 = sadd.s32 %s236, 1
    %p240 = scmp.eq.s32.totalorder %s71, 1
    %p241 = scmp.ne.s32.totalorder %s236, %s238
    %p242 = scmp.eq.s32.totalorder %s71, 0
    %p243 = por %p241, %p242
    %p244 = scmp.ne.s32.totalorder %s236, %s238
    %p245 = scmp.eq.s32.totalorder %s76, 1
    %p246 = por %p244, %p245
    %p247 = scmp.ne.s32.totalorder %s238, %s239
    %p248 = scmp.eq.s32.totalorder %s76, 0
    %p249 = por %p247, %p248
    %p250 = scmp.ne.s32.totalorder %s238, %s239
    %p251 = scmp.eq.s32.totalorder %s77, 1
    %p252 = por %p250, %p251
    %p254 = scmp.ne.s32.totalorder %s239, %s253
    %p255 = scmp.eq.s32.totalorder %s77, 0
    %p256 = por %p254, %p255
    %s258 = sadd.s32 %s257, 1
    %p261 = scmp.eq.s32.totalorder %s71, 1
    %p262 = scmp.ne.s32.totalorder %s257, %s259
    %p263 = scmp.eq.s32.totalorder %s71, 0
    %p264 = por %p262, %p263
    %p265 = scmp.ne.s32.totalorder %s257, %s259
    %p266 = scmp.eq.s32.totalorder %s76, 1
    %p267 = por %p265, %p266
    %p268 = scmp.ne.s32.totalorder %s259, %s260
    %p269 = scmp.eq.s32.totalorder %s76, 0
    %p270 = por %p268, %p269
    %p271 = scmp.ne.s32.totalorder %s259, %s260
    %p272 = scmp.eq.s32.totalorder %s77, 1
    %p273 = por %p271, %p272
    %p275 = scmp.ne.s32.totalorder %s260, %s274
    %p276 = scmp.eq.s32.totalorder %s77, 0
    %p277 = por %p275, %p276
    %s279 = sadd.s32 %s278, 1
    %p282 = scmp.eq.s32.totalorder %s71, 1
    %p283 = scmp.ne.s32.totalorder %s278, %s280
    %p284 = scmp.eq.s32.totalorder %s71, 0
    %p285 = por %p283, %p284
    %p286 = scmp.ne.s32.totalorder %s278, %s280
    %p287 = scmp.eq.s32.totalorder %s76, 1
    %p288 = por %p286, %p287
    %p289 = scmp.ne.s32.totalorder %s280, %s281
    %p290 = scmp.eq.s32.totalorder %s76, 0
    %p291 = por %p289, %p290
    %p292 = scmp.ne.s32.totalorder %s280, %s281
    %p293 = scmp.eq.s32.totalorder %s77, 1
    %p294 = por %p292, %p293
    %p296 = scmp.ne.s32.totalorder %s281, %s295
    %p297 = scmp.eq.s32.totalorder %s77, 0
    %p298 = por %p296, %p297
    %s300 = sadd.s32 %s299, 1
    %p303 = scmp.eq.s32.totalorder %s71, 1
    %p304 = scmp.ne.s32.totalorder %s299, %s301
    %p305 = scmp.eq.s32.totalorder %s71, 0
    %p306 = por %p304, %p305
    %p307 = scmp.ne.s32.totalorder %s299, %s301
    %p308 = scmp.eq.s32.totalorder %s76, 1
    %p309 = por %p307, %p308
    %p310 = scmp.ne.s32.totalorder %s301, %s302
    %p311 = scmp.eq.s32.totalorder %s76, 0
    %p312 = por %p310, %p311
    %p313 = scmp.ne.s32.totalorder %s301, %s302
    %p314 = scmp.eq.s32.totalorder %s77, 1
    %p315 = por %p313, %p314
    %p317 = scmp.ne.s32.totalorder %s302, %s316
    %p318 = scmp.eq.s32.totalorder %s77, 0
    %p319 = por %p317, %p318
    %s321 = sadd.s32 %s320, 1
    %p324 = scmp.eq.s32.totalorder %s71, 1
    %p325 = scmp.ne.s32.totalorder %s320, %s322
    %p326 = scmp.eq.s32.totalorder %s71, 0
    %p327 = por %p325, %p326
    %p328 = scmp.ne.s32.totalorder %s320, %s322
    %p329 = scmp.eq.s32.totalorder %s76, 1
    %p330 = por %p328, %p329
    %p331 = scmp.ne.s32.totalorder %s322, %s323
    %p332 = scmp.eq.s32.totalorder %s76, 0
    %p333 = por %p331, %p332
    %p334 = scmp.ne.s32.totalorder %s322, %s323
    %p335 = scmp.eq.s32.totalorder %s77, 1
    %p336 = por %p334, %p335
    %p338 = scmp.ne.s32.totalorder %s323, %s337
    %p339 = scmp.eq.s32.totalorder %s77, 0
    %p340 = por %p338, %p339
    %s342 = sadd.s32 %s341, 1
    %p345 = scmp.eq.s32.totalorder %s71, 1
    %p346 = scmp.ne.s32.totalorder %s341, %s343
    %p347 = scmp.eq.s32.totalorder %s71, 0
    %p348 = por %p346, %p347
    %p349 = scmp.ne.s32.totalorder %s341, %s343
    %p350 = scmp.eq.s32.totalorder %s76, 1
    %p351 = por %p349, %p350
    %p352 = scmp.ne.s32.totalorder %s343, %s344
    %p353 = scmp.eq.s32.totalorder %s76, 0
    %p354 = por %p352, %p353
    %p355 = scmp.ne.s32.totalorder %s343, %s344
    %p356 = scmp.eq.s32.totalorder %s77, 1
    %p357 = por %p355, %p356
    %p359 = scmp.ne.s32.totalorder %s344, %s358
    %p360 = scmp.eq.s32.totalorder %s77, 0
    %p361 = por %p359, %p360
    %s363 = sadd.s32 %s362, 1
    %p366 = scmp.eq.s32.totalorder %s71, 1
    %p367 = scmp.ne.s32.totalorder %s362, %s364
    %p368 = scmp.eq.s32.totalorder %s71, 0
    %p369 = por %p367, %p368
    %p370 = scmp.ne.s32.totalorder %s362, %s364
    %p371 = scmp.eq.s32.totalorder %s76, 1
    %p372 = por %p370, %p371
    %p373 = scmp.ne.s32.totalorder %s364, %s365
    %p374 = scmp.eq.s32.totalorder %s76, 0
    %p375 = por %p373, %p374
    %p376 = scmp.ne.s32.totalorder %s364, %s365
    %p377 = scmp.eq.s32.totalorder %s77, 1
    %p378 = por %p376, %p377
    %p380 = scmp.ne.s32.totalorder %s365, %s379
    %p381 = scmp.eq.s32.totalorder %s77, 0
    %p382 = por %p380, %p381
    %s384 = sadd.s32 %s383, 1
    %p387 = scmp.eq.s32.totalorder %s71, 1
    %p388 = scmp.ne.s32.totalorder %s383, %s385
    %p389 = scmp.eq.s32.totalorder %s71, 0
    %p390 = por %p388, %p389
    %p391 = scmp.ne.s32.totalorder %s383, %s385
    %p392 = scmp.eq.s32.totalorder %s76, 1
    %p393 = por %p391, %p392
    %p394 = scmp.ne.s32.totalorder %s385, %s386
    %p395 = scmp.eq.s32.totalorder %s76, 0
    %p396 = por %p394, %p395
    %p397 = scmp.ne.s32.totalorder %s385, %s386
    %p398 = scmp.eq.s32.totalorder %s77, 1
    %p399 = por %p397, %p398
    %p401 = scmp.ne.s32.totalorder %s386, %s400
    %p402 = scmp.eq.s32.totalorder %s77, 0
    %p403 = por %p401, %p402
    %s405 = sadd.s32 %s404, 1
    %p408 = scmp.eq.s32.totalorder %s71, 1
    %p409 = scmp.ne.s32.totalorder %s404, %s406
    %p410 = scmp.eq.s32.totalorder %s71, 0
    %p411 = por %p409, %p410
    %p412 = scmp.ne.s32.totalorder %s404, %s406
    %p413 = scmp.eq.s32.totalorder %s76, 1
    %p414 = por %p412, %p413
    %p415 = scmp.ne.s32.totalorder %s406, %s407
    %p416 = scmp.eq.s32.totalorder %s76, 0
    %p417 = por %p415, %p416
    %p418 = scmp.ne.s32.totalorder %s406, %s407
    %p419 = scmp.eq.s32.totalorder %s77, 1
    %p420 = por %p418, %p419
    %p422 = scmp.ne.s32.totalorder %s407, %s421
    %p423 = scmp.eq.s32.totalorder %s77, 0
    %p424 = por %p422, %p423
    %s426 = sadd.s32 %s425, 1
    %p429 = scmp.eq.s32.totalorder %s71, 1
    %p430 = scmp.ne.s32.totalorder %s425, %s427
    %p431 = scmp.eq.s32.totalorder %s71, 0
    %p432 = por %p430, %p431
    %p433 = scmp.ne.s32.totalorder %s425, %s427
    %p434 = scmp.eq.s32.totalorder %s76, 1
    %p435 = por %p433, %p434
    %p436 = scmp.ne.s32.totalorder %s427, %s428
    %p437 = scmp.eq.s32.totalorder %s76, 0
    %p438 = por %p436, %p437
    %p439 = scmp.ne.s32.totalorder %s427, %s428
    %p440 = scmp.eq.s32.totalorder %s77, 1
    %p441 = por %p439, %p440
    %p443 = scmp.ne.s32.totalorder %s428, %s442
    %p444 = scmp.eq.s32.totalorder %s77, 0
    %p445 = por %p443, %p444
    %s447 = sadd.s32 %s446, 1
    %p450 = scmp.eq.s32.totalorder %s71, 1
    %p451 = scmp.ne.s32.totalorder %s446, %s448
    %p452 = scmp.eq.s32.totalorder %s71, 0
    %p453 = por %p451, %p452
    %p454 = scmp.ne.s32.totalorder %s446, %s448
    %p455 = scmp.eq.s32.totalorder %s76, 1
    %p456 = por %p454, %p455
    %p457 = scmp.ne.s32.totalorder %s448, %s449
    %p458 = scmp.eq.s32.totalorder %s76, 0
    %p459 = por %p457, %p458
    %p460 = scmp.ne.s32.totalorder %s448, %s449
    %p461 = scmp.eq.s32.totalorder %s77, 1
    %p462 = por %p460, %p461
    %p464 = scmp.ne.s32.totalorder %s449, %s463
    %p465 = scmp.eq.s32.totalorder %s77, 0
    %p466 = por %p464, %p465
    %s468 = sadd.s32 %s467, 1
    %p471 = scmp.eq.s32.totalorder %s71, 1
    %p472 = scmp.ne.s32.totalorder %s467, %s469
    %p473 = scmp.eq.s32.totalorder %s71, 0
    %p474 = por %p472, %p473
    %p475 = scmp.ne.s32.totalorder %s467, %s469
    %p476 = scmp.eq.s32.totalorder %s76, 1
    %p477 = por %p475, %p476
    %p478 = scmp.ne.s32.totalorder %s469, %s470
    %p479 = scmp.eq.s32.totalorder %s76, 0
    %p480 = por %p478, %p479
    %p481 = scmp.ne.s32.totalorder %s469, %s470
    %p482 = scmp.eq.s32.totalorder %s77, 1
    %p483 = por %p481, %p482
    %p485 = scmp.ne.s32.totalorder %s470, %s484
    %p486 = scmp.eq.s32.totalorder %s77, 0
    %p487 = por %p485, %p486
    %s489 = sadd.s32 %s488, 1
    %p492 = scmp.eq.s32.totalorder %s71, 1
    %p493 = scmp.ne.s32.totalorder %s488, %s490
    %p494 = scmp.eq.s32.totalorder %s71, 0
    %p495 = por %p493, %p494
    %p496 = scmp.ne.s32.totalorder %s488, %s490
    %p497 = scmp.eq.s32.totalorder %s76, 1
    %p498 = por %p496, %p497
    %p499 = scmp.ne.s32.totalorder %s490, %s491
    %p500 = scmp.eq.s32.totalorder %s76, 0
    %p501 = por %p499, %p500
    %p502 = scmp.ne.s32.totalorder %s490, %s491
    %p503 = scmp.eq.s32.totalorder %s77, 1
    %p504 = por %p502, %p503
    %p506 = scmp.ne.s32.totalorder %s491, %s505
    %p507 = scmp.eq.s32.totalorder %s77, 0
    %p508 = por %p506, %p507
    %s510 = sadd.s32 %s509, 1
    %p513 = scmp.eq.s32.totalorder %s71, 1
    %p514 = scmp.ne.s32.totalorder %s509, %s511
    %p515 = scmp.eq.s32.totalorder %s71, 0
    %p516 = por %p514, %p515
    %p517 = scmp.ne.s32.totalorder %s509, %s511
    %p518 = scmp.eq.s32.totalorder %s76, 1
    %p519 = por %p517, %p518
    %p520 = scmp.ne.s32.totalorder %s511, %s512
    %p521 = scmp.eq.s32.totalorder %s76, 0
    %p522 = por %p520, %p521
    %p523 = scmp.ne.s32.totalorder %s511, %s512
    %p524 = scmp.eq.s32.totalorder %s77, 1
    %p525 = por %p523, %p524
    %p527 = scmp.ne.s32.totalorder %s512, %s526
    %p528 = scmp.eq.s32.totalorder %s77, 0
    %p529 = por %p527, %p528
    %s531 = sadd.s32 %s530, 1
    %p534 = scmp.eq.s32.totalorder %s71, 1
    %p535 = scmp.ne.s32.totalorder %s530, %s532
    %p536 = scmp.eq.s32.totalorder %s71, 0
    %p537 = por %p535, %p536
    %p538 = scmp.ne.s32.totalorder %s530, %s532
    %p539 = scmp.eq.s32.totalorder %s76, 1
    %p540 = por %p538, %p539
    %p541 = scmp.ne.s32.totalorder %s532, %s533
    %p542 = scmp.eq.s32.totalorder %s76, 0
    %p543 = por %p541, %p542
    %p544 = scmp.ne.s32.totalorder %s532, %s533
    %p545 = scmp.eq.s32.totalorder %s77, 1
    %p546 = por %p544, %p545
    %p548 = scmp.ne.s32.totalorder %s533, %s547
    %p549 = scmp.eq.s32.totalorder %s77, 0
    %p550 = por %p548, %p549
    %s552 = sadd.s32 %s551, 1
    %p555 = scmp.eq.s32.totalorder %s71, 1
    %p556 = scmp.ne.s32.totalorder %s551, %s553
    %p557 = scmp.eq.s32.totalorder %s71, 0
    %p558 = por %p556, %p557
    %p559 = scmp.ne.s32.totalorder %s551, %s553
    %p560 = scmp.eq.s32.totalorder %s76, 1
    %p561 = por %p559, %p560
    %p562 = scmp.ne.s32.totalorder %s553, %s554
    %p563 = scmp.eq.s32.totalorder %s76, 0
    %p564 = por %p562, %p563
    %p565 = scmp.ne.s32.totalorder %s553, %s554
    %p566 = scmp.eq.s32.totalorder %s77, 1
    %p567 = por %p565, %p566
    %p569 = scmp.ne.s32.totalorder %s554, %s568
    %p570 = scmp.eq.s32.totalorder %s77, 0
    %p571 = por %p569, %p570
    %s573 = sadd.s32 %s572, 1
    %p576 = scmp.eq.s32.totalorder %s71, 1
    %p577 = scmp.ne.s32.totalorder %s572, %s574
    %p578 = scmp.eq.s32.totalorder %s71, 0
    %p579 = por %p577, %p578
    %p580 = scmp.ne.s32.totalorder %s572, %s574
    %p581 = scmp.eq.s32.totalorder %s76, 1
    %p582 = por %p580, %p581
    %p583 = scmp.ne.s32.totalorder %s574, %s575
    %p584 = scmp.eq.s32.totalorder %s76, 0
    %p585 = por %p583, %p584
    %p586 = scmp.ne.s32.totalorder %s574, %s575
    %p587 = scmp.eq.s32.totalorder %s77, 1
    %p588 = por %p586, %p587
    %p590 = scmp.ne.s32.totalorder %s575, %s589
    %p591 = scmp.eq.s32.totalorder %s77, 0
    %p592 = por %p590, %p591
    %s594 = sadd.s32 %s593, 1
    %p597 = scmp.eq.s32.totalorder %s71, 1
    %p598 = scmp.ne.s32.totalorder %s593, %s595
    %p599 = scmp.eq.s32.totalorder %s71, 0
    %p600 = por %p598, %p599
    %p601 = scmp.ne.s32.totalorder %s593, %s595
    %p602 = scmp.eq.s32.totalorder %s76, 1
    %p603 = por %p601, %p602
    %p604 = scmp.ne.s32.totalorder %s595, %s596
    %p605 = scmp.eq.s32.totalorder %s76, 0
    %p606 = por %p604, %p605
    %p607 = scmp.ne.s32.totalorder %s595, %s596
    %p608 = scmp.eq.s32.totalorder %s77, 1
    %p609 = por %p607, %p608
    %p611 = scmp.ne.s32.totalorder %s596, %s610
    %p612 = scmp.eq.s32.totalorder %s77, 0
    %p613 = por %p611, %p612
    %s615 = sadd.s32 %s614, 1
    %p618 = scmp.eq.s32.totalorder %s71, 1
    %p619 = scmp.ne.s32.totalorder %s614, %s616
    %p620 = scmp.eq.s32.totalorder %s71, 0
    %p621 = por %p619, %p620
    %p622 = scmp.ne.s32.totalorder %s614, %s616
    %p623 = scmp.eq.s32.totalorder %s76, 1
    %p624 = por %p622, %p623
    %p625 = scmp.ne.s32.totalorder %s616, %s617
    %p626 = scmp.eq.s32.totalorder %s76, 0
    %p627 = por %p625, %p626
    %p628 = scmp.ne.s32.totalorder %s616, %s617
    %p629 = scmp.eq.s32.totalorder %s77, 1
    %p630 = por %p628, %p629
    %p632 = scmp.ne.s32.totalorder %s617, %s631
    %p633 = scmp.eq.s32.totalorder %s77, 0
    %p634 = por %p632, %p633
    %s636 = sadd.s32 %s635, 1
    %p639 = scmp.eq.s32.totalorder %s71, 1
    %p640 = scmp.ne.s32.totalorder %s635, %s637
    %p641 = scmp.eq.s32.totalorder %s71, 0
    %p642 = por %p640, %p641
    %p643 = scmp.ne.s32.totalorder %s635, %s637
    %p644 = scmp.eq.s32.totalorder %s76, 1
    %p645 = por %p643, %p644
    %p646 = scmp.ne.s32.totalorder %s637, %s638
    %p647 = scmp.eq.s32.totalorder %s76, 0
    %p648 = por %p646, %p647
    %p649 = scmp.ne.s32.totalorder %s637, %s638
    %p650 = scmp.eq.s32.totalorder %s77, 1
    %p651 = por %p649, %p650
    %p653 = scmp.ne.s32.totalorder %s638, %s652
    %p654 = scmp.eq.s32.totalorder %s77, 0
    %p655 = por %p653, %p654
    %s657 = sadd.s32 %s656, 1
    %p660 = scmp.eq.s32.totalorder %s71, 1
    %p661 = scmp.ne.s32.totalorder %s656, %s658
    %p662 = scmp.eq.s32.totalorder %s71, 0
    %p663 = por %p661, %p662
    %p664 = scmp.ne.s32.totalorder %s656, %s658
    %p665 = scmp.eq.s32.totalorder %s76, 1
    %p666 = por %p664, %p665
    %p667 = scmp.ne.s32.totalorder %s658, %s659
    %p668 = scmp.eq.s32.totalorder %s76, 0
    %p669 = por %p667, %p668
    %p670 = scmp.ne.s32.totalorder %s658, %s659
    %p671 = scmp.eq.s32.totalorder %s77, 1
    %p672 = por %p670, %p671
    %p674 = scmp.ne.s32.totalorder %s659, %s673
    %p675 = scmp.eq.s32.totalorder %s77, 0
    %p676 = por %p674, %p675
    %s678 = sadd.s32 %s677, 1
    %p681 = scmp.eq.s32.totalorder %s71, 1
    %p682 = scmp.ne.s32.totalorder %s677, %s679
    %p683 = scmp.eq.s32.totalorder %s71, 0
    %p684 = por %p682, %p683
    %p685 = scmp.ne.s32.totalorder %s677, %s679
    %p686 = scmp.eq.s32.totalorder %s76, 1
    %p687 = por %p685, %p686
    %p688 = scmp.ne.s32.totalorder %s679, %s680
    %p689 = scmp.eq.s32.totalorder %s76, 0
    %p690 = por %p688, %p689
    %p691 = scmp.ne.s32.totalorder %s679, %s680
    %p692 = scmp.eq.s32.totalorder %s77, 1
    %p693 = por %p691, %p692
    %p695 = scmp.ne.s32.totalorder %s680, %s694
    %p696 = scmp.eq.s32.totalorder %s77, 0
    %p697 = por %p695, %p696
    %s699 = sadd.s32 %s698, 1
    %p702 = scmp.eq.s32.totalorder %s71, 1
    %p703 = scmp.ne.s32.totalorder %s698, %s700
    %p704 = scmp.eq.s32.totalorder %s71, 0
    %p705 = por %p703, %p704
    %p706 = scmp.ne.s32.totalorder %s698, %s700
    %p707 = scmp.eq.s32.totalorder %s76, 1
    %p708 = por %p706, %p707
    %p709 = scmp.ne.s32.totalorder %s700, %s701
    %p710 = scmp.eq.s32.totalorder %s76, 0
    %p711 = por %p709, %p710
    %p712 = scmp.ne.s32.totalorder %s700, %s701
    %p713 = scmp.eq.s32.totalorder %s77, 1
    %p714 = por %p712, %p713
    %p716 = scmp.ne.s32.totalorder %s701, %s715
    %p717 = scmp.eq.s32.totalorder %s77, 0
    %p718 = por %p716, %p717
    %s720 = sadd.s32 %s719, 1
    %p723 = scmp.eq.s32.totalorder %s71, 1
    %p724 = scmp.ne.s32.totalorder %s719, %s721
    %p725 = scmp.eq.s32.totalorder %s71, 0
    %p726 = por %p724, %p725
    %p727 = scmp.ne.s32.totalorder %s719, %s721
    %p728 = scmp.eq.s32.totalorder %s76, 1
    %p729 = por %p727, %p728
    %p730 = scmp.ne.s32.totalorder %s721, %s722
    %p731 = scmp.eq.s32.totalorder %s76, 0
    %p732 = por %p730, %p731
    %p733 = scmp.ne.s32.totalorder %s721, %s722
    %p734 = scmp.eq.s32.totalorder %s77, 1
    %p735 = por %p733, %p734
    %p737 = scmp.ne.s32.totalorder %s722, %s736
    %p738 = scmp.eq.s32.totalorder %s77, 0
    %p739 = por %p737, %p738
    %s741 = sadd.s32 %s740, 1
    %p744 = scmp.eq.s32.totalorder %s71, 1
    %p745 = scmp.ne.s32.totalorder %s740, %s742
    %p746 = scmp.eq.s32.totalorder %s71, 0
    %p747 = por %p745, %p746
    %p748 = scmp.ne.s32.totalorder %s740, %s742
    %p749 = scmp.eq.s32.totalorder %s76, 1
    %p750 = por %p748, %p749
    %p751 = scmp.ne.s32.totalorder %s742, %s743
    %p752 = scmp.eq.s32.totalorder %s76, 0
    %p753 = por %p751, %p752
    %p754 = scmp.ne.s32.totalorder %s742, %s743
    %p755 = scmp.eq.s32.totalorder %s77, 1
    %p756 = por %p754, %p755
    %p758 = scmp.ne.s32.totalorder %s743, %s757
    %p759 = scmp.eq.s32.totalorder %s77, 0
    %p760 = por %p758, %p759
    %s761 = ssub.s32 %s71, %s78
    %p762 = scmp.eq.s32.totalorder %s761, 0
    %s764 = sadd.s32 %s763, 1
    %s765 = scalar_select %p762, %s763, %s764
    %p768 = pneg %p762
    %p769 = scmp.eq.s32.totalorder %s71, 1
    %p770 = por %p768, %p769
    %p771 = scmp.ne.s32.totalorder %s763, %s766
    %p772 = scmp.eq.s32.totalorder %s71, 0
    %p773 = por %p771, %p772
    %p774 = scmp.ne.s32.totalorder %s763, %s766
    %p775 = scmp.eq.s32.totalorder %s76, 1
    %p776 = por %p774, %p775
    %p777 = scmp.ne.s32.totalorder %s766, %s767
    %p778 = scmp.eq.s32.totalorder %s76, 0
    %p779 = por %p777, %p778
    %p780 = scmp.ne.s32.totalorder %s766, %s767
    %p781 = scmp.eq.s32.totalorder %s77, 1
    %p782 = por %p780, %p781
    %p784 = scmp.ne.s32.totalorder %s767, %s783
    %p785 = scmp.eq.s32.totalorder %s77, 0
    %p786 = por %p784, %p785
    %p787 = scmp.le.s32.totalorder 1, %s71
    %p788 = scmp.lt.s32.totalorder %s71, 3
    %p789 = pnand %p787, %p788
    %p790 = pneg %p789
    // Predicated region
    $region9: #{tpu_custom_call.1} parent=5 // pred_check
      _
    $region10: #{tpu_custom_call.1} parent=5 // pred_check_branch
      %792 = sbr.rel (%p789) target = $region12
    $region11: #{tpu_custom_call.1} parent=5 // pred_region
      %s793 = ssub.s32 %s71, 1
      // Predicated region
      $region13: #{tpu_custom_call.1} parent=11 // pred_check
        %p794 = pneg %p118
      $region14: #{tpu_custom_call.1} parent=11 // pred_check_branch
        %796 = sbr.rel (%p794) target = $region16
      $region15: #{tpu_custom_call.1} parent=11 // pred_region
        _
      $region16: #{tpu_custom_call.1} parent=11 // pred_fallthru
        _
      // Predicated region
      $region17: #{tpu_custom_call.1} parent=11 // pred_check
        %p797 = pneg %p139
      $region18: #{tpu_custom_call.1} parent=11 // pred_check_branch
        %799 = sbr.rel (%p797) target = $region20
      $region19: #{tpu_custom_call.1} parent=11 // pred_region
        _
      $region20: #{tpu_custom_call.1} parent=11 // pred_fallthru
        _
      // Predicated region
      $region21: #{tpu_custom_call.1} parent=11 // pred_check
        %p800 = pneg %p186
      $region22: #{tpu_custom_call.1} parent=11 // pred_check_branch
        %802 = sbr.rel (%p800) target = $region24
      $region23: #{tpu_custom_call.1} parent=11 // pred_region
        _
      $region24: #{tpu_custom_call.1} parent=11 // pred_fallthru
        _
      // Predicated region
      $region25: #{tpu_custom_call.1} parent=11 // pred_check
        %p803 = pneg %p207
      $region26: #{tpu_custom_call.1} parent=11 // pred_check_branch
        %805 = sbr.rel (%p803) target = $region28
      $region27: #{tpu_custom_call.1} parent=11 // pred_region
        _
      $region28: #{tpu_custom_call.1} parent=11 // pred_fallthru
        _
      // Predicated region
      $region29: #{tpu_custom_call.1} parent=11 // pred_check
        %p806 = pneg %p228
      $region30: #{tpu_custom_call.1} parent=11 // pred_check_branch
        %808 = sbr.rel (%p806) target = $region32
      $region31: #{tpu_custom_call.1} parent=11 // pred_region
        _
      $region32: #{tpu_custom_call.1} parent=11 // pred_fallthru
        _
      // Predicated region
      $region33: #{tpu_custom_call.1} parent=11 // pred_check
        %p809 = pneg %p249
      $region34: #{tpu_custom_call.1} parent=11 // pred_check_branch
        %811 = sbr.rel (%p809) target = $region36
      $region35: #{tpu_custom_call.1} parent=11 // pred_region
        _
      $region36: #{tpu_custom_call.1} parent=11 // pred_fallthru
        _
      // Predicated region
      $region37: #{tpu_custom_call.1} parent=11 // pred_check
        %p812 = pneg %p270
      $region38: #{tpu_custom_call.1} parent=11 // pred_check_branch
        %814 = sbr.rel (%p812) target = $region40
      $region39: #{tpu_custom_call.1} parent=11 // pred_region
        _
      $region40: #{tpu_custom_call.1} parent=11 // pred_fallthru
        _
      // Predicated region
      $region41: #{tpu_custom_call.1} parent=11 // pred_check
        %p815 = pneg %p291
      $region42: #{tpu_custom_call.1} parent=11 // pred_check_branch
        %817 = sbr.rel (%p815) target = $region44
      $region43: #{tpu_custom_call.1} parent=11 // pred_region
        _
      $region44: #{tpu_custom_call.1} parent=11 // pred_fallthru
        _
      // Predicated region
      $region45: #{tpu_custom_call.1} parent=11 // pred_check
        %p818 = pneg %p312
      $region46: #{tpu_custom_call.1} parent=11 // pred_check_branch
        %820 = sbr.rel (%p818) target = $region48
      $region47: #{tpu_custom_call.1} parent=11 // pred_region
        _
      $region48: #{tpu_custom_call.1} parent=11 // pred_fallthru
        _
      // Predicated region
      $region49: #{tpu_custom_call.1} parent=11 // pred_check
        %p821 = pneg %p333
      $region50: #{tpu_custom_call.1} parent=11 // pred_check_branch
        %823 = sbr.rel (%p821) target = $region52
      $region51: #{tpu_custom_call.1} parent=11 // pred_region
        _
      $region52: #{tpu_custom_call.1} parent=11 // pred_fallthru
        _
      // Predicated region
      $region53: #{tpu_custom_call.1} parent=11 // pred_check
        %p824 = pneg %p354
      $region54: #{tpu_custom_call.1} parent=11 // pred_check_branch
        %826 = sbr.rel (%p824) target = $region56
      $region55: #{tpu_custom_call.1} parent=11 // pred_region
        _
      $region56: #{tpu_custom_call.1} parent=11 // pred_fallthru
        _
      // Predicated region
      $region57: #{tpu_custom_call.1} parent=11 // pred_check
        %p827 = pneg %p375
      $region58: #{tpu_custom_call.1} parent=11 // pred_check_branch
        %829 = sbr.rel (%p827) target = $region60
      $region59: #{tpu_custom_call.1} parent=11 // pred_region
        _
      $region60: #{tpu_custom_call.1} parent=11 // pred_fallthru
        _
      // Predicated region
      $region61: #{tpu_custom_call.1} parent=11 // pred_check
        %p830 = pneg %p396
      $region62: #{tpu_custom_call.1} parent=11 // pred_check_branch
        %832 = sbr.rel (%p830) target = $region64
      $region63: #{tpu_custom_call.1} parent=11 // pred_region
        _
      $region64: #{tpu_custom_call.1} parent=11 // pred_fallthru
        _
      // Predicated region
      $region65: #{tpu_custom_call.1} parent=11 // pred_check
        %p833 = pneg %p417
      $region66: #{tpu_custom_call.1} parent=11 // pred_check_branch
        %835 = sbr.rel (%p833) target = $region68
      $region67: #{tpu_custom_call.1} parent=11 // pred_region
        _
      $region68: #{tpu_custom_call.1} parent=11 // pred_fallthru
        _
      // Predicated region
      $region69: #{tpu_custom_call.1} parent=11 // pred_check
        %p836 = pneg %p438
      $region70: #{tpu_custom_call.1} parent=11 // pred_check_branch
        %838 = sbr.rel (%p836) target = $region72
      $region71: #{tpu_custom_call.1} parent=11 // pred_region
        _
      $region72: #{tpu_custom_call.1} parent=11 // pred_fallthru
        _
      // Predicated region
      $region73: #{tpu_custom_call.1} parent=11 // pred_check
        %p839 = pneg %p459
      $region74: #{tpu_custom_call.1} parent=11 // pred_check_branch
        %841 = sbr.rel (%p839) target = $region76
      $region75: #{tpu_custom_call.1} parent=11 // pred_region
        _
      $region76: #{tpu_custom_call.1} parent=11 // pred_fallthru
        _
      // Predicated region
      $region77: #{tpu_custom_call.1} parent=11 // pred_check
        %p842 = pneg %p480
      $region78: #{tpu_custom_call.1} parent=11 // pred_check_branch
        %844 = sbr.rel (%p842) target = $region80
      $region79: #{tpu_custom_call.1} parent=11 // pred_region
        _
      $region80: #{tpu_custom_call.1} parent=11 // pred_fallthru
        _
      // Predicated region
      $region81: #{tpu_custom_call.1} parent=11 // pred_check
        %p845 = pneg %p501
      $region82: #{tpu_custom_call.1} parent=11 // pred_check_branch
        %847 = sbr.rel (%p845) target = $region84
      $region83: #{tpu_custom_call.1} parent=11 // pred_region
        _
      $region84: #{tpu_custom_call.1} parent=11 // pred_fallthru
        _
      // Predicated region
      $region85: #{tpu_custom_call.1} parent=11 // pred_check
        %p848 = pneg %p522
      $region86: #{tpu_custom_call.1} parent=11 // pred_check_branch
        %850 = sbr.rel (%p848) target = $region88
      $region87: #{tpu_custom_call.1} parent=11 // pred_region
        _
      $region88: #{tpu_custom_call.1} parent=11 // pred_fallthru
        _
      // Predicated region
      $region89: #{tpu_custom_call.1} parent=11 // pred_check
        %p851 = pneg %p543
      $region90: #{tpu_custom_call.1} parent=11 // pred_check_branch
        %853 = sbr.rel (%p851) target = $region92
      $region91: #{tpu_custom_call.1} parent=11 // pred_region
        _
      $region92: #{tpu_custom_call.1} parent=11 // pred_fallthru
        _
      // Predicated region
      $region93: #{tpu_custom_call.1} parent=11 // pred_check
        %p854 = pneg %p564
      $region94: #{tpu_custom_call.1} parent=11 // pred_check_branch
        %856 = sbr.rel (%p854) target = $region96
      $region95: #{tpu_custom_call.1} parent=11 // pred_region
        _
      $region96: #{tpu_custom_call.1} parent=11 // pred_fallthru
        _
      // Predicated region
      $region97: #{tpu_custom_call.1} parent=11 // pred_check
        %p857 = pneg %p585
      $region98: #{tpu_custom_call.1} parent=11 // pred_check_branch
        %859 = sbr.rel (%p857) target = $region100
      $region99: #{tpu_custom_call.1} parent=11 // pred_region
        _
      $region100: #{tpu_custom_call.1} parent=11 // pred_fallthru
        _
      // Predicated region
      $region101: #{tpu_custom_call.1} parent=11 // pred_check
        %p860 = pneg %p606
      $region102: #{tpu_custom_call.1} parent=11 // pred_check_branch
        %862 = sbr.rel (%p860) target = $region104
      $region103: #{tpu_custom_call.1} parent=11 // pred_region
        _
      $region104: #{tpu_custom_call.1} parent=11 // pred_fallthru
        _
      // Predicated region
      $region105: #{tpu_custom_call.1} parent=11 // pred_check
        %p863 = pneg %p627
      $region106: #{tpu_custom_call.1} parent=11 // pred_check_branch
        %865 = sbr.rel (%p863) target = $region108
      $region107: #{tpu_custom_call.1} parent=11 // pred_region
        _
      $region108: #{tpu_custom_call.1} parent=11 // pred_fallthru
        _
      // Predicated region
      $region109: #{tpu_custom_call.1} parent=11 // pred_check
        %p866 = pneg %p648
      $region110: #{tpu_custom_call.1} parent=11 // pred_check_branch
        %868 = sbr.rel (%p866) target = $region112
      $region111: #{tpu_custom_call.1} parent=11 // pred_region
        _
      $region112: #{tpu_custom_call.1} parent=11 // pred_fallthru
        _
      // Predicated region
      $region113: #{tpu_custom_call.1} parent=11 // pred_check
        %p869 = pneg %p669
      $region114: #{tpu_custom_call.1} parent=11 // pred_check_branch
        %871 = sbr.rel (%p869) target = $region116
      $region115: #{tpu_custom_call.1} parent=11 // pred_region
        _
      $region116: #{tpu_custom_call.1} parent=11 // pred_fallthru
        _
      // Predicated region
      $region117: #{tpu_custom_call.1} parent=11 // pred_check
        %p872 = pneg %p690
      $region118: #{tpu_custom_call.1} parent=11 // pred_check_branch
        %874 = sbr.rel (%p872) target = $region120
      $region119: #{tpu_custom_call.1} parent=11 // pred_region
        _
      $region120: #{tpu_custom_call.1} parent=11 // pred_fallthru
        _
      // Predicated region
      $region121: #{tpu_custom_call.1} parent=11 // pred_check
        %p875 = pneg %p711
      $region122: #{tpu_custom_call.1} parent=11 // pred_check_branch
        %877 = sbr.rel (%p875) target = $region124
      $region123: #{tpu_custom_call.1} parent=11 // pred_region
        _
      $region124: #{tpu_custom_call.1} parent=11 // pred_fallthru
        _
      // Predicated region
      $region125: #{tpu_custom_call.1} parent=11 // pred_check
        %p878 = pneg %p732
      $region126: #{tpu_custom_call.1} parent=11 // pred_check_branch
        %880 = sbr.rel (%p878) target = $region128
      $region127: #{tpu_custom_call.1} parent=11 // pred_region
        _
      $region128: #{tpu_custom_call.1} parent=11 // pred_fallthru
        _
      // Predicated region
      $region129: #{tpu_custom_call.1} parent=11 // pred_check
        %p881 = pneg %p753
      $region130: #{tpu_custom_call.1} parent=11 // pred_check_branch
        %883 = sbr.rel (%p881) target = $region132
      $region131: #{tpu_custom_call.1} parent=11 // pred_region
        _
      $region132: #{tpu_custom_call.1} parent=11 // pred_fallthru
        _
    $region12: #{tpu_custom_call.1} parent=5 // pred_fallthru
      _
    %p884 = scmp.lt.s32.totalorder %s71, 2
    // Predicated region
    $region133: #{tpu_custom_call.1} parent=5 // pred_check
      %p885 = pneg %p884
    $region134: #{tpu_custom_call.1} parent=5 // pred_check_branch
      %887 = sbr.rel (%p885) target = $region136
    $region135: #{tpu_custom_call.1} parent=5 // pred_region
      // Predicated region
      $region137: #{tpu_custom_call.1} parent=135 // pred_check
        %p888 = pneg %p91
      $region138: #{tpu_custom_call.1} parent=135 // pred_check_branch
        %890 = sbr.rel (%p888) target = $region140
      $region139: #{tpu_custom_call.1} parent=135 // pred_region
        %p891 = scmp.lt.s32.totalorder %s71, 1
        %s892 = scalar_select %p891, %s71, 1
        %s893 = smul.addr %s892, 6
        %s894 = smul.addr %s893, 8
        %s895 = scalar_lea.vmem %s1, %s894
      $region140: #{tpu_custom_call.1} parent=135 // pred_fallthru
        _
      // Predicated region
      $region141: #{tpu_custom_call.1} parent=135 // pred_check
        %p896 = pneg %p159
      $region142: #{tpu_custom_call.1} parent=135 // pred_check_branch
        %898 = sbr.rel (%p896) target = $region144
      $region143: #{tpu_custom_call.1} parent=135 // pred_region
        %p899 = scmp.lt.s32.totalorder %s71, 1
        %s900 = scalar_select %p899, %s71, 1
        %s901 = smul.addr %s900, 2
        %s902 = smul.addr %s901, 8
        %s903 = scalar_lea.vmem %s7, %s902
      $region144: #{tpu_custom_call.1} parent=135 // pred_fallthru
        _
    $region136: #{tpu_custom_call.1} parent=5 // pred_fallthru
      _
    %p904 = scmp.le.s32.totalorder 1, %s71
    %p905 = scmp.lt.s32.totalorder %s71, 3
    %p906 = pnand %p904, %p905
    %p907 = pneg %p906
    // Predicated region
    $region145: #{tpu_custom_call.1} parent=5 // pred_check
      _
    $region146: #{tpu_custom_call.1} parent=5 // pred_check_branch
      %909 = sbr.rel (%p906) target = $region148
    $region147: #{tpu_custom_call.1} parent=5 // pred_region
      %s910 = ssub.s32 %s71, 1
      %p911 = scmp.lt.s32.totalorder %s76, 1
      %s912 = scalar_select %p911, %s76, 1
      %s913 = smul.addr %s912, 6
      %s914 = smul.addr %s913, 8
      %s915 = scalar_lea.vmem %s1, %s914
      %p916 = pneg %p97
      %p917 = pneg %p94
      %p918 = pneg %p118
      %p919 = pneg %p115
      %p920 = pneg %p139
      %p921 = pneg %p136
      %p922 = scmp.lt.s32.totalorder %s76, 1
      %s923 = scalar_select %p922, %s76, 1
      %s924 = smul.addr %s923, 2
      %s925 = smul.addr %s924, 8
      %s926 = scalar_lea.vmem %s7, %s925
      %p927 = pneg %p165
      %p928 = pneg %p162
      %p929 = pneg %p186
      %p930 = pneg %p183
      %p931 = pneg %p207
      %p932 = pneg %p204
      %p933 = pneg %p228
      %p934 = pneg %p225
      %p935 = pneg %p249
      %p936 = pneg %p246
      %p937 = pneg %p270
      %p938 = pneg %p267
      %p939 = pneg %p291
      %p940 = pneg %p288
      %p941 = pneg %p312
      %p942 = pneg %p309
      %p943 = pneg %p333
      %p944 = pneg %p330
      %p945 = pneg %p354
      %p946 = pneg %p351
      %p947 = pneg %p375
      %p948 = pneg %p372
      %p949 = pneg %p396
      %p950 = pneg %p393
      %p951 = pneg %p417
      %p952 = pneg %p414
      %p953 = pneg %p438
      %p954 = pneg %p435
      %p955 = pneg %p459
      %p956 = pneg %p456
      %p957 = pneg %p480
      %p958 = pneg %p477
      %p959 = pneg %p501
      %p960 = pneg %p498
      %p961 = pneg %p522
      %p962 = pneg %p519
      %p963 = pneg %p543
      %p964 = pneg %p540
      %p965 = pneg %p564
      %p966 = pneg %p561
      %p967 = pneg %p585
      %p968 = pneg %p582
      %p969 = pneg %p606
      %p970 = pneg %p603
      %p971 = pneg %p627
      %p972 = pneg %p624
      %p973 = pneg %p648
      %p974 = pneg %p645
      %p975 = pneg %p669
      %p976 = pneg %p666
      %p977 = pneg %p690
      %p978 = pneg %p687
      %p979 = pneg %p711
      %p980 = pneg %p708
      %p981 = pneg %p732
      %p982 = pneg %p729
      %p983 = pneg %p753
      %p984 = pneg %p750
      %p985 = pneg %p779
      %p986 = pneg %p776
      %p987 = scmp.lt.s32.totalorder %s76, 1
      %s988 = scalar_select %p987, %s76, 1
      %s989 = smul.addr %s988, 3
      %s990 = smul.addr %s989, 8
      %s991 = scalar_lea.vmem %s65, %s990
      %p992 = scmp.lt.s32.totalorder %s76, 1
      %s993 = scalar_select %p992, %s76, 1
      %s994 = smul.addr %s993, 6
      %s995 = smul.addr %s994, 8
      %s996 = scalar_lea.vmem %s1, %s995
      %p997 = scmp.lt.s32.totalorder %s76, 1
      %s998 = scalar_select %p997, %s76, 1
      %s999 = smul.addr %s998, 2
      %s1000 = smul.addr %s999, 8
      %s1001 = scalar_lea.vmem %s7, %s1000
      %p1002 = scmp.lt.s32.totalorder %s76, 1
      %s1003 = scalar_select %p1002, %s76, 1
      %s1004 = smul.addr %s1003, 3
      %s1005 = smul.addr %s1004, 8
      %s1006 = scalar_lea.vmem %s65, %s1005
      %v1008 = vld [vmem:[%s996] sm:$0x3f]
      %v1009 = vld [vmem:[%s996 + $0x8] sm:$0x3f]
      %v1010 = vld [vmem:[%s996 + $0x10] sm:$0x3f]
      %v1011 = vld [vmem:[%s996 + $0x18] sm:$0x3f]
      %v1012 = vld [vmem:[%s996 + $0x20] sm:$0x3f]
      %v1013 = vld [vmem:[%s996 + $0x28] sm:$0x3f]
      %v1014 = vld [vmem:[%s3] sm:$0xf]
      %v1015 = vld [vmem:[%s5] sm:$0xf]
      %v1016 = vld [vmem:[%s1001] sm:$0xff]
      %v1017 = vld [vmem:[%s1001 + $0x8] sm:$0xff]
      %v1018 = vld [vmem:[%s9] sm:$0x3f]
      %v1019 = vld [vmem:[%s9 + $0x8] sm:$0x3f]
      %v1020 = vld [vmem:[%s9 + $0x10] sm:$0x3f]
      %v1021 = vld [vmem:[%s9 + $0x18] sm:$0x3f]
      %v1022 = vld [vmem:[%s9 + $0x20] sm:$0x3f]
      %v1023 = vld [vmem:[%s9 + $0x28] sm:$0x3f]
      %v1024 = vld [vmem:[%s11] sm:$0x3f]
      %v1025 = vld [vmem:[%s11 + $0x8] sm:$0x3f]
      %v1026 = vld [vmem:[%s11 + $0x10] sm:$0x3f]
      %v1027 = vld [vmem:[%s11 + $0x18] sm:$0x3f]
      %v1028 = vld [vmem:[%s11 + $0x20] sm:$0x3f]
      %v1029 = vld [vmem:[%s11 + $0x28] sm:$0x3f]
      %vm1030 = vcmask 1045504
      %v1031 = vsel %vm1030, %v1008, 0.0
      %v1032 = vsel %vm1030, %v1009, 0.0
      %v1033 = vadd.f32 %v1031, %v1032
      %v1034 = vsel %vm1030, %v1010, 0.0
      %v1035 = vadd.f32 %v1033, %v1034
      %v1036 = vsel %vm1030, %v1011, 0.0
      %v1037 = vadd.f32 %v1035, %v1036
      %v1038 = vsel %vm1030, %v1012, 0.0
      %v1039 = vadd.f32 %v1037, %v1038
      %v1040 = vsel %vm1030, %v1013, 0.0
      %v1041 = vadd.f32 %v1039, %v1040
      %1042 = vadd.xlane.f32.xlu0 %v1041
      %v1043 = vpop.xlane.xlu0 %1042
      %v1044 = vrcp.pop 768.0
      %v1045 = vmul.f32 768.0, %v1044
      %v1046 = vsub.f32 1.0, %v1045
      %v1047 = vmul.f32 %v1044, %v1046
      %v1048 = vadd.f32 %v1044, %v1047
      %vm1049 = vweird.f32 %v1044
      %v1050 = vsel %vm1049, %v1044, %v1048
      %v1051 = vmul.f32 %v1043, %v1050
      %v1052 = vsub.f32 %v1008, %v1051
      %v1053 = vsub.f32 %v1009, %v1051
      %v1054 = vsub.f32 %v1010, %v1051
      %v1055 = vsub.f32 %v1011, %v1051
      %v1056 = vsub.f32 %v1012, %v1051
      %v1057 = vsub.f32 %v1013, %v1051
      %v1058 = vmul.f32 %v1052, %v1052
      %v1059 = vmul.f32 %v1053, %v1053
      %v1060 = vmul.f32 %v1054, %v1054
      %v1061 = vmul.f32 %v1055, %v1055
      %v1062 = vmul.f32 %v1056, %v1056
      %v1063 = vmul.f32 %v1057, %v1057
      %v1064 = vsel %vm1030, %v1058, 0.0
      %v1065 = vsel %vm1030, %v1059, 0.0
      %v1066 = vadd.f32 %v1064, %v1065
      %v1067 = vsel %vm1030, %v1060, 0.0
      %v1068 = vadd.f32 %v1066, %v1067
      %v1069 = vsel %vm1030, %v1061, 0.0
      %v1070 = vadd.f32 %v1068, %v1069
      %v1071 = vsel %vm1030, %v1062, 0.0
      %v1072 = vadd.f32 %v1070, %v1071
      %v1073 = vsel %vm1030, %v1063, 0.0
      %v1074 = vadd.f32 %v1072, %v1073
      %1075 = vadd.xlane.f32.xlu0 %v1074
      %v1076 = vpop.xlane.xlu0 %1075
      %v1077 = vmul.f32 %v1076, %v1050
      %v1078 = vadd.f32 %v1077, 1e-05
      %v1079 = vrsqrt.pop %v1078
      %v1080 = vmul.f32 %v1079, %v1078
      %v1081 = vmul.f32 %v1080, %v1079
      %v1082 = vmul.f32 0.5, %v1081
      %v1083 = vsub.f32 1.5, %v1082
      %v1084 = vmul.f32 %v1079, %v1083
      %vm1085 = vweird.f32 %v1078
      %vm1086 = vweird.f32 %v1079
      %vm1087 = vmor %vm1085, %vm1086
      %v1088 = vsel %vm1087, %v1079, %v1084
      %v1089 = vmul.f32 %v1052, %v1088
      %v1090 = vmul.f32 %v1053, %v1088
      %v1091 = vmul.f32 %v1054, %v1088
      %v1092 = vmul.f32 %v1055, %v1088
      %v1093 = vmul.f32 %v1056, %v1088
      %v1094 = vmul.f32 %v1057, %v1088
      %v1095 = vmul.f32 %v1089, %v1018
      %v1096 = vmul.f32 %v1090, %v1019
      %v1097 = vmul.f32 %v1091, %v1020
      %v1098 = vmul.f32 %v1092, %v1021
      %v1099 = vmul.f32 %v1093, %v1022
      %v1100 = vmul.f32 %v1094, %v1023
      %v1101 = vadd.f32 %v1095, %v1024
      %v1102 = vadd.f32 %v1096, %v1025
      %v1103 = vadd.f32 %v1097, %v1026
      %v1104 = vadd.f32 %v1098, %v1027
      %v1105 = vadd.f32 %v1099, %v1028
      %v1106 = vadd.f32 %v1100, %v1029
      %v1107 = vld [vmem:[%s13] sm:$0xf]
      %v1108 = vld [vmem:[%s13 + $0x4] sm:$0xf]
      %v1109 = vld [vmem:[%s13 + $0x8] sm:$0xf]
      %v1110 = vld [vmem:[%s13 + $0xc] sm:$0xf]
      %v1111 = vld [vmem:[%s13 + $0x10] sm:$0xf]
      %v1112 = vld [vmem:[%s13 + $0x14] sm:$0xf]
      %v1113 = vld [vmem:[%s13 + $0x18] sm:$0xf]
      %v1114 = vld [vmem:[%s13 + $0x1c] sm:$0xf]
      %v1115 = vld [vmem:[%s13 + $0x20] sm:$0xf]
      %v1116 = vld [vmem:[%s13 + $0x24] sm:$0xf]
      %v1117 = vld [vmem:[%s13 + $0x28] sm:$0xf]
      %v1118 = vld [vmem:[%s13 + $0x2c] sm:$0xf]
      %v1119 = vld [vmem:[%s13 + $0x30] sm:$0xf]
      %v1120 = vld [vmem:[%s13 + $0x34] sm:$0xf]
      %v1121 = vld [vmem:[%s13 + $0x38] sm:$0xf]
      %v1122 = vld [vmem:[%s13 + $0x3c] sm:$0xf]
      %v1123 = vld [vmem:[%s13 + $0x40] sm:$0xf]
      %v1124 = vld [vmem:[%s13 + $0x44] sm:$0xf]
      %v1125 = vld [vmem:[%s13 + $0x48] sm:$0xf]
      %v1126 = vld [vmem:[%s13 + $0x4c] sm:$0xf]
      %v1127 = vld [vmem:[%s13 + $0x50] sm:$0xf]
      %v1128 = vld [vmem:[%s13 + $0x54] sm:$0xf]
      %v1129 = vld [vmem:[%s13 + $0x58] sm:$0xf]
      %v1130 = vld [vmem:[%s13 + $0x5c] sm:$0xf]
      %v1131 = vld [vmem:[%s13 + $0x60] sm:$0xf]
      %v1132 = vld [vmem:[%s13 + $0x64] sm:$0xf]
      %v1133 = vld [vmem:[%s13 + $0x68] sm:$0xf]
      %v1134 = vld [vmem:[%s13 + $0x6c] sm:$0xf]
      %v1135 = vld [vmem:[%s13 + $0x70] sm:$0xf]
      %v1136 = vld [vmem:[%s13 + $0x74] sm:$0xf]
      %v1137 = vld [vmem:[%s13 + $0x78] sm:$0xf]
      %v1138 = vld [vmem:[%s13 + $0x7c] sm:$0xf]
      %v1139 = vld [vmem:[%s13 + $0x80] sm:$0xf]
      %v1140 = vld [vmem:[%s13 + $0x84] sm:$0xf]
      %v1141 = vld [vmem:[%s13 + $0x88] sm:$0xf]
      %v1142 = vld [vmem:[%s13 + $0x8c] sm:$0xf]
      %v1143 = vld [vmem:[%s13 + $0x90] sm:$0xf]
      %v1144 = vld [vmem:[%s13 + $0x94] sm:$0xf]
      %v1145 = vld [vmem:[%s13 + $0x98] sm:$0xf]
      %v1146 = vld [vmem:[%s13 + $0x9c] sm:$0xf]
      %v1147 = vld [vmem:[%s13 + $0xa0] sm:$0xf]
      %v1148 = vld [vmem:[%s13 + $0xa4] sm:$0xf]
      %v1149 = vld [vmem:[%s13 + $0xa8] sm:$0xf]
      %v1150 = vld [vmem:[%s13 + $0xac] sm:$0xf]
      %v1151 = vld [vmem:[%s13 + $0xb0] sm:$0xf]
      %v1152 = vld [vmem:[%s13 + $0xb4] sm:$0xf]
      %v1153 = vld [vmem:[%s13 + $0xb8] sm:$0xf]
      %v1154 = vld [vmem:[%s13 + $0xbc] sm:$0xf]
      %v1155 = vld [vmem:[%s13 + $0xc0] sm:$0xf]
      %v1156 = vld [vmem:[%s13 + $0xc4] sm:$0xf]
      %v1157 = vld [vmem:[%s13 + $0xc8] sm:$0xf]
      %v1158 = vld [vmem:[%s13 + $0xcc] sm:$0xf]
      %v1159 = vld [vmem:[%s13 + $0xd0] sm:$0xf]
      %v1160 = vld [vmem:[%s13 + $0xd4] sm:$0xf]
      %v1161 = vld [vmem:[%s13 + $0xd8] sm:$0xf]
      %v1162 = vld [vmem:[%s13 + $0xdc] sm:$0xf]
      %v1163 = vld [vmem:[%s13 + $0xe0] sm:$0xf]
      %v1164 = vld [vmem:[%s13 + $0xe4] sm:$0xf]
      %v1165 = vld [vmem:[%s13 + $0xe8] sm:$0xf]
      %v1166 = vld [vmem:[%s13 + $0xec] sm:$0xf]
      %v1167 = vld [vmem:[%s13 + $0xf0] sm:$0xf]
      %v1168 = vld [vmem:[%s13 + $0xf4] sm:$0xf]
      %v1169 = vld [vmem:[%s13 + $0xf8] sm:$0xf]
      %v1170 = vld [vmem:[%s13 + $0xfc] sm:$0xf]
      %v1171 = vld [vmem:[%s13 + $0x100] sm:$0xf]
      %v1172 = vld [vmem:[%s13 + $0x104] sm:$0xf]
      %v1173 = vld [vmem:[%s13 + $0x108] sm:$0xf]
      %v1174 = vld [vmem:[%s13 + $0x10c] sm:$0xf]
      %v1175 = vld [vmem:[%s13 + $0x110] sm:$0xf]
      %v1176 = vld [vmem:[%s13 + $0x114] sm:$0xf]
      %v1177 = vld [vmem:[%s13 + $0x118] sm:$0xf]
      %v1178 = vld [vmem:[%s13 + $0x11c] sm:$0xf]
      %v1179 = vld [vmem:[%s13 + $0x120] sm:$0xf]
      %v1180 = vld [vmem:[%s13 + $0x124] sm:$0xf]
      %v1181 = vld [vmem:[%s13 + $0x128] sm:$0xf]
      %v1182 = vld [vmem:[%s13 + $0x12c] sm:$0xf]
      %v1183 = vld [vmem:[%s13 + $0x130] sm:$0xf]
      %v1184 = vld [vmem:[%s13 + $0x134] sm:$0xf]
      %v1185 = vld [vmem:[%s13 + $0x138] sm:$0xf]
      %v1186 = vld [vmem:[%s13 + $0x13c] sm:$0xf]
      %v1187 = vld [vmem:[%s13 + $0x140] sm:$0xf]
      %v1188 = vld [vmem:[%s13 + $0x144] sm:$0xf]
      %v1189 = vld [vmem:[%s13 + $0x148] sm:$0xf]
      %v1190 = vld [vmem:[%s13 + $0x14c] sm:$0xf]
      %v1191 = vld [vmem:[%s13 + $0x150] sm:$0xf]
      %v1192 = vld [vmem:[%s13 + $0x154] sm:$0xf]
      %v1193 = vld [vmem:[%s13 + $0x158] sm:$0xf]
      %v1194 = vld [vmem:[%s13 + $0x15c] sm:$0xf]
      %v1195 = vld [vmem:[%s13 + $0x160] sm:$0xf]
      %v1196 = vld [vmem:[%s13 + $0x164] sm:$0xf]
      %v1197 = vld [vmem:[%s13 + $0x168] sm:$0xf]
      %v1198 = vld [vmem:[%s13 + $0x16c] sm:$0xf]
      %v1199 = vld [vmem:[%s13 + $0x170] sm:$0xf]
      %v1200 = vld [vmem:[%s13 + $0x174] sm:$0xf]
      %v1201 = vld [vmem:[%s13 + $0x178] sm:$0xf]
      %v1202 = vld [vmem:[%s13 + $0x17c] sm:$0xf]
      %v1203 = vpack.c.bf16 %v1101, %v1101
      %v1204 = vpack.c.bf16 %v1102, %v1102
      %v1205 = vpack.c.bf16 %v1103, %v1103
      %v1206 = vpack.c.bf16 %v1104, %v1104
      %v1207 = vpack.c.bf16 %v1105, %v1105
      %v1208 = vpack.c.bf16 %v1106, %v1106
      %v1209 = vld [vmem:[%s15] sm:$0x1]
      %v1211 = vperm.slane %v1209, 0
      %v1309 = vunpack.c.l.b16 %v1107
      %v1310 = vunpack.c.l.b16 %v1108
      %v1311 = vunpack.c.l.b16 %v1109
      %v1312 = vunpack.c.l.b16 %v1110
      %v1313 = vunpack.c.l.b16 %v1111
      %v1314 = vunpack.c.l.b16 %v1112
      %v1315 = vunpack.c.l.b16 %v1113
      %v1316 = vunpack.c.l.b16 %v1114
      %v1317 = vunpack.c.l.b16 %v1115
      %v1318 = vunpack.c.l.b16 %v1116
      %v1319 = vunpack.c.l.b16 %v1117
      %v1320 = vunpack.c.l.b16 %v1118
      %v1321 = vunpack.c.l.b16 %v1119
      %v1322 = vunpack.c.l.b16 %v1120
      %v1323 = vunpack.c.l.b16 %v1121
      %v1324 = vunpack.c.l.b16 %v1122
      %v1325 = vunpack.c.l.b16 %v1123
      %v1326 = vunpack.c.l.b16 %v1124
      %v1327 = vunpack.c.l.b16 %v1125
      %v1328 = vunpack.c.l.b16 %v1126
      %v1329 = vunpack.c.l.b16 %v1127
      %v1330 = vunpack.c.l.b16 %v1128
      %v1331 = vunpack.c.l.b16 %v1129
      %v1332 = vunpack.c.l.b16 %v1130
      %v1333 = vunpack.c.l.b16 %v1131
      %v1334 = vunpack.c.l.b16 %v1132
      %v1335 = vunpack.c.l.b16 %v1133
      %v1336 = vunpack.c.l.b16 %v1134
      %v1337 = vunpack.c.l.b16 %v1135
      %v1338 = vunpack.c.l.b16 %v1136
      %v1339 = vunpack.c.l.b16 %v1137
      %v1340 = vunpack.c.l.b16 %v1138
      %v1341 = vunpack.c.l.b16 %v1139
      %v1342 = vunpack.c.l.b16 %v1140
      %v1343 = vunpack.c.l.b16 %v1141
      %v1344 = vunpack.c.l.b16 %v1142
      %v1345 = vunpack.c.l.b16 %v1143
      %v1346 = vunpack.c.l.b16 %v1144
      %v1347 = vunpack.c.l.b16 %v1145
      %v1348 = vunpack.c.l.b16 %v1146
      %v1349 = vunpack.c.l.b16 %v1147
      %v1350 = vunpack.c.l.b16 %v1148
      %v1351 = vunpack.c.l.b16 %v1149
      %v1352 = vunpack.c.l.b16 %v1150
      %v1353 = vunpack.c.l.b16 %v1151
      %v1354 = vunpack.c.l.b16 %v1152
      %v1355 = vunpack.c.l.b16 %v1153
      %v1356 = vunpack.c.l.b16 %v1154
      %v1357 = vunpack.c.l.b16 %v1155
      %v1358 = vunpack.c.l.b16 %v1156
      %v1359 = vunpack.c.l.b16 %v1157
      %v1360 = vunpack.c.l.b16 %v1158
      %v1361 = vunpack.c.l.b16 %v1159
      %v1362 = vunpack.c.l.b16 %v1160
      %v1363 = vunpack.c.l.b16 %v1161
      %v1364 = vunpack.c.l.b16 %v1162
      %v1365 = vunpack.c.l.b16 %v1163
      %v1366 = vunpack.c.l.b16 %v1164
      %v1367 = vunpack.c.l.b16 %v1165
      %v1368 = vunpack.c.l.b16 %v1166
      %v1369 = vunpack.c.l.b16 %v1167
      %v1370 = vunpack.c.l.b16 %v1168
      %v1371 = vunpack.c.l.b16 %v1169
      %v1372 = vunpack.c.l.b16 %v1170
      %v1373 = vunpack.c.l.b16 %v1171
      %v1374 = vunpack.c.l.b16 %v1172
      %v1375 = vunpack.c.l.b16 %v1173
      %v1376 = vunpack.c.l.b16 %v1174
      %v1377 = vunpack.c.l.b16 %v1175
      %v1378 = vunpack.c.l.b16 %v1176
      %v1379 = vunpack.c.l.b16 %v1177
      %v1380 = vunpack.c.l.b16 %v1178
      %v1381 = vunpack.c.l.b16 %v1179
      %v1382 = vunpack.c.l.b16 %v1180
      %v1383 = vunpack.c.l.b16 %v1181
      %v1384 = vunpack.c.l.b16 %v1182
      %v1385 = vunpack.c.l.b16 %v1183
      %v1386 = vunpack.c.l.b16 %v1184
      %v1387 = vunpack.c.l.b16 %v1185
      %v1388 = vunpack.c.l.b16 %v1186
      %v1389 = vunpack.c.l.b16 %v1187
      %v1390 = vunpack.c.l.b16 %v1188
      %v1391 = vunpack.c.l.b16 %v1189
      %v1392 = vunpack.c.l.b16 %v1190
      %v1393 = vunpack.c.l.b16 %v1191
      %v1394 = vunpack.c.l.b16 %v1192
      %v1395 = vunpack.c.l.b16 %v1193
      %v1396 = vunpack.c.l.b16 %v1194
      %v1397 = vunpack.c.l.b16 %v1195
      %v1398 = vunpack.c.l.b16 %v1196
      %v1399 = vunpack.c.l.b16 %v1197
      %v1400 = vunpack.c.l.b16 %v1198
      %v1401 = vunpack.c.l.b16 %v1199
      %v1402 = vunpack.c.l.b16 %v1200
      %v1403 = vunpack.c.l.b16 %v1201
      %v1404 = vunpack.c.l.b16 %v1202
      %v1405 = vpack.c.b16 %v1310, %v1309
      %v1406 = vpack.c.b16 %v1312, %v1311
      %v1407 = vpack.c.b16 %v1314, %v1313
      %v1408 = vpack.c.b16 %v1316, %v1315
      %v1409 = vpack.c.b16 %v1318, %v1317
      %v1410 = vpack.c.b16 %v1320, %v1319
      %v1411 = vpack.c.b16 %v1322, %v1321
      %v1412 = vpack.c.b16 %v1324, %v1323
      %v1413 = vpack.c.b16 %v1326, %v1325
      %v1414 = vpack.c.b16 %v1328, %v1327
      %v1415 = vpack.c.b16 %v1330, %v1329
      %v1416 = vpack.c.b16 %v1332, %v1331
      %v1417 = vpack.c.b16 %v1334, %v1333
      %v1418 = vpack.c.b16 %v1336, %v1335
      %v1419 = vpack.c.b16 %v1338, %v1337
      %v1420 = vpack.c.b16 %v1340, %v1339
      %v1421 = vpack.c.b16 %v1342, %v1341
      %v1422 = vpack.c.b16 %v1344, %v1343
      %v1423 = vpack.c.b16 %v1346, %v1345
      %v1424 = vpack.c.b16 %v1348, %v1347
      %v1425 = vpack.c.b16 %v1350, %v1349
      %v1426 = vpack.c.b16 %v1352, %v1351
      %v1427 = vpack.c.b16 %v1354, %v1353
      %v1428 = vpack.c.b16 %v1356, %v1355
      %v1429 = vpack.c.b16 %v1358, %v1357
      %v1430 = vpack.c.b16 %v1360, %v1359
      %v1431 = vpack.c.b16 %v1362, %v1361
      %v1432 = vpack.c.b16 %v1364, %v1363
      %v1433 = vpack.c.b16 %v1366, %v1365
      %v1434 = vpack.c.b16 %v1368, %v1367
      %v1435 = vpack.c.b16 %v1370, %v1369
      %v1436 = vpack.c.b16 %v1372, %v1371
      %v1437 = vpack.c.b16 %v1374, %v1373
      %v1438 = vpack.c.b16 %v1376, %v1375
      %v1439 = vpack.c.b16 %v1378, %v1377
      %v1440 = vpack.c.b16 %v1380, %v1379
      %v1441 = vpack.c.b16 %v1382, %v1381
      %v1442 = vpack.c.b16 %v1384, %v1383
      %v1443 = vpack.c.b16 %v1386, %v1385
      %v1444 = vpack.c.b16 %v1388, %v1387
      %v1445 = vpack.c.b16 %v1390, %v1389
      %v1446 = vpack.c.b16 %v1392, %v1391
      %v1447 = vpack.c.b16 %v1394, %v1393
      %v1448 = vpack.c.b16 %v1396, %v1395
      %v1449 = vpack.c.b16 %v1398, %v1397
      %v1450 = vpack.c.b16 %v1400, %v1399
      %v1451 = vpack.c.b16 %v1402, %v1401
      %v1452 = vpack.c.b16 %v1404, %v1403
      %1501 = vmatpush.bf16.msra.mxu0 %v1412
      %1502 = vmatpush.bf16.msra.mxu0 %v1411
      %1503 = vmatpush.bf16.msra.mxu0 %v1410
      %1504 = vmatpush.bf16.msra.mxu0 %v1409
      %1505 = vmatpush.bf16.msra.mxu0 %v1408
      %1506 = vmatpush.bf16.msra.mxu0 %v1407
      %1507 = vmatpush.bf16.msra.mxu0 %v1406
      %1508 = vmatpush.bf16.msra.mxu0 %v1405
      %1509 = vmatmul.bf16.gmra.mxu0 %v1203
      %v1510 = vpop.f32.mrf.mxu0
      %v1511 = vadd.f32 %v1211, %v1510
      %v1512 = vpop.f32.mrf.mxu0
      %1513 = vdwg.mxu0
      %1514 = vmatpush.bf16.msra.mxu0 %v1420
      %1515 = vmatpush.bf16.msra.mxu0 %v1419
      %1516 = vmatpush.bf16.msra.mxu0 %v1418
      %1517 = vmatpush.bf16.msra.mxu0 %v1417
      %1518 = vmatpush.bf16.msra.mxu0 %v1416
      %1519 = vmatpush.bf16.msra.mxu0 %v1415
      %1520 = vmatpush.bf16.msra.mxu0 %v1414
      %1521 = vmatpush.bf16.msra.mxu0 %v1413
      %1522 = vmatmul.bf16.gmra.mxu0 %v1204
      %v1523 = vpop.f32.mrf.mxu0
      %v1524 = vadd.f32 %v1511, %v1523
      %v1525 = vpop.f32.mrf.mxu0
      %1526 = vdwg.mxu0
      %1527 = vmatpush.bf16.msra.mxu0 %v1428
      %1528 = vmatpush.bf16.msra.mxu0 %v1427
      %1529 = vmatpush.bf16.msra.mxu0 %v1426
      %1530 = vmatpush.bf16.msra.mxu0 %v1425
      %1531 = vmatpush.bf16.msra.mxu0 %v1424
      %1532 = vmatpush.bf16.msra.mxu0 %v1423
      %1533 = vmatpush.bf16.msra.mxu0 %v1422
      %1534 = vmatpush.bf16.msra.mxu0 %v1421
      %1535 = vmatmul.bf16.gmra.mxu0 %v1205
      %v1536 = vpop.f32.mrf.mxu0
      %v1537 = vadd.f32 %v1524, %v1536
      %v1538 = vpop.f32.mrf.mxu0
      %1539 = vdwg.mxu0
      %1540 = vmatpush.bf16.msra.mxu0 %v1436
      %1541 = vmatpush.bf16.msra.mxu0 %v1435
      %1542 = vmatpush.bf16.msra.mxu0 %v1434
      %1543 = vmatpush.bf16.msra.mxu0 %v1433
      %1544 = vmatpush.bf16.msra.mxu0 %v1432
      %1545 = vmatpush.bf16.msra.mxu0 %v1431
      %1546 = vmatpush.bf16.msra.mxu0 %v1430
      %1547 = vmatpush.bf16.msra.mxu0 %v1429
      %1548 = vmatmul.bf16.gmra.mxu0 %v1206
      %v1549 = vpop.f32.mrf.mxu0
      %v1550 = vadd.f32 %v1537, %v1549
      %v1551 = vpop.f32.mrf.mxu0
      %1552 = vdwg.mxu0
      %1553 = vmatpush.bf16.msra.mxu0 %v1444
      %1554 = vmatpush.bf16.msra.mxu0 %v1443
      %1555 = vmatpush.bf16.msra.mxu0 %v1442
      %1556 = vmatpush.bf16.msra.mxu0 %v1441
      %1557 = vmatpush.bf16.msra.mxu0 %v1440
      %1558 = vmatpush.bf16.msra.mxu0 %v1439
      %1559 = vmatpush.bf16.msra.mxu0 %v1438
      %1560 = vmatpush.bf16.msra.mxu0 %v1437
      %1561 = vmatmul.bf16.gmra.mxu0 %v1207
      %v1562 = vpop.f32.mrf.mxu0
      %v1563 = vadd.f32 %v1550, %v1562
      %v1564 = vpop.f32.mrf.mxu0
      %1565 = vdwg.mxu0
      %1566 = vmatpush.bf16.msra.mxu0 %v1452
      %1567 = vmatpush.bf16.msra.mxu0 %v1451
      %1568 = vmatpush.bf16.msra.mxu0 %v1450
      %1569 = vmatpush.bf16.msra.mxu0 %v1449
      %1570 = vmatpush.bf16.msra.mxu0 %v1448
      %1571 = vmatpush.bf16.msra.mxu0 %v1447
      %1572 = vmatpush.bf16.msra.mxu0 %v1446
      %1573 = vmatpush.bf16.msra.mxu0 %v1445
      %1574 = vmatmul.bf16.gmra.mxu0 %v1208
      %v1575 = vpop.f32.mrf.mxu0
      %v1576 = vadd.f32 %v1563, %v1575
      %v1577 = vpop.f32.mrf.mxu0
      %1578 = vdwg.mxu0
      %vm1579 = vcmask 254976
      %1580 = vst.msk [vmem:[#allocation2] sm:$0x3] %vm1579, %v1576
      %vm1581 = vcmask 257024
      %1582 = vst.msk [vmem:[#allocation2 + $0x2] sm:$0xf] %vm1581, %v1014
      %1584 = vrot.lane.b32.xlu0 %v1576, 96
      %v1585 = vpop.permute.xlu0 %1584
      %vm1587 = vcmask 257026
      %1588 = vst.msk [vmem:[#allocation2 + $0x4] sm:$0xc] %vm1587, %v1585
      %1589 = vst.msk [vmem:[#allocation2 + $0x8] sm:$0xf] %vm1581, %v1015
      %1590 = vrot.lane.b32.xlu0 %v1576, 64
      %v1591 = vpop.permute.xlu0 %1590
      %vm1593 = vcmask 259076
      %1594 = vst.msk [vmem:[#allocation2 + $0x8] sm:$0x30] %vm1593, %v1591
      %1595 = vst.msk [vmem:[#allocation2 + $0xe] sm:$0xf] %vm1581, %v1014
      %1596 = vst.msk [vmem:[#allocation2 + $0x12] sm:$0xf] %vm1581, %v1015
      %v1597 = vld [vmem:[#allocation2] sm:$0x3f]
      %v1598 = vld [vmem:[%s17] sm:$0xf]
      %v1599 = vld [vmem:[%s17 + $0x4] sm:$0xf]
      %v1600 = vld [vmem:[%s17 + $0x8] sm:$0xf]
      %v1601 = vld [vmem:[%s17 + $0xc] sm:$0xf]
      %v1602 = vpack.c.bf16 %v1597, %v1597
      %v1603 = vld [vmem:[%s19] sm:$0x1]
      %v1605 = vperm.slane %v1603, 0
      %v1611 = vunpack.c.l.b16 %v1598
      %v1612 = vunpack.c.l.b16 %v1599
      %v1613 = vunpack.c.l.b16 %v1600
      %v1614 = vunpack.c.l.b16 %v1601
      %v1615 = vpack.c.b16 %v1612, %v1611
      %v1616 = vpack.c.b16 %v1614, %v1613
      %vm1619 = vcmask 261120
      %v1621 = vsel %vm1619, %v1602, 0
      %1623 = vmatpush.bf16.msra.mxu0 0
      %1624 = vmatpush.bf16.msra.mxu0 0
      %1625 = vmatpush.bf16.msra.mxu0 0
      %1626 = vmatpush.bf16.msra.mxu0 0
      %1627 = vmatpush.bf16.msra.mxu0 0
      %1628 = vmatpush.bf16.msra.mxu0 0
      %1629 = vmatpush.bf16.msra.mxu0 %v1616
      %1630 = vmatpush.bf16.msra.mxu0 %v1615
      %1631 = vmatmul.bf16.gmra.mxu0 %v1621
      %v1632 = vpop.f32.mrf.mxu0
      %v1633 = vadd.f32 %v1605, %v1632
      %v1634 = vpop.f32.mrf.mxu0
      %1635 = vdwg.mxu0
      %v1636 = vld [vmem:[%s29] sm:$0xf]
      %v1637 = vld [vmem:[%s29 + $0x4] sm:$0xf]
      %v1638 = vld [vmem:[%s29 + $0x8] sm:$0xf]
      %v1639 = vld [vmem:[%s21] sm:$0xf]
      %v1640 = vld [vmem:[%s21 + $0x4] sm:$0xf]
      %v1641 = vld [vmem:[%s21 + $0x8] sm:$0xf]
      %v1642 = vld [vmem:[%s21 + $0xc] sm:$0xf]
      %v1643 = vld [vmem:[%s23] sm:$0x1]
      %v1644 = vpack.c.bf16 %v1633, %v1633
      %v1646 = vunpack.c.l.b16 %v1644
      %v1647 = vpack.c.b16 %v1646, %v1646
      %v1648 = vrot.slane %v1647, 5
      %v1649 = vrot.slane %v1647, 2
      %v1650 = vrot.slane %v1647, 7
      %vm1651 = vcmask 1042432
      %v1654 = vsel %vm1651, %v1644, %v1648
      %v1656 = vsel %vm1030, %v1654, %v1649
      %vm1658 = vcmask 1040384
      %v1660 = vsel %vm1658, %v1649, %v1650
      %v1662 = vunpack.c.l.bf16 %v1656
      %v1663 = vunpack.c.h.bf16 %v1656
      %v1664 = vunpack.c.l.bf16 %v1660
      %v1665 = vunpack.c.l.bf16 %v1636
      %v1666 = vunpack.c.l.bf16 %v1637
      %v1667 = vunpack.c.l.bf16 %v1638
      %1671 = vrot.lane.b32.xlu0 %v1665, 32
      %v1672 = vpop.permute.xlu0 %1671
      %1673 = vrot.lane.b32.xlu0 %v1666, 32
      %v1674 = vpop.permute.xlu0 %1673
      %1675 = vrot.lane.b32.xlu0 %v1667, 32
      %v1676 = vpop.permute.xlu0 %1675
      %v1680 = vmul.f32 %v1662, %v1672
      %v1681 = vmul.f32 %v1663, %v1674
      %v1682 = vmul.f32 %v1664, %v1676
      %v1683 = vpack.c.bf16 %v1681, %v1680
      %v1684 = vpack.c.bf16 %v1682, %v1682
      %1685 = vrot.lane.b32.xlu0 %v1665, 64
      %v1686 = vpop.permute.xlu0 %1685
      %1687 = vrot.lane.b32.xlu0 %v1666, 64
      %v1688 = vpop.permute.xlu0 %1687
      %1689 = vrot.lane.b32.xlu0 %v1667, 64
      %v1690 = vpop.permute.xlu0 %1689
      %v1694 = vmul.f32 %v1662, %v1686
      %v1695 = vmul.f32 %v1663, %v1688
      %v1696 = vmul.f32 %v1664, %v1690
      %v1697 = vpack.c.bf16 %v1695, %v1694
      %v1698 = vpack.c.bf16 %v1696, %v1696
      %1701 = vrot.lane.b32.xlu0 %v1683, 96
      %v1702 = vpop.permute.xlu0 %1701
      %1703 = vrot.lane.b32.xlu0 %v1684, 96
      %v1704 = vpop.permute.xlu0 %1703
      %v1705 = vsel %vm1619, %v1644, 0
      %v1708 = vsel %vm1619, %v1702, 0
      %v1711 = vsel %vm1619, %v1704, 0
      %1713 = vmatpush.bf16.xpose.msra.mxu0 0
      %1714 = vmatpush.bf16.xpose.msra.mxu0 0
      %1715 = vmatpush.bf16.xpose.msra.mxu0 0
      %1716 = vmatpush.bf16.xpose.msra.mxu0 0
      %1717 = vmatpush.bf16.xpose.msra.mxu0 0
      %1718 = vmatpush.bf16.xpose.msra.mxu0 0
      %1719 = vmatpush.bf16.xpose.msra.mxu0 %v1711
      %1720 = vmatpush.bf16.xpose.msra.mxu0 %v1708
      %1721 = vmatmul.bf16.gmra.mxu0 %v1705
      %v1722 = vpop.f32.mrf.mxu0
      %v1723 = vadd.f32 0.0, %v1722
      %v1724 = vpop.f32.mrf.mxu0
      %1725 = vdwg.mxu0
      %vm1726 = vcmask 46080
      %v1727 = vsel %vm1726, %v1723, -inf
      %1728 = vmax.xlane.f32.xlu0 %v1727
      %v1729 = vpop.xlane.xlu0 %1728
      %vm1730 = vcmask 95280
      %v1731 = vsel %vm1730, %v1723, -inf
      %1732 = vmax.xlane.f32.xlu0 %v1731
      %v1733 = vpop.xlane.xlu0 %1732
      %vm1734 = vcmask 144480
      %v1735 = vsel %vm1734, %v1723, -inf
      %1736 = vmax.xlane.f32.xlu0 %v1735
      %v1737 = vpop.xlane.xlu0 %1736
      %vm1738 = vcmask 193680
      %v1739 = vsel %vm1738, %v1723, -inf
      %1740 = vmax.xlane.f32.xlu0 %v1739
      %v1741 = vpop.xlane.xlu0 %1740
      %vm1742 = vcmask 48128
      %v1743 = vsel %vm1742, %v1729, %v1733
      %vm1744 = vcmask 97280
      %v1745 = vsel %vm1744, %v1743, %v1737
      %vm1746 = vcmask 146432
      %v1747 = vsel %vm1746, %v1745, %v1741
      %v1748 = vsub.f32 %v1723, %v1747
      %v1749 = vmul.f32 %v1748, 1.442695
      %v1750 = vpow.pop %v1749
      %v1751 = vsel %vm1726, %v1750, 0.0
      %1752 = vadd.xlane.f32.xlu0 %v1751
      %v1753 = vpop.xlane.xlu0 %1752
      %1755 = vrot.lane.b32.xlu0 %v1750, 122
      %v1756 = vpop.permute.xlu0 %1755
      %v1758 = vsel %vm1726, %v1756, 0.0
      %1759 = vadd.xlane.f32.xlu0 %v1758
      %v1760 = vpop.xlane.xlu0 %1759
      %1761 = vrot.lane.b32.xlu0 %v1750, 116
      %v1762 = vpop.permute.xlu0 %1761
      %v1764 = vsel %vm1726, %v1762, 0.0
      %1765 = vadd.xlane.f32.xlu0 %v1764
      %v1766 = vpop.xlane.xlu0 %1765
      %1767 = vrot.lane.b32.xlu0 %v1750, 110
      %v1768 = vpop.permute.xlu0 %1767
      %v1770 = vsel %vm1726, %v1768, 0.0
      %1771 = vadd.xlane.f32.xlu0 %v1770
      %v1772 = vpop.xlane.xlu0 %1771
      %vm1773 = vcmask 64512
      %v1774 = vsel %vm1773, %v1753, %v1760
      %vm1775 = vcmask 130048
      %v1776 = vsel %vm1775, %v1774, %v1766
      %vm1777 = vcmask 195584
      %v1778 = vsel %vm1777, %v1776, %v1772
      %v1779 = vpack.c.bf16 %v1750, %v1750
      %1782 = vrot.lane.b32.xlu0 %v1697, 64
      %v1783 = vpop.permute.xlu0 %1782
      %1784 = vrot.lane.b32.xlu0 %v1698, 64
      %v1785 = vpop.permute.xlu0 %1784
      %v1788 = vsel %vm1777, %v1779, 0
      %vm1790 = vcmask 1043456
      %v1792 = vsel %vm1790, %v1785, 0
      %1794 = vmatpush.bf16.msra.mxu0 0
      %1795 = vmatpush.bf16.msra.mxu0 0
      %1796 = vmatpush.bf16.msra.mxu0 0
      %1797 = vmatpush.bf16.msra.mxu0 0
      %1798 = vmatpush.bf16.msra.mxu0 0
      %1799 = vmatpush.bf16.msra.mxu0 0
      %1800 = vmatpush.bf16.msra.mxu0 %v1792
      %1801 = vmatpush.bf16.msra.mxu0 %v1783
      %1802 = vmatmul.bf16.gmra.mxu0 %v1788
      %v1803 = vpop.f32.mrf.mxu0
      %v1804 = vadd.f32 0.0, %v1803
      %v1805 = vpop.f32.mrf.mxu0
      %1806 = vdwg.mxu0
      %v1807 = vrcp.pop %v1778
      %v1808 = vmul.f32 %v1804, %v1807
      %v1809 = vpack.c.bf16 %v1808, %v1808
      %v1811 = vperm.slane %v1643, 0
      %v1817 = vunpack.c.l.b16 %v1639
      %v1818 = vunpack.c.l.b16 %v1640
      %v1819 = vunpack.c.l.b16 %v1641
      %v1820 = vunpack.c.l.b16 %v1642
      %v1821 = vpack.c.b16 %v1818, %v1817
      %v1822 = vpack.c.b16 %v1820, %v1819
      %v1826 = vsel %vm1619, %v1809, 0
      %1828 = vmatpush.bf16.msra.mxu0 0
      %1829 = vmatpush.bf16.msra.mxu0 0
      %1830 = vmatpush.bf16.msra.mxu0 0
      %1831 = vmatpush.bf16.msra.mxu0 0
      %1832 = vmatpush.bf16.msra.mxu0 0
      %1833 = vmatpush.bf16.msra.mxu0 0
      %1834 = vmatpush.bf16.msra.mxu0 %v1822
      %1835 = vmatpush.bf16.msra.mxu0 %v1821
      %1836 = vmatmul.bf16.gmra.mxu0 %v1826
      %v1837 = vpop.f32.mrf.mxu0
      %v1838 = vadd.f32 %v1811, %v1837
      %v1839 = vpop.f32.mrf.mxu0
      %1840 = vdwg.mxu0
      %v1841 = vadd.f32 %v1597, %v1838
      %v1842 = vld [vmem:[%s25] sm:$0x1]
      %v1843 = vld [vmem:[%s27] sm:$0x1]
      %vm1844 = vcmask 259072
      %v1845 = vsel %vm1844, %v1841, 0.0
      %1846 = vadd.xlane.f32.xlu0 %v1845
      %v1847 = vpop.xlane.xlu0 %1846
      %v1848 = vrcp.pop 32.0
      %v1849 = vmul.f32 32.0, %v1848
      %v1850 = vsub.f32 1.0, %v1849
      %v1851 = vmul.f32 %v1848, %v1850
      %v1852 = vadd.f32 %v1848, %v1851
      %vm1853 = vweird.f32 %v1848
      %v1854 = vsel %vm1853, %v1848, %v1852
      %v1855 = vmul.f32 %v1847, %v1854
      %v1856 = vsub.f32 %v1841, %v1855
      %v1857 = vmul.f32 %v1856, %v1856
      %v1858 = vsel %vm1844, %v1857, 0.0
      %1859 = vadd.xlane.f32.xlu0 %v1858
      %v1860 = vpop.xlane.xlu0 %1859
      %v1861 = vmul.f32 %v1860, %v1854
      %v1862 = vadd.f32 %v1861, 1e-05
      %v1863 = vrsqrt.pop %v1862
      %v1864 = vmul.f32 %v1863, %v1862
      %v1865 = vmul.f32 %v1864, %v1863
      %v1866 = vmul.f32 0.5, %v1865
      %v1867 = vsub.f32 1.5, %v1866
      %v1868 = vmul.f32 %v1863, %v1867
      %vm1869 = vweird.f32 %v1862
      %vm1870 = vweird.f32 %v1863
      %vm1871 = vmor %vm1869, %vm1870
      %v1872 = vsel %vm1871, %v1863, %v1868
      %v1873 = vmul.f32 %v1856, %v1872
      %v1875 = vperm.slane %v1842, 0
      %v1877 = vmul.f32 %v1873, %v1875
      %v1879 = vperm.slane %v1843, 0
      %v1881 = vadd.f32 %v1877, %v1879
      %1882 = vst.msk [vmem:[#allocation2] sm:$0x3f] %vm1844, %v1881
      %v1883 = vld [vmem:[#allocation2 + $0x6] sm:$0x3f]
      %s1884 = scalar_lea.vmem %s17, 16
      %v1885 = vld [vmem:[%s1884] sm:$0xf]
      %v1886 = vld [vmem:[%s1884 + $0x4] sm:$0xf]
      %v1887 = vld [vmem:[%s1884 + $0x8] sm:$0xf]
      %v1888 = vld [vmem:[%s1884 + $0xc] sm:$0xf]
      %v1889 = vpack.c.bf16 %v1883, %v1883
      %s1890 = scalar_lea.vmem %s19, 1
      %v1891 = vld [vmem:[%s1890] sm:$0x1]
      %v1893 = vperm.slane %v1891, 0
      %v1899 = vunpack.c.l.b16 %v1885
      %v1900 = vunpack.c.l.b16 %v1886
      %v1901 = vunpack.c.l.b16 %v1887
      %v1902 = vunpack.c.l.b16 %v1888
      %v1903 = vpack.c.b16 %v1900, %v1899
      %v1904 = vpack.c.b16 %v1902, %v1901
      %v1908 = vsel %vm1619, %v1889, 0
      %1910 = vmatpush.bf16.msra.mxu0 0
      %1911 = vmatpush.bf16.msra.mxu0 0
      %1912 = vmatpush.bf16.msra.mxu0 0
      %1913 = vmatpush.bf16.msra.mxu0 0
      %1914 = vmatpush.bf16.msra.mxu0 0
      %1915 = vmatpush.bf16.msra.mxu0 0
      %1916 = vmatpush.bf16.msra.mxu0 %v1904
      %1917 = vmatpush.bf16.msra.mxu0 %v1903
      %1918 = vmatmul.bf16.gmra.mxu0 %v1908
      %v1919 = vpop.f32.mrf.mxu0
      %v1920 = vadd.f32 %v1893, %v1919
      %v1921 = vpop.f32.mrf.mxu0
      %1922 = vdwg.mxu0
      %v1923 = vld [vmem:[%s31] sm:$0xf]
      %v1924 = vld [vmem:[%s31 + $0x4] sm:$0xf]
      %v1925 = vld [vmem:[%s31 + $0x8] sm:$0xf]
      %s1926 = scalar_lea.vmem %s21, 16
      %v1927 = vld [vmem:[%s1926] sm:$0xf]
      %v1928 = vld [vmem:[%s1926 + $0x4] sm:$0xf]
      %v1929 = vld [vmem:[%s1926 + $0x8] sm:$0xf]
      %v1930 = vld [vmem:[%s1926 + $0xc] sm:$0xf]
      %s1931 = scalar_lea.vmem %s23, 1
      %v1932 = vld [vmem:[%s1931] sm:$0x1]
      %v1933 = vpack.c.bf16 %v1920, %v1920
      %v1935 = vunpack.c.l.b16 %v1933
      %v1936 = vpack.c.b16 %v1935, %v1935
      %v1937 = vrot.slane %v1936, 5
      %v1938 = vrot.slane %v1936, 2
      %v1939 = vrot.slane %v1936, 7
      %v1942 = vsel %vm1651, %v1933, %v1937
      %v1944 = vsel %vm1030, %v1942, %v1938
      %v1947 = vsel %vm1658, %v1938, %v1939
      %v1949 = vunpack.c.l.bf16 %v1944
      %v1950 = vunpack.c.h.bf16 %v1944
      %v1951 = vunpack.c.l.bf16 %v1947
      %v1952 = vunpack.c.l.bf16 %v1923
      %v1953 = vunpack.c.l.bf16 %v1924
      %v1954 = vunpack.c.l.bf16 %v1925
      %1958 = vrot.lane.b32.xlu0 %v1952, 32
      %v1959 = vpop.permute.xlu0 %1958
      %1960 = vrot.lane.b32.xlu0 %v1953, 32
      %v1961 = vpop.permute.xlu0 %1960
      %1962 = vrot.lane.b32.xlu0 %v1954, 32
      %v1963 = vpop.permute.xlu0 %1962
      %v1967 = vmul.f32 %v1949, %v1959
      %v1968 = vmul.f32 %v1950, %v1961
      %v1969 = vmul.f32 %v1951, %v1963
      %v1970 = vpack.c.bf16 %v1968, %v1967
      %v1971 = vpack.c.bf16 %v1969, %v1969
      %1972 = vrot.lane.b32.xlu0 %v1952, 64
      %v1973 = vpop.permute.xlu0 %1972
      %1974 = vrot.lane.b32.xlu0 %v1953, 64
      %v1975 = vpop.permute.xlu0 %1974
      %1976 = vrot.lane.b32.xlu0 %v1954, 64
      %v1977 = vpop.permute.xlu0 %1976
      %v1981 = vmul.f32 %v1949, %v1973
      %v1982 = vmul.f32 %v1950, %v1975
      %v1983 = vmul.f32 %v1951, %v1977
      %v1984 = vpack.c.bf16 %v1982, %v1981
      %v1985 = vpack.c.bf16 %v1983, %v1983
      %1988 = vrot.lane.b32.xlu0 %v1970, 96
      %v1989 = vpop.permute.xlu0 %1988
      %1990 = vrot.lane.b32.xlu0 %v1971, 96
      %v1991 = vpop.permute.xlu0 %1990
      %v1992 = vsel %vm1619, %v1933, 0
      %v1995 = vsel %vm1619, %v1989, 0
      %v1998 = vsel %vm1619, %v1991, 0
      %2000 = vmatpush.bf16.xpose.msra.mxu0 0
      %2001 = vmatpush.bf16.xpose.msra.mxu0 0
      %2002 = vmatpush.bf16.xpose.msra.mxu0 0
      %2003 = vmatpush.bf16.xpose.msra.mxu0 0
      %2004 = vmatpush.bf16.xpose.msra.mxu0 0
      %2005 = vmatpush.bf16.xpose.msra.mxu0 0
      %2006 = vmatpush.bf16.xpose.msra.mxu0 %v1998
      %2007 = vmatpush.bf16.xpose.msra.mxu0 %v1995
      %2008 = vmatmul.bf16.gmra.mxu0 %v1992
      %v2009 = vpop.f32.mrf.mxu0
      %v2010 = vadd.f32 0.0, %v2009
      %v2011 = vpop.f32.mrf.mxu0
      %2012 = vdwg.mxu0
      %v2013 = vsel %vm1726, %v2010, -inf
      %2014 = vmax.xlane.f32.xlu0 %v2013
      %v2015 = vpop.xlane.xlu0 %2014
      %v2016 = vsel %vm1730, %v2010, -inf
      %2017 = vmax.xlane.f32.xlu0 %v2016
      %v2018 = vpop.xlane.xlu0 %2017
      %v2019 = vsel %vm1734, %v2010, -inf
      %2020 = vmax.xlane.f32.xlu0 %v2019
      %v2021 = vpop.xlane.xlu0 %2020
      %v2022 = vsel %vm1738, %v2010, -inf
      %2023 = vmax.xlane.f32.xlu0 %v2022
      %v2024 = vpop.xlane.xlu0 %2023
      %v2025 = vsel %vm1742, %v2015, %v2018
      %v2026 = vsel %vm1744, %v2025, %v2021
      %v2027 = vsel %vm1746, %v2026, %v2024
      %v2028 = vsub.f32 %v2010, %v2027
      %v2029 = vmul.f32 %v2028, 1.442695
      %v2030 = vpow.pop %v2029
      %v2031 = vsel %vm1726, %v2030, 0.0
      %2032 = vadd.xlane.f32.xlu0 %v2031
      %v2033 = vpop.xlane.xlu0 %2032
      %2035 = vrot.lane.b32.xlu0 %v2030, 122
      %v2036 = vpop.permute.xlu0 %2035
      %v2038 = vsel %vm1726, %v2036, 0.0
      %2039 = vadd.xlane.f32.xlu0 %v2038
      %v2040 = vpop.xlane.xlu0 %2039
      %2041 = vrot.lane.b32.xlu0 %v2030, 116
      %v2042 = vpop.permute.xlu0 %2041
      %v2044 = vsel %vm1726, %v2042, 0.0
      %2045 = vadd.xlane.f32.xlu0 %v2044
      %v2046 = vpop.xlane.xlu0 %2045
      %2047 = vrot.lane.b32.xlu0 %v2030, 110
      %v2048 = vpop.permute.xlu0 %2047
      %v2050 = vsel %vm1726, %v2048, 0.0
      %2051 = vadd.xlane.f32.xlu0 %v2050
      %v2052 = vpop.xlane.xlu0 %2051
      %v2053 = vsel %vm1773, %v2033, %v2040
      %v2054 = vsel %vm1775, %v2053, %v2046
      %v2055 = vsel %vm1777, %v2054, %v2052
      %v2056 = vpack.c.bf16 %v2030, %v2030
      %2059 = vrot.lane.b32.xlu0 %v1984, 64
      %v2060 = vpop.permute.xlu0 %2059
      %2061 = vrot.lane.b32.xlu0 %v1985, 64
      %v2062 = vpop.permute.xlu0 %2061
      %v2065 = vsel %vm1777, %v2056, 0
      %v2068 = vsel %vm1790, %v2062, 0
      %2070 = vmatpush.bf16.msra.mxu0 0
      %2071 = vmatpush.bf16.msra.mxu0 0
      %2072 = vmatpush.bf16.msra.mxu0 0
      %2073 = vmatpush.bf16.msra.mxu0 0
      %2074 = vmatpush.bf16.msra.mxu0 0
      %2075 = vmatpush.bf16.msra.mxu0 0
      %2076 = vmatpush.bf16.msra.mxu0 %v2068
      %2077 = vmatpush.bf16.msra.mxu0 %v2060
      %2078 = vmatmul.bf16.gmra.mxu0 %v2065
      %v2079 = vpop.f32.mrf.mxu0
      %v2080 = vadd.f32 0.0, %v2079
      %v2081 = vpop.f32.mrf.mxu0
      %2082 = vdwg.mxu0
      %v2083 = vrcp.pop %v2055
      %v2084 = vmul.f32 %v2080, %v2083
      %v2085 = vpack.c.bf16 %v2084, %v2084
      %v2087 = vperm.slane %v1932, 0
      %v2093 = vunpack.c.l.b16 %v1927
      %v2094 = vunpack.c.l.b16 %v1928
      %v2095 = vunpack.c.l.b16 %v1929
      %v2096 = vunpack.c.l.b16 %v1930
      %v2097 = vpack.c.b16 %v2094, %v2093
      %v2098 = vpack.c.b16 %v2096, %v2095
      %v2102 = vsel %vm1619, %v2085, 0
      %2104 = vmatpush.bf16.msra.mxu0 0
      %2105 = vmatpush.bf16.msra.mxu0 0
      %2106 = vmatpush.bf16.msra.mxu0 0
      %2107 = vmatpush.bf16.msra.mxu0 0
      %2108 = vmatpush.bf16.msra.mxu0 0
      %2109 = vmatpush.bf16.msra.mxu0 0
      %2110 = vmatpush.bf16.msra.mxu0 %v2098
      %2111 = vmatpush.bf16.msra.mxu0 %v2097
      %2112 = vmatmul.bf16.gmra.mxu0 %v2102
      %v2113 = vpop.f32.mrf.mxu0
      %v2114 = vadd.f32 %v2087, %v2113
      %v2115 = vpop.f32.mrf.mxu0
      %2116 = vdwg.mxu0
      %v2117 = vadd.f32 %v1883, %v2114
      %s2118 = scalar_lea.vmem %s25, 1
      %v2119 = vld [vmem:[%s2118] sm:$0x1]
      %s2120 = scalar_lea.vmem %s27, 1
      %v2121 = vld [vmem:[%s2120] sm:$0x1]
      %v2122 = vsel %vm1844, %v2117, 0.0
      %2123 = vadd.xlane.f32.xlu0 %v2122
      %v2124 = vpop.xlane.xlu0 %2123
      %v2125 = vmul.f32 %v2124, %v1854
      %v2126 = vsub.f32 %v2117, %v2125
      %v2127 = vmul.f32 %v2126, %v2126
      %v2128 = vsel %vm1844, %v2127, 0.0
      %2129 = vadd.xlane.f32.xlu0 %v2128
      %v2130 = vpop.xlane.xlu0 %2129
      %v2131 = vmul.f32 %v2130, %v1854
      %v2132 = vadd.f32 %v2131, 1e-05
      %v2133 = vrsqrt.pop %v2132
      %v2134 = vmul.f32 %v2133, %v2132
      %v2135 = vmul.f32 %v2134, %v2133
      %v2136 = vmul.f32 0.5, %v2135
      %v2137 = vsub.f32 1.5, %v2136
      %v2138 = vmul.f32 %v2133, %v2137
      %vm2139 = vweird.f32 %v2132
      %vm2140 = vweird.f32 %v2133
      %vm2141 = vmor %vm2139, %vm2140
      %v2142 = vsel %vm2141, %v2133, %v2138
      %v2143 = vmul.f32 %v2126, %v2142
      %v2145 = vperm.slane %v2119, 0
      %v2147 = vmul.f32 %v2143, %v2145
      %v2149 = vperm.slane %v2121, 0
      %v2151 = vadd.f32 %v2147, %v2149
      %2152 = vst.msk [vmem:[#allocation2 + $0x6] sm:$0x3f] %vm1844, %v2151
      %v2153 = vld [vmem:[#allocation2 + $0xc] sm:$0xff]
      %v2154 = vld [vmem:[#allocation2 + $0x14] sm:$0x3]
      %s2155 = scalar_lea.vmem %s17, 32
      %v2156 = vld [vmem:[%s2155] sm:$0xf]
      %v2157 = vld [vmem:[%s2155 + $0x4] sm:$0xf]
      %v2158 = vld [vmem:[%s2155 + $0x8] sm:$0xf]
      %v2159 = vld [vmem:[%s2155 + $0xc] sm:$0xf]
      %v2160 = vpack.c.bf16 %v2154, %v2153
      %s2161 = scalar_lea.vmem %s19, 2
      %v2162 = vld [vmem:[%s2161] sm:$0x1]
      %v2164 = vperm.slane %v2162, 0
      %v2170 = vunpack.c.l.b16 %v2156
      %v2171 = vunpack.c.l.b16 %v2157
      %v2172 = vunpack.c.l.b16 %v2158
      %v2173 = vunpack.c.l.b16 %v2159
      %v2174 = vpack.c.b16 %v2171, %v2170
      %v2175 = vpack.c.b16 %v2173, %v2172
      %v2179 = vsel %vm1619, %v2160, 0
      %2181 = vmatpush.bf16.msra.mxu0 0
      %2182 = vmatpush.bf16.msra.mxu0 0
      %2183 = vmatpush.bf16.msra.mxu0 0
      %2184 = vmatpush.bf16.msra.mxu0 0
      %2185 = vmatpush.bf16.msra.mxu0 0
      %2186 = vmatpush.bf16.msra.mxu0 0
      %2187 = vmatpush.bf16.msra.mxu0 %v2175
      %2188 = vmatpush.bf16.msra.mxu0 %v2174
      %2189 = vmatmul.bf16.gmra.mxu0 %v2179
      %v2190 = vpop.f32.mrf.mxu0
      %v2191 = vadd.f32 %v2164, %v2190
      %v2192 = vpop.f32.mrf.mxu0
      %v2193 = vadd.f32 %v2164, %v2192
      %2194 = vdwg.mxu0
      %v2195 = vld [vmem:[%s33] sm:$0xf]
      %v2196 = vld [vmem:[%s33 + $0x4] sm:$0xf]
      %v2197 = vld [vmem:[%s33 + $0x8] sm:$0xf]
      %v2198 = vld [vmem:[%s33 + $0xc] sm:$0xf]
      %v2199 = vld [vmem:[%s33 + $0x10] sm:$0xf]
      %s2200 = scalar_lea.vmem %s21, 32
      %v2201 = vld [vmem:[%s2200] sm:$0xf]
      %v2202 = vld [vmem:[%s2200 + $0x4] sm:$0xf]
      %v2203 = vld [vmem:[%s2200 + $0x8] sm:$0xf]
      %v2204 = vld [vmem:[%s2200 + $0xc] sm:$0xf]
      %s2205 = scalar_lea.vmem %s23, 2
      %v2206 = vld [vmem:[%s2205] sm:$0x1]
      %v2207 = vpack.c.bf16 %v2191, %v2191
      %v2208 = vpack.c.bf16 %v2193, %v2193
      %v2211 = vunpack.c.l.b16 %v2207
      %v2212 = vunpack.c.l.b16 %v2208
      %v2213 = vpack.c.b16 %v2212, %v2211
      %v2214 = vrot.slane %v2213, 3
      %v2215 = vrot.slane %v2213, 6
      %v2216 = vrot.slane %v2213, 1
      %vm2218 = vcmask 1044480
      %v2221 = vsel %vm2218, %v2213, %v2214
      %vm2223 = vcmask 1041408
      %v2225 = vsel %vm2223, %v2214, %v2215
      %vm2226 = vcmask 1046528
      %v2228 = vsel %vm2226, %v2225, %v2216
      %v2230 = vunpack.c.l.bf16 %v2221
      %v2231 = vunpack.c.h.bf16 %v2221
      %v2232 = vunpack.c.l.bf16 %v2228
      %v2233 = vunpack.c.h.bf16 %v2228
      %v2234 = vunpack.c.l.bf16 %v2216
      %v2235 = vunpack.c.l.bf16 %v2195
      %v2236 = vunpack.c.l.bf16 %v2196
      %v2237 = vunpack.c.l.bf16 %v2197
      %v2238 = vunpack.c.l.bf16 %v2198
      %v2239 = vunpack.c.l.bf16 %v2199
      %2245 = vrot.lane.b32.xlu0 %v2235, 32
      %v2246 = vpop.permute.xlu0 %2245
      %2247 = vrot.lane.b32.xlu0 %v2236, 32
      %v2248 = vpop.permute.xlu0 %2247
      %2249 = vrot.lane.b32.xlu0 %v2237, 32
      %v2250 = vpop.permute.xlu0 %2249
      %2251 = vrot.lane.b32.xlu0 %v2238, 32
      %v2252 = vpop.permute.xlu0 %2251
      %2253 = vrot.lane.b32.xlu0 %v2239, 32
      %v2254 = vpop.permute.xlu0 %2253
      %v2260 = vmul.f32 %v2230, %v2246
      %v2261 = vmul.f32 %v2231, %v2248
      %v2262 = vmul.f32 %v2232, %v2250
      %v2263 = vmul.f32 %v2233, %v2252
      %v2264 = vmul.f32 %v2234, %v2254
      %v2265 = vpack.c.bf16 %v2261, %v2260
      %v2266 = vpack.c.bf16 %v2263, %v2262
      %v2267 = vpack.c.bf16 %v2264, %v2264
      %2268 = vrot.lane.b32.xlu0 %v2235, 64
      %v2269 = vpop.permute.xlu0 %2268
      %2270 = vrot.lane.b32.xlu0 %v2236, 64
      %v2271 = vpop.permute.xlu0 %2270
      %2272 = vrot.lane.b32.xlu0 %v2237, 64
      %v2273 = vpop.permute.xlu0 %2272
      %2274 = vrot.lane.b32.xlu0 %v2238, 64
      %v2275 = vpop.permute.xlu0 %2274
      %2276 = vrot.lane.b32.xlu0 %v2239, 64
      %v2277 = vpop.permute.xlu0 %2276
      %v2283 = vmul.f32 %v2230, %v2269
      %v2284 = vmul.f32 %v2231, %v2271
      %v2285 = vmul.f32 %v2232, %v2273
      %v2286 = vmul.f32 %v2233, %v2275
      %v2287 = vmul.f32 %v2234, %v2277
      %v2288 = vpack.c.bf16 %v2284, %v2283
      %v2289 = vpack.c.bf16 %v2286, %v2285
      %v2290 = vpack.c.bf16 %v2287, %v2287
      %v2291 = vpack.c.bf16 %v2193, %v2191
      %2295 = vrot.lane.b32.xlu0 %v2265, 96
      %v2296 = vpop.permute.xlu0 %2295
      %2297 = vrot.lane.b32.xlu0 %v2266, 96
      %v2298 = vpop.permute.xlu0 %2297
      %2299 = vrot.lane.b32.xlu0 %v2267, 96
      %v2300 = vpop.permute.xlu0 %2299
      %v2302 = vsel %vm1619, %v2291, 0
      %v2305 = vsel %vm1619, %v2296, 0
      %v2308 = vsel %vm1619, %v2298, 0
      %v2311 = vsel %vm1619, %v2300, 0
      %2313 = vmatpush.bf16.xpose.msra.mxu0 0
      %2314 = vmatpush.bf16.xpose.msra.mxu0 0
      %2315 = vmatpush.bf16.xpose.msra.mxu0 0
      %2316 = vmatpush.bf16.xpose.msra.mxu0 0
      %2317 = vmatpush.bf16.xpose.msra.mxu0 0
      %2318 = vmatpush.bf16.xpose.msra.mxu0 %v2311
      %2319 = vmatpush.bf16.xpose.msra.mxu0 %v2308
      %2320 = vmatpush.bf16.xpose.msra.mxu0 %v2305
      %2321 = vmatmul.bf16.gmra.mxu0 %v2302
      %v2322 = vpop.f32.mrf.mxu0
      %v2323 = vadd.f32 0.0, %v2322
      %v2324 = vpop.f32.mrf.mxu0
      %v2325 = vadd.f32 0.0, %v2324
      %2326 = vdwg.mxu0
      %vm2327 = vcmask 80896
      %v2328 = vsel %vm2327, %v2323, -inf
      %2329 = vmax.xlane.f32.xlu0 %v2328
      %v2330 = vpop.xlane.xlu0 %2329
      %vm2331 = vcmask 74752
      %v2332 = vsel %vm2331, %v2325, -inf
      %2333 = vmax.xlane.f32.xlu0 %v2332
      %v2334 = vpop.xlane.xlu0 %2333
      %vm2335 = vcmask 162896
      %v2336 = vsel %vm2335, %v2323, -inf
      %2337 = vmax.xlane.f32.xlu0 %v2336
      %v2338 = vpop.xlane.xlu0 %2337
      %vm2339 = vcmask 156752
      %v2340 = vsel %vm2339, %v2325, -inf
      %2341 = vmax.xlane.f32.xlu0 %v2340
      %v2342 = vpop.xlane.xlu0 %2341
      %vm2343 = vcmask 244896
      %v2344 = vsel %vm2343, %v2323, -inf
      %2345 = vmax.xlane.f32.xlu0 %v2344
      %v2346 = vpop.xlane.xlu0 %2345
      %vm2347 = vcmask 238752
      %v2348 = vsel %vm2347, %v2325, -inf
      %2349 = vmax.xlane.f32.xlu0 %v2348
      %v2350 = vpop.xlane.xlu0 %2349
      %vm2351 = vcmask 326896
      %v2352 = vsel %vm2351, %v2323, -inf
      %2353 = vmax.xlane.f32.xlu0 %v2352
      %v2354 = vpop.xlane.xlu0 %2353
      %vm2355 = vcmask 320752
      %v2356 = vsel %vm2355, %v2325, -inf
      %2357 = vmax.xlane.f32.xlu0 %v2356
      %v2358 = vpop.xlane.xlu0 %2357
      %v2359 = vsel %vm2327, %v2330, %v2338
      %v2360 = vsel %vm2327, %v2334, %v2342
      %vm2361 = vcmask 162816
      %v2362 = vsel %vm2361, %v2359, %v2346
      %v2363 = vsel %vm2361, %v2360, %v2350
      %vm2364 = vcmask 244736
      %v2365 = vsel %vm2364, %v2362, %v2354
      %v2366 = vsel %vm2364, %v2363, %v2358
      %v2367 = vsub.f32 %v2323, %v2365
      %v2368 = vsub.f32 %v2325, %v2366
      %v2369 = vmul.f32 %v2367, 1.442695
      %v2370 = vpow.pop %v2369
      %v2371 = vmul.f32 %v2368, 1.442695
      %v2372 = vpow.pop %v2371
      %v2373 = vsel %vm2327, %v2370, 0.0
      %2374 = vadd.xlane.f32.xlu0 %v2373
      %v2375 = vpop.xlane.xlu0 %2374
      %v2376 = vsel %vm2331, %v2372, 0.0
      %2377 = vadd.xlane.f32.xlu0 %v2376
      %v2378 = vpop.xlane.xlu0 %2377
      %2381 = vrot.lane.b32.xlu0 %v2370, 118
      %v2382 = vpop.permute.xlu0 %2381
      %2383 = vrot.lane.b32.xlu0 %v2372, 118
      %v2384 = vpop.permute.xlu0 %2383
      %v2387 = vsel %vm2327, %v2382, 0.0
      %2388 = vadd.xlane.f32.xlu0 %v2387
      %v2389 = vpop.xlane.xlu0 %2388
      %v2390 = vsel %vm2331, %v2384, 0.0
      %2391 = vadd.xlane.f32.xlu0 %v2390
      %v2392 = vpop.xlane.xlu0 %2391
      %2393 = vrot.lane.b32.xlu0 %v2370, 108
      %v2394 = vpop.permute.xlu0 %2393
      %2395 = vrot.lane.b32.xlu0 %v2372, 108
      %v2396 = vpop.permute.xlu0 %2395
      %v2399 = vsel %vm2327, %v2394, 0.0
      %2400 = vadd.xlane.f32.xlu0 %v2399
      %v2401 = vpop.xlane.xlu0 %2400
      %v2402 = vsel %vm2331, %v2396, 0.0
      %2403 = vadd.xlane.f32.xlu0 %v2402
      %v2404 = vpop.xlane.xlu0 %2403
      %2405 = vrot.lane.b32.xlu0 %v2370, 98
      %v2406 = vpop.permute.xlu0 %2405
      %2407 = vrot.lane.b32.xlu0 %v2372, 98
      %v2408 = vpop.permute.xlu0 %2407
      %v2411 = vsel %vm2327, %v2406, 0.0
      %2412 = vadd.xlane.f32.xlu0 %v2411
      %v2413 = vpop.xlane.xlu0 %2412
      %v2414 = vsel %vm2331, %v2408, 0.0
      %2415 = vadd.xlane.f32.xlu0 %v2414
      %v2416 = vpop.xlane.xlu0 %2415
      %v2417 = vsel %vm1773, %v2375, %v2389
      %v2418 = vsel %vm1773, %v2378, %v2392
      %v2419 = vsel %vm1775, %v2417, %v2401
      %v2420 = vsel %vm1775, %v2418, %v2404
      %v2421 = vsel %vm1777, %v2419, %v2413
      %v2422 = vsel %vm1777, %v2420, %v2416
      %v2423 = vpack.c.bf16 %v2372, %v2370
      %2427 = vrot.lane.b32.xlu0 %v2288, 64
      %v2428 = vpop.permute.xlu0 %2427
      %2429 = vrot.lane.b32.xlu0 %v2289, 64
      %v2430 = vpop.permute.xlu0 %2429
      %2431 = vrot.lane.b32.xlu0 %v2290, 64
      %v2432 = vpop.permute.xlu0 %2431
      %vm2435 = vcmask 326656
      %v2437 = vsel %vm2435, %v2423, 0
      %v2440 = vsel %vm1790, %v2432, 0
      %2442 = vmatpush.bf16.msra.mxu0 0
      %2443 = vmatpush.bf16.msra.mxu0 0
      %2444 = vmatpush.bf16.msra.mxu0 0
      %2445 = vmatpush.bf16.msra.mxu0 0
      %2446 = vmatpush.bf16.msra.mxu0 0
      %2447 = vmatpush.bf16.msra.mxu0 %v2440
      %2448 = vmatpush.bf16.msra.mxu0 %v2430
      %2449 = vmatpush.bf16.msra.mxu0 %v2428
      %2450 = vmatmul.bf16.gmra.mxu0 %v2437
      %v2451 = vpop.f32.mrf.mxu0
      %v2452 = vadd.f32 0.0, %v2451
      %v2453 = vpop.f32.mrf.mxu0
      %v2454 = vadd.f32 0.0, %v2453
      %2455 = vdwg.mxu0
      %v2456 = vrcp.pop %v2421
      %v2457 = vrcp.pop %v2422
      %v2458 = vmul.f32 %v2452, %v2456
      %v2459 = vmul.f32 %v2454, %v2457
      %v2460 = vpack.c.bf16 %v2459, %v2458
      %v2462 = vperm.slane %v2206, 0
      %v2468 = vunpack.c.l.b16 %v2201
      %v2469 = vunpack.c.l.b16 %v2202
      %v2470 = vunpack.c.l.b16 %v2203
      %v2471 = vunpack.c.l.b16 %v2204
      %v2472 = vpack.c.b16 %v2469, %v2468
      %v2473 = vpack.c.b16 %v2471, %v2470
      %v2477 = vsel %vm1619, %v2460, 0
      %2479 = vmatpush.bf16.msra.mxu0 0
      %2480 = vmatpush.bf16.msra.mxu0 0
      %2481 = vmatpush.bf16.msra.mxu0 0
      %2482 = vmatpush.bf16.msra.mxu0 0
      %2483 = vmatpush.bf16.msra.mxu0 0
      %2484 = vmatpush.bf16.msra.mxu0 0
      %2485 = vmatpush.bf16.msra.mxu0 %v2473
      %2486 = vmatpush.bf16.msra.mxu0 %v2472
      %2487 = vmatmul.bf16.gmra.mxu0 %v2477
      %v2488 = vpop.f32.mrf.mxu0
      %v2489 = vadd.f32 %v2462, %v2488
      %v2490 = vpop.f32.mrf.mxu0
      %v2491 = vadd.f32 %v2462, %v2490
      %2492 = vdwg.mxu0
      %v2493 = vadd.f32 %v2153, %v2489
      %v2494 = vadd.f32 %v2154, %v2491
      %s2495 = scalar_lea.vmem %s25, 2
      %v2496 = vld [vmem:[%s2495] sm:$0x1]
      %s2497 = scalar_lea.vmem %s27, 2
      %v2498 = vld [vmem:[%s2497] sm:$0x1]
      %v2499 = vsel %vm1619, %v2493, 0.0
      %2500 = vadd.xlane.f32.xlu0 %v2499
      %v2501 = vpop.xlane.xlu0 %2500
      %v2502 = vsel %vm1579, %v2494, 0.0
      %2503 = vadd.xlane.f32.xlu0 %v2502
      %v2504 = vpop.xlane.xlu0 %2503
      %v2505 = vmul.f32 %v2501, %v1854
      %v2506 = vmul.f32 %v2504, %v1854
      %v2507 = vsub.f32 %v2493, %v2505
      %v2508 = vsub.f32 %v2494, %v2506
      %v2509 = vmul.f32 %v2507, %v2507
      %v2510 = vmul.f32 %v2508, %v2508
      %v2511 = vsel %vm1619, %v2509, 0.0
      %2512 = vadd.xlane.f32.xlu0 %v2511
      %v2513 = vpop.xlane.xlu0 %2512
      %v2514 = vsel %vm1579, %v2510, 0.0
      %2515 = vadd.xlane.f32.xlu0 %v2514
      %v2516 = vpop.xlane.xlu0 %2515
      %v2517 = vmul.f32 %v2513, %v1854
      %v2518 = vmul.f32 %v2516, %v1854
      %v2519 = vadd.f32 %v2517, 1e-05
      %v2520 = vadd.f32 %v2518, 1e-05
      %v2521 = vrsqrt.pop %v2519
      %v2522 = vmul.f32 %v2521, %v2519
      %v2523 = vmul.f32 %v2522, %v2521
      %v2524 = vmul.f32 0.5, %v2523
      %v2525 = vsub.f32 1.5, %v2524
      %v2526 = vmul.f32 %v2521, %v2525
      %vm2527 = vweird.f32 %v2519
      %vm2528 = vweird.f32 %v2521
      %vm2529 = vmor %vm2527, %vm2528
      %v2530 = vsel %vm2529, %v2521, %v2526
      %v2531 = vrsqrt.pop %v2520
      %v2532 = vmul.f32 %v2531, %v2520
      %v2533 = vmul.f32 %v2532, %v2531
      %v2534 = vmul.f32 0.5, %v2533
      %v2535 = vsub.f32 1.5, %v2534
      %v2536 = vmul.f32 %v2531, %v2535
      %vm2537 = vweird.f32 %v2520
      %vm2538 = vweird.f32 %v2531
      %vm2539 = vmor %vm2537, %vm2538
      %v2540 = vsel %vm2539, %v2531, %v2536
      %v2541 = vmul.f32 %v2507, %v2530
      %v2542 = vmul.f32 %v2508, %v2540
      %v2544 = vperm.slane %v2496, 0
      %v2546 = vmul.f32 %v2541, %v2544
      %v2547 = vmul.f32 %v2542, %v2544
      %v2549 = vperm.slane %v2498, 0
      %v2551 = vadd.f32 %v2546, %v2549
      %v2552 = vadd.f32 %v2547, %v2549
      %2553 = vst.msk [vmem:[#allocation2 + $0xc] sm:$0xff] %vm1619, %v2551
      %2554 = vst.msk [vmem:[#allocation2 + $0x14] sm:$0x3] %vm1579, %v2552
      %v2555 = vld [vmem:[#allocation2] sm:$0xff]
      %v2556 = vld [vmem:[#allocation2 + $0x8] sm:$0xff]
      %v2557 = vld [vmem:[#allocation2 + $0x10] sm:$0x3f]
      %v2558 = vld [vmem:[%s39] sm:$0xf]
      %v2559 = vld [vmem:[%s39 + $0x4] sm:$0xf]
      %v2560 = vld [vmem:[%s39 + $0x8] sm:$0xf]
      %v2561 = vld [vmem:[%s39 + $0xc] sm:$0xf]
      %v2562 = vpack.c.bf16 %v1017, %v1016
      %v2563 = vld [vmem:[%s41] sm:$0x1]
      %v2565 = vperm.slane %v2563, 0
      %v2571 = vunpack.c.l.b16 %v2558
      %v2572 = vunpack.c.l.b16 %v2559
      %v2573 = vunpack.c.l.b16 %v2560
      %v2574 = vunpack.c.l.b16 %v2561
      %v2575 = vpack.c.b16 %v2572, %v2571
      %v2576 = vpack.c.b16 %v2574, %v2573
      %v2580 = vsel %vm1619, %v2562, 0
      %2582 = vmatpush.bf16.msra.mxu0 0
      %2583 = vmatpush.bf16.msra.mxu0 0
      %2584 = vmatpush.bf16.msra.mxu0 0
      %2585 = vmatpush.bf16.msra.mxu0 0
      %2586 = vmatpush.bf16.msra.mxu0 0
      %2587 = vmatpush.bf16.msra.mxu0 0
      %2588 = vmatpush.bf16.msra.mxu0 %v2576
      %2589 = vmatpush.bf16.msra.mxu0 %v2575
      %2590 = vmatmul.bf16.gmra.mxu0 %v2580
      %v2591 = vpop.f32.mrf.mxu0
      %v2592 = vadd.f32 %v2565, %v2591
      %v2593 = vpop.f32.mrf.mxu0
      %v2594 = vadd.f32 %v2565, %v2593
      %2595 = vdwg.mxu0
      %v2596 = vld [vmem:[%s35] sm:$0xf]
      %v2597 = vld [vmem:[%s35 + $0x4] sm:$0xf]
      %v2598 = vld [vmem:[%s35 + $0x8] sm:$0xf]
      %v2599 = vld [vmem:[%s35 + $0xc] sm:$0xf]
      %v2600 = vpack.c.bf16 %v2556, %v2555
      %v2601 = vpack.c.bf16 %v2557, %v2557
      %v2602 = vld [vmem:[%s37] sm:$0x1]
      %v2604 = vperm.slane %v2602, 0
      %v2610 = vunpack.c.l.b16 %v2596
      %v2611 = vunpack.c.l.b16 %v2597
      %v2612 = vunpack.c.l.b16 %v2598
      %v2613 = vunpack.c.l.b16 %v2599
      %v2614 = vpack.c.b16 %v2611, %v2610
      %v2615 = vpack.c.b16 %v2613, %v2612
      %v2619 = vsel %vm1619, %v2600, 0
      %v2622 = vsel %vm1619, %v2601, 0
      %2624 = vmatpush.bf16.msra.mxu0 0
      %2625 = vmatpush.bf16.msra.mxu0 0
      %2626 = vmatpush.bf16.msra.mxu0 0
      %2627 = vmatpush.bf16.msra.mxu0 0
      %2628 = vmatpush.bf16.msra.mxu0 0
      %2629 = vmatpush.bf16.msra.mxu0 0
      %2630 = vmatpush.bf16.msra.mxu0 %v2615
      %2631 = vmatpush.bf16.msra.mxu0 %v2614
      %2632 = vmatmul.bf16.gmra.mxu0 %v2619
      %v2633 = vpop.f32.mrf.mxu0
      %v2634 = vadd.f32 %v2604, %v2633
      %v2635 = vpop.f32.mrf.mxu0
      %v2636 = vadd.f32 %v2604, %v2635
      %2637 = vmatmul.bf16.gmra.mxu0 %v2622
      %v2638 = vpop.f32.mrf.mxu0
      %v2639 = vadd.f32 %v2604, %v2638
      %v2640 = vpop.f32.mrf.mxu0
      %2641 = vdwg.mxu0
      %v2642 = vld [vmem:[%s59] sm:$0xf]
      %v2643 = vld [vmem:[%s59 + $0x4] sm:$0xf]
      %v2644 = vld [vmem:[%s59 + $0x8] sm:$0xf]
      %v2645 = vld [vmem:[%s59 + $0xc] sm:$0xf]
      %v2646 = vld [vmem:[%s59 + $0x10] sm:$0xf]
      %v2647 = vld [vmem:[%s59 + $0x14] sm:$0xf]
      %v2648 = vld [vmem:[%s59 + $0x18] sm:$0xf]
      %v2649 = vld [vmem:[%s59 + $0x1c] sm:$0xf]
      %v2650 = vld [vmem:[%s43] sm:$0xf]
      %v2651 = vld [vmem:[%s43 + $0x4] sm:$0xf]
      %v2652 = vld [vmem:[%s43 + $0x8] sm:$0xf]
      %v2653 = vld [vmem:[%s43 + $0xc] sm:$0xf]
      %v2654 = vld [vmem:[%s45] sm:$0x1]
      %v2655 = vpack.c.bf16 %v2592, %v2592
      %v2656 = vpack.c.bf16 %v2594, %v2594
      %v2659 = vunpack.c.l.b16 %v2655
      %v2660 = vunpack.c.l.b16 %v2656
      %v2661 = vpack.c.b16 %v2660, %v2659
      %v2663 = vunpack.c.l.bf16 %v2661
      %v2664 = vunpack.c.h.bf16 %v2661
      %v2665 = vunpack.c.l.bf16 %v2642
      %v2666 = vunpack.c.l.bf16 %v2643
      %v2667 = vunpack.c.l.bf16 %v2644
      %v2668 = vunpack.c.l.bf16 %v2645
      %v2669 = vunpack.c.l.bf16 %v2646
      %v2670 = vunpack.c.l.bf16 %v2647
      %v2671 = vunpack.c.l.bf16 %v2648
      %v2672 = vunpack.c.l.bf16 %v2649
      %v2673 = vmul.f32 %v2663, %v2665
      %v2674 = vmul.f32 %v2664, %v2666
      %v2675 = vmul.f32 %v2663, %v2667
      %v2676 = vmul.f32 %v2664, %v2668
      %v2677 = vmul.f32 %v2663, %v2669
      %v2678 = vmul.f32 %v2664, %v2670
      %v2679 = vmul.f32 %v2663, %v2671
      %v2680 = vmul.f32 %v2664, %v2672
      %v2681 = vpack.c.bf16 %v2674, %v2673
      %v2682 = vpack.c.bf16 %v2676, %v2675
      %v2683 = vpack.c.bf16 %v2678, %v2677
      %v2684 = vpack.c.bf16 %v2680, %v2679
      %2693 = vrot.lane.b32.xlu0 %v2665, 32
      %v2694 = vpop.permute.xlu0 %2693
      %2695 = vrot.lane.b32.xlu0 %v2666, 32
      %v2696 = vpop.permute.xlu0 %2695
      %2697 = vrot.lane.b32.xlu0 %v2667, 32
      %v2698 = vpop.permute.xlu0 %2697
      %2699 = vrot.lane.b32.xlu0 %v2668, 32
      %v2700 = vpop.permute.xlu0 %2699
      %2701 = vrot.lane.b32.xlu0 %v2669, 32
      %v2702 = vpop.permute.xlu0 %2701
      %2703 = vrot.lane.b32.xlu0 %v2670, 32
      %v2704 = vpop.permute.xlu0 %2703
      %2705 = vrot.lane.b32.xlu0 %v2671, 32
      %v2706 = vpop.permute.xlu0 %2705
      %2707 = vrot.lane.b32.xlu0 %v2672, 32
      %v2708 = vpop.permute.xlu0 %2707
      %v2717 = vmul.f32 %v2663, %v2694
      %v2718 = vmul.f32 %v2664, %v2696
      %v2719 = vmul.f32 %v2663, %v2698
      %v2720 = vmul.f32 %v2664, %v2700
      %v2721 = vmul.f32 %v2663, %v2702
      %v2722 = vmul.f32 %v2664, %v2704
      %v2723 = vmul.f32 %v2663, %v2706
      %v2724 = vmul.f32 %v2664, %v2708
      %v2725 = vpack.c.bf16 %v2718, %v2717
      %v2726 = vpack.c.bf16 %v2720, %v2719
      %v2727 = vpack.c.bf16 %v2722, %v2721
      %v2728 = vpack.c.bf16 %v2724, %v2723
      %v2729 = vpack.c.bf16 %v2636, %v2634
      %v2730 = vpack.c.bf16 %v2639, %v2639
      %v2732 = vsel %vm1619, %v2729, 0
      %v2735 = vsel %vm1619, %v2730, 0
      %v2738 = vsel %vm1619, %v2681, 0
      %v2741 = vsel %vm1619, %v2682, 0
      %v2744 = vsel %vm1619, %v2683, 0
      %v2747 = vsel %vm1619, %v2684, 0
      %2749 = vmatpush.bf16.xpose.msra.mxu0 0
      %2750 = vmatpush.bf16.xpose.msra.mxu0 0
      %2751 = vmatpush.bf16.xpose.msra.mxu0 0
      %2752 = vmatpush.bf16.xpose.msra.mxu0 0
      %2753 = vmatpush.bf16.xpose.msra.mxu0 %v2747
      %2754 = vmatpush.bf16.xpose.msra.mxu0 %v2744
      %2755 = vmatpush.bf16.xpose.msra.mxu0 %v2741
      %2756 = vmatpush.bf16.xpose.msra.mxu0 %v2738
      %2757 = vmatmul.bf16.gmra.mxu0 %v2732
      %v2758 = vpop.f32.mrf.mxu0
      %v2759 = vadd.f32 0.0, %v2758
      %v2760 = vpop.f32.mrf.mxu0
      %v2761 = vadd.f32 0.0, %v2760
      %2762 = vmatmul.bf16.gmra.mxu0 %v2735
      %v2763 = vpop.f32.mrf.mxu0
      %v2764 = vadd.f32 0.0, %v2763
      %v2765 = vpop.f32.mrf.mxu0
      %2766 = vdwg.mxu0
      %v2767 = vsel %vm1775, %v2759, -inf
      %2768 = vmax.xlane.f32.xlu0 %v2767
      %v2769 = vpop.xlane.xlu0 %2768
      %v2770 = vsel %vm1775, %v2761, -inf
      %2771 = vmax.xlane.f32.xlu0 %v2770
      %v2772 = vpop.xlane.xlu0 %2771
      %vm2773 = vcmask 128000
      %v2774 = vsel %vm2773, %v2764, -inf
      %2775 = vmax.xlane.f32.xlu0 %v2774
      %v2776 = vpop.xlane.xlu0 %2775
      %vm2777 = vcmask 261248
      %v2778 = vsel %vm2777, %v2759, -inf
      %2779 = vmax.xlane.f32.xlu0 %v2778
      %v2780 = vpop.xlane.xlu0 %2779
      %v2781 = vsel %vm2777, %v2761, -inf
      %2782 = vmax.xlane.f32.xlu0 %v2781
      %v2783 = vpop.xlane.xlu0 %2782
      %vm2784 = vcmask 259200
      %v2785 = vsel %vm2784, %v2764, -inf
      %2786 = vmax.xlane.f32.xlu0 %v2785
      %v2787 = vpop.xlane.xlu0 %2786
      %vm2788 = vcmask 392448
      %v2789 = vsel %vm2788, %v2759, -inf
      %2790 = vmax.xlane.f32.xlu0 %v2789
      %v2791 = vpop.xlane.xlu0 %2790
      %v2792 = vsel %vm2788, %v2761, -inf
      %2793 = vmax.xlane.f32.xlu0 %v2792
      %v2794 = vpop.xlane.xlu0 %2793
      %vm2795 = vcmask 390400
      %v2796 = vsel %vm2795, %v2764, -inf
      %2797 = vmax.xlane.f32.xlu0 %v2796
      %v2798 = vpop.xlane.xlu0 %2797
      %vm2799 = vcmask 523648
      %v2800 = vsel %vm2799, %v2759, -inf
      %2801 = vmax.xlane.f32.xlu0 %v2800
      %v2802 = vpop.xlane.xlu0 %2801
      %v2803 = vsel %vm2799, %v2761, -inf
      %2804 = vmax.xlane.f32.xlu0 %v2803
      %v2805 = vpop.xlane.xlu0 %2804
      %vm2806 = vcmask 521600
      %v2807 = vsel %vm2806, %v2764, -inf
      %2808 = vmax.xlane.f32.xlu0 %v2807
      %v2809 = vpop.xlane.xlu0 %2808
      %v2810 = vsel %vm1775, %v2769, %v2780
      %v2811 = vsel %vm1775, %v2772, %v2783
      %v2812 = vsel %vm1775, %v2776, %v2787
      %v2813 = vsel %vm1619, %v2810, %v2791
      %v2814 = vsel %vm1619, %v2811, %v2794
      %v2815 = vsel %vm1619, %v2812, %v2798
      %vm2816 = vcmask 392192
      %v2817 = vsel %vm2816, %v2813, %v2802
      %v2818 = vsel %vm2816, %v2814, %v2805
      %v2819 = vsel %vm2816, %v2815, %v2809
      %v2820 = vsub.f32 %v2759, %v2817
      %v2821 = vsub.f32 %v2761, %v2818
      %v2822 = vsub.f32 %v2764, %v2819
      %v2823 = vmul.f32 %v2820, 1.442695
      %v2824 = vpow.pop %v2823
      %v2825 = vmul.f32 %v2821, 1.442695
      %v2826 = vpow.pop %v2825
      %v2827 = vmul.f32 %v2822, 1.442695
      %v2828 = vpow.pop %v2827
      %v2829 = vsel %vm1775, %v2824, 0.0
      %2830 = vadd.xlane.f32.xlu0 %v2829
      %v2831 = vpop.xlane.xlu0 %2830
      %v2832 = vsel %vm1775, %v2826, 0.0
      %2833 = vadd.xlane.f32.xlu0 %v2832
      %v2834 = vpop.xlane.xlu0 %2833
      %v2835 = vsel %vm2773, %v2828, 0.0
      %2836 = vadd.xlane.f32.xlu0 %v2835
      %v2837 = vpop.xlane.xlu0 %2836
      %2841 = vrot.lane.b32.xlu0 %v2824, 112
      %v2842 = vpop.permute.xlu0 %2841
      %2843 = vrot.lane.b32.xlu0 %v2826, 112
      %v2844 = vpop.permute.xlu0 %2843
      %2845 = vrot.lane.b32.xlu0 %v2828, 112
      %v2846 = vpop.permute.xlu0 %2845
      %v2850 = vsel %vm1775, %v2842, 0.0
      %2851 = vadd.xlane.f32.xlu0 %v2850
      %v2852 = vpop.xlane.xlu0 %2851
      %v2853 = vsel %vm1775, %v2844, 0.0
      %2854 = vadd.xlane.f32.xlu0 %v2853
      %v2855 = vpop.xlane.xlu0 %2854
      %v2856 = vsel %vm2773, %v2846, 0.0
      %2857 = vadd.xlane.f32.xlu0 %v2856
      %v2858 = vpop.xlane.xlu0 %2857
      %2859 = vrot.lane.b32.xlu0 %v2824, 96
      %v2860 = vpop.permute.xlu0 %2859
      %2861 = vrot.lane.b32.xlu0 %v2826, 96
      %v2862 = vpop.permute.xlu0 %2861
      %2863 = vrot.lane.b32.xlu0 %v2828, 96
      %v2864 = vpop.permute.xlu0 %2863
      %v2868 = vsel %vm1775, %v2860, 0.0
      %2869 = vadd.xlane.f32.xlu0 %v2868
      %v2870 = vpop.xlane.xlu0 %2869
      %v2871 = vsel %vm1775, %v2862, 0.0
      %2872 = vadd.xlane.f32.xlu0 %v2871
      %v2873 = vpop.xlane.xlu0 %2872
      %v2874 = vsel %vm2773, %v2864, 0.0
      %2875 = vadd.xlane.f32.xlu0 %v2874
      %v2876 = vpop.xlane.xlu0 %2875
      %2877 = vrot.lane.b32.xlu0 %v2824, 80
      %v2878 = vpop.permute.xlu0 %2877
      %2879 = vrot.lane.b32.xlu0 %v2826, 80
      %v2880 = vpop.permute.xlu0 %2879
      %2881 = vrot.lane.b32.xlu0 %v2828, 80
      %v2882 = vpop.permute.xlu0 %2881
      %v2886 = vsel %vm1775, %v2878, 0.0
      %2887 = vadd.xlane.f32.xlu0 %v2886
      %v2888 = vpop.xlane.xlu0 %2887
      %v2889 = vsel %vm1775, %v2880, 0.0
      %2890 = vadd.xlane.f32.xlu0 %v2889
      %v2891 = vpop.xlane.xlu0 %2890
      %v2892 = vsel %vm2773, %v2882, 0.0
      %2893 = vadd.xlane.f32.xlu0 %v2892
      %v2894 = vpop.xlane.xlu0 %2893
      %v2895 = vsel %vm1773, %v2831, %v2852
      %v2896 = vsel %vm1773, %v2834, %v2855
      %v2897 = vsel %vm1773, %v2837, %v2858
      %v2898 = vsel %vm1775, %v2895, %v2870
      %v2899 = vsel %vm1775, %v2896, %v2873
      %v2900 = vsel %vm1775, %v2897, %v2876
      %v2901 = vsel %vm1777, %v2898, %v2888
      %v2902 = vsel %vm1777, %v2899, %v2891
      %v2903 = vsel %vm1777, %v2900, %v2894
      %v2904 = vpack.c.bf16 %v2826, %v2824
      %v2905 = vpack.c.bf16 %v2828, %v2828
      %2910 = vrot.lane.b32.xlu0 %v2725, 96
      %v2911 = vpop.permute.xlu0 %2910
      %2912 = vrot.lane.b32.xlu0 %v2726, 96
      %v2913 = vpop.permute.xlu0 %2912
      %2914 = vrot.lane.b32.xlu0 %v2727, 96
      %v2915 = vpop.permute.xlu0 %2914
      %2916 = vrot.lane.b32.xlu0 %v2728, 96
      %v2917 = vpop.permute.xlu0 %2916
      %vm2922 = vcmask 523264
      %v2924 = vsel %vm2922, %v2904, 0
      %v2927 = vsel %vm2922, %v2905, 0
      %2929 = vmatpush.bf16.msra.mxu0 0
      %2930 = vmatpush.bf16.msra.mxu0 0
      %2931 = vmatpush.bf16.msra.mxu0 0
      %2932 = vmatpush.bf16.msra.mxu0 0
      %2933 = vmatpush.bf16.msra.mxu0 %v2917
      %2934 = vmatpush.bf16.msra.mxu0 %v2915
      %2935 = vmatpush.bf16.msra.mxu0 %v2913
      %2936 = vmatpush.bf16.msra.mxu0 %v2911
      %2937 = vmatmul.bf16.gmra.mxu0 %v2924
      %v2938 = vpop.f32.mrf.mxu0
      %v2939 = vadd.f32 0.0, %v2938
      %v2940 = vpop.f32.mrf.mxu0
      %v2941 = vadd.f32 0.0, %v2940
      %2942 = vmatmul.bf16.gmra.mxu0 %v2927
      %v2943 = vpop.f32.mrf.mxu0
      %v2944 = vadd.f32 0.0, %v2943
      %v2945 = vpop.f32.mrf.mxu0
      %2946 = vdwg.mxu0
      %v2947 = vrcp.pop %v2901
      %v2948 = vrcp.pop %v2902
      %v2949 = vrcp.pop %v2903
      %v2950 = vmul.f32 %v2939, %v2947
      %v2951 = vmul.f32 %v2941, %v2948
      %v2952 = vmul.f32 %v2944, %v2949
      %v2953 = vpack.c.bf16 %v2951, %v2950
      %v2954 = vpack.c.bf16 %v2952, %v2952
      %v2956 = vperm.slane %v2654, 0
      %v2962 = vunpack.c.l.b16 %v2650
      %v2963 = vunpack.c.l.b16 %v2651
      %v2964 = vunpack.c.l.b16 %v2652
      %v2965 = vunpack.c.l.b16 %v2653
      %v2966 = vpack.c.b16 %v2963, %v2962
      %v2967 = vpack.c.b16 %v2965, %v2964
      %v2971 = vsel %vm1619, %v2953, 0
      %v2974 = vsel %vm1619, %v2954, 0
      %2976 = vmatpush.bf16.msra.mxu0 0
      %2977 = vmatpush.bf16.msra.mxu0 0
      %2978 = vmatpush.bf16.msra.mxu0 0
      %2979 = vmatpush.bf16.msra.mxu0 0
      %2980 = vmatpush.bf16.msra.mxu0 0
      %2981 = vmatpush.bf16.msra.mxu0 0
      %2982 = vmatpush.bf16.msra.mxu0 %v2967
      %2983 = vmatpush.bf16.msra.mxu0 %v2966
      %2984 = vmatmul.bf16.gmra.mxu0 %v2971
      %v2985 = vpop.f32.mrf.mxu0
      %v2986 = vadd.f32 %v2956, %v2985
      %v2987 = vpop.f32.mrf.mxu0
      %v2988 = vadd.f32 %v2956, %v2987
      %2989 = vmatmul.bf16.gmra.mxu0 %v2974
      %v2990 = vpop.f32.mrf.mxu0
      %v2991 = vadd.f32 %v2956, %v2990
      %v2992 = vpop.f32.mrf.mxu0
      %2993 = vdwg.mxu0
      %v2994 = vadd.f32 %v2555, %v2986
      %v2995 = vadd.f32 %v2556, %v2988
      %v2996 = vadd.f32 %v2557, %v2991
      %v2997 = vld [vmem:[%s47] sm:$0x1]
      %v2998 = vld [vmem:[%s49] sm:$0x1]
      %v2999 = vsel %vm1619, %v2994, 0.0
      %3000 = vadd.xlane.f32.xlu0 %v2999
      %v3001 = vpop.xlane.xlu0 %3000
      %v3002 = vsel %vm1619, %v2995, 0.0
      %3003 = vadd.xlane.f32.xlu0 %v3002
      %v3004 = vpop.xlane.xlu0 %3003
      %v3005 = vsel %vm1844, %v2996, 0.0
      %3006 = vadd.xlane.f32.xlu0 %v3005
      %v3007 = vpop.xlane.xlu0 %3006
      %v3008 = vmul.f32 %v3001, %v1854
      %v3009 = vmul.f32 %v3004, %v1854
      %v3010 = vmul.f32 %v3007, %v1854
      %v3011 = vsub.f32 %v2994, %v3008
      %v3012 = vsub.f32 %v2995, %v3009
      %v3013 = vsub.f32 %v2996, %v3010
      %v3014 = vmul.f32 %v3011, %v3011
      %v3015 = vmul.f32 %v3012, %v3012
      %v3016 = vmul.f32 %v3013, %v3013
      %v3017 = vsel %vm1619, %v3014, 0.0
      %3018 = vadd.xlane.f32.xlu0 %v3017
      %v3019 = vpop.xlane.xlu0 %3018
      %v3020 = vsel %vm1619, %v3015, 0.0
      %3021 = vadd.xlane.f32.xlu0 %v3020
      %v3022 = vpop.xlane.xlu0 %3021
      %v3023 = vsel %vm1844, %v3016, 0.0
      %3024 = vadd.xlane.f32.xlu0 %v3023
      %v3025 = vpop.xlane.xlu0 %3024
      %v3026 = vmul.f32 %v3019, %v1854
      %v3027 = vmul.f32 %v3022, %v1854
      %v3028 = vmul.f32 %v3025, %v1854
      %v3029 = vadd.f32 %v3026, 1e-05
      %v3030 = vadd.f32 %v3027, 1e-05
      %v3031 = vadd.f32 %v3028, 1e-05
      %v3032 = vrsqrt.pop %v3029
      %v3033 = vmul.f32 %v3032, %v3029
      %v3034 = vmul.f32 %v3033, %v3032
      %v3035 = vmul.f32 0.5, %v3034
      %v3036 = vsub.f32 1.5, %v3035
      %v3037 = vmul.f32 %v3032, %v3036
      %vm3038 = vweird.f32 %v3029
      %vm3039 = vweird.f32 %v3032
      %vm3040 = vmor %vm3038, %vm3039
      %v3041 = vsel %vm3040, %v3032, %v3037
      %v3042 = vrsqrt.pop %v3030
      %v3043 = vmul.f32 %v3042, %v3030
      %v3044 = vmul.f32 %v3043, %v3042
      %v3045 = vmul.f32 0.5, %v3044
      %v3046 = vsub.f32 1.5, %v3045
      %v3047 = vmul.f32 %v3042, %v3046
      %vm3048 = vweird.f32 %v3030
      %vm3049 = vweird.f32 %v3042
      %vm3050 = vmor %vm3048, %vm3049
      %v3051 = vsel %vm3050, %v3042, %v3047
      %v3052 = vrsqrt.pop %v3031
      %v3053 = vmul.f32 %v3052, %v3031
      %v3054 = vmul.f32 %v3053, %v3052
      %v3055 = vmul.f32 0.5, %v3054
      %v3056 = vsub.f32 1.5, %v3055
      %v3057 = vmul.f32 %v3052, %v3056
      %vm3058 = vweird.f32 %v3031
      %vm3059 = vweird.f32 %v3052
      %vm3060 = vmor %vm3058, %vm3059
      %v3061 = vsel %vm3060, %v3052, %v3057
      %v3062 = vmul.f32 %v3011, %v3041
      %v3063 = vmul.f32 %v3012, %v3051
      %v3064 = vmul.f32 %v3013, %v3061
      %v3066 = vperm.slane %v2997, 0
      %v3068 = vmul.f32 %v3062, %v3066
      %v3069 = vmul.f32 %v3063, %v3066
      %v3070 = vmul.f32 %v3064, %v3066
      %v3072 = vperm.slane %v2998, 0
      %v3074 = vadd.f32 %v3068, %v3072
      %v3075 = vadd.f32 %v3069, %v3072
      %v3076 = vadd.f32 %v3070, %v3072
      %v3077 = vld [vmem:[%s51] sm:$0xf]
      %v3078 = vld [vmem:[%s51 + $0x4] sm:$0xf]
      %v3079 = vld [vmem:[%s51 + $0x8] sm:$0xf]
      %v3080 = vld [vmem:[%s51 + $0xc] sm:$0xf]
      %v3081 = vpack.c.bf16 %v3075, %v3074
      %v3082 = vpack.c.bf16 %v3076, %v3076
      %v3083 = vld [vmem:[%s53] sm:$0x1]
      %v3085 = vperm.slane %v3083, 0
      %v3091 = vunpack.c.l.b16 %v3077
      %v3092 = vunpack.c.l.b16 %v3078
      %v3093 = vunpack.c.l.b16 %v3079
      %v3094 = vunpack.c.l.b16 %v3080
      %v3095 = vpack.c.b16 %v3092, %v3091
      %v3096 = vpack.c.b16 %v3094, %v3093
      %v3100 = vsel %vm1619, %v3081, 0
      %v3103 = vsel %vm1619, %v3082, 0
      %3105 = vmatpush.bf16.msra.mxu0 0
      %3106 = vmatpush.bf16.msra.mxu0 0
      %3107 = vmatpush.bf16.msra.mxu0 0
      %3108 = vmatpush.bf16.msra.mxu0 0
      %3109 = vmatpush.bf16.msra.mxu0 0
      %3110 = vmatpush.bf16.msra.mxu0 0
      %3111 = vmatpush.bf16.msra.mxu0 %v3096
      %3112 = vmatpush.bf16.msra.mxu0 %v3095
      %3113 = vmatmul.bf16.gmra.mxu0 %v3100
      %v3114 = vpop.f32.mrf.mxu0
      %v3115 = vadd.f32 %v3085, %v3114
      %v3116 = vpop.f32.mrf.mxu0
      %v3117 = vadd.f32 %v3085, %v3116
      %3118 = vmatmul.bf16.gmra.mxu0 %v3103
      %v3119 = vpop.f32.mrf.mxu0
      %v3120 = vadd.f32 %v3085, %v3119
      %v3121 = vpop.f32.mrf.mxu0
      %3122 = vdwg.mxu0
      %v3123 = vmul.f32 %v3115, 1.702
      %v3124 = vmul.f32 %v3117, 1.702
      %v3125 = vmul.f32 %v3120, 1.702
      %v3126 = vxor.u32 %v3123, 2147483648
      %v3127 = vxor.u32 %v3124, 2147483648
      %v3128 = vxor.u32 %v3125, 2147483648
      %v3129 = vmul.f32 %v3126, 1.442695
      %v3130 = vpow.pop %v3129
      %v3131 = vmul.f32 %v3127, 1.442695
      %v3132 = vpow.pop %v3131
      %v3133 = vmul.f32 %v3128, 1.442695
      %v3134 = vpow.pop %v3133
      %v3135 = vadd.f32 %v3130, 1.0
      %v3136 = vadd.f32 %v3132, 1.0
      %v3137 = vadd.f32 %v3134, 1.0
      %v3138 = vrcp.pop %v3135
      %v3139 = vmul.f32 %v3135, %v3138
      %v3140 = vsub.f32 1.0, %v3139
      %v3141 = vmul.f32 %v3138, %v3140
      %v3142 = vadd.f32 %v3138, %v3141
      %vm3143 = vweird.f32 %v3135
      %vm3144 = vweird.f32 %v3138
      %vm3145 = vmor %vm3143, %vm3144
      %v3146 = vsel %vm3145, %v3138, %v3142
      %v3147 = vand.u32 2147483647, %v3135
      %vm3148 = vcmp.eq.f32.partialorder %v3147, 8.507059e+37
      %v3149 = vand.u32 %v3135, 2147483648
      %v3150 = vor.u32 1.1754944e-38, %v3149
      %v3151 = vsel %vm3148, %v3150, %v3146
      %v3152 = vmul.f32 1.0, %v3151
      %v3153 = vrcp.pop %v3136
      %v3154 = vmul.f32 %v3136, %v3153
      %v3155 = vsub.f32 1.0, %v3154
      %v3156 = vmul.f32 %v3153, %v3155
      %v3157 = vadd.f32 %v3153, %v3156
      %vm3158 = vweird.f32 %v3136
      %vm3159 = vweird.f32 %v3153
      %vm3160 = vmor %vm3158, %vm3159
      %v3161 = vsel %vm3160, %v3153, %v3157
      %v3162 = vand.u32 2147483647, %v3136
      %vm3163 = vcmp.eq.f32.partialorder %v3162, 8.507059e+37
      %v3164 = vand.u32 %v3136, 2147483648
      %v3165 = vor.u32 1.1754944e-38, %v3164
      %v3166 = vsel %vm3163, %v3165, %v3161
      %v3167 = vmul.f32 1.0, %v3166
      %v3168 = vrcp.pop %v3137
      %v3169 = vmul.f32 %v3137, %v3168
      %v3170 = vsub.f32 1.0, %v3169
      %v3171 = vmul.f32 %v3168, %v3170
      %v3172 = vadd.f32 %v3168, %v3171
      %vm3173 = vweird.f32 %v3137
      %vm3174 = vweird.f32 %v3168
      %vm3175 = vmor %vm3173, %vm3174
      %v3176 = vsel %vm3175, %v3168, %v3172
      %v3177 = vand.u32 2147483647, %v3137
      %vm3178 = vcmp.eq.f32.partialorder %v3177, 8.507059e+37
      %v3179 = vand.u32 %v3137, 2147483648
      %v3180 = vor.u32 1.1754944e-38, %v3179
      %v3181 = vsel %vm3178, %v3180, %v3176
      %v3182 = vmul.f32 1.0, %v3181
      %v3183 = vmul.f32 %v3115, %v3152
      %v3184 = vmul.f32 %v3117, %v3167
      %v3185 = vmul.f32 %v3120, %v3182
      %v3186 = vld [vmem:[%s55] sm:$0xf]
      %v3187 = vld [vmem:[%s55 + $0x4] sm:$0xf]
      %v3188 = vld [vmem:[%s55 + $0x8] sm:$0xf]
      %v3189 = vld [vmem:[%s55 + $0xc] sm:$0xf]
      %v3190 = vld [vmem:[%s55 + $0x10] sm:$0xf]
      %v3191 = vld [vmem:[%s55 + $0x14] sm:$0xf]
      %v3192 = vld [vmem:[%s55 + $0x18] sm:$0xf]
      %v3193 = vld [vmem:[%s55 + $0x1c] sm:$0xf]
      %v3194 = vld [vmem:[%s55 + $0x20] sm:$0xf]
      %v3195 = vld [vmem:[%s55 + $0x24] sm:$0xf]
      %v3196 = vld [vmem:[%s55 + $0x28] sm:$0xf]
      %v3197 = vld [vmem:[%s55 + $0x2c] sm:$0xf]
      %v3198 = vld [vmem:[%s55 + $0x30] sm:$0xf]
      %v3199 = vld [vmem:[%s55 + $0x34] sm:$0xf]
      %v3200 = vld [vmem:[%s55 + $0x38] sm:$0xf]
      %v3201 = vld [vmem:[%s55 + $0x3c] sm:$0xf]
      %v3202 = vpack.c.bf16 %v3184, %v3183
      %v3203 = vpack.c.bf16 %v3185, %v3185
      %v3220 = vunpack.c.l.b16 %v3186
      %v3221 = vunpack.c.l.b16 %v3187
      %v3222 = vunpack.c.l.b16 %v3188
      %v3223 = vunpack.c.l.b16 %v3189
      %v3224 = vunpack.c.l.b16 %v3190
      %v3225 = vunpack.c.l.b16 %v3191
      %v3226 = vunpack.c.l.b16 %v3192
      %v3227 = vunpack.c.l.b16 %v3193
      %v3228 = vunpack.c.l.b16 %v3194
      %v3229 = vunpack.c.l.b16 %v3195
      %v3230 = vunpack.c.l.b16 %v3196
      %v3231 = vunpack.c.l.b16 %v3197
      %v3232 = vunpack.c.l.b16 %v3198
      %v3233 = vunpack.c.l.b16 %v3199
      %v3234 = vunpack.c.l.b16 %v3200
      %v3235 = vunpack.c.l.b16 %v3201
      %v3236 = vpack.c.b16 %v3221, %v3220
      %v3237 = vpack.c.b16 %v3223, %v3222
      %v3238 = vpack.c.b16 %v3225, %v3224
      %v3239 = vpack.c.b16 %v3227, %v3226
      %v3240 = vpack.c.b16 %v3229, %v3228
      %v3241 = vpack.c.b16 %v3231, %v3230
      %v3242 = vpack.c.b16 %v3233, %v3232
      %v3243 = vpack.c.b16 %v3235, %v3234
      %3252 = vmatpush.bf16.msra.mxu0 %v3243
      %3253 = vmatpush.bf16.msra.mxu0 %v3242
      %3254 = vmatpush.bf16.msra.mxu0 %v3241
      %3255 = vmatpush.bf16.msra.mxu0 %v3240
      %3256 = vmatpush.bf16.msra.mxu0 %v3239
      %3257 = vmatpush.bf16.msra.mxu0 %v3238
      %3258 = vmatpush.bf16.msra.mxu0 %v3237
      %3259 = vmatpush.bf16.msra.mxu0 %v3236
      %3260 = vmatmul.bf16.gmra.mxu0 %v3202
      %v3261 = vpop.f32.mrf.mxu0
      %v3262 = vadd.f32 0.0, %v3261
      %v3263 = vpop.f32.mrf.mxu0
      %v3264 = vadd.f32 0.0, %v3263
      %3265 = vmatmul.bf16.gmra.mxu0 %v3203
      %v3266 = vpop.f32.mrf.mxu0
      %v3267 = vadd.f32 0.0, %v3266
      %v3268 = vpop.f32.mrf.mxu0
      %3269 = vdwg.mxu0
      %v3270 = vadd.f32 %v2994, %v3262
      %v3271 = vadd.f32 %v2995, %v3264
      %v3272 = vadd.f32 %v2996, %v3267
      %v3273 = vld [vmem:[%s57] sm:$0x1]
      %v3275 = vperm.slane %v3273, 0
      %v3277 = vadd.f32 %v3270, %v3275
      %v3278 = vadd.f32 %v3271, %v3275
      %v3279 = vadd.f32 %v3272, %v3275
      %v3280 = vld [vmem:[%s61] sm:$0xff]
      %v3281 = vld [vmem:[%s61 + $0x8] sm:$0xff]
      %v3282 = vld [vmem:[%s61 + $0x10] sm:$0x3f]
      %v3283 = vld [vmem:[%s63] sm:$0xff]
      %v3284 = vld [vmem:[%s63 + $0x8] sm:$0xff]
      %v3285 = vld [vmem:[%s63 + $0x10] sm:$0x3f]
      %v3286 = vsel %vm1619, %v3277, 0.0
      %3287 = vadd.xlane.f32.xlu0 %v3286
      %v3288 = vpop.xlane.xlu0 %3287
      %v3289 = vsel %vm1619, %v3278, 0.0
      %3290 = vadd.xlane.f32.xlu0 %v3289
      %v3291 = vpop.xlane.xlu0 %3290
      %v3292 = vsel %vm1844, %v3279, 0.0
      %3293 = vadd.xlane.f32.xlu0 %v3292
      %v3294 = vpop.xlane.xlu0 %3293
      %v3295 = vmul.f32 %v3288, %v1854
      %v3296 = vmul.f32 %v3291, %v1854
      %v3297 = vmul.f32 %v3294, %v1854
      %v3298 = vsub.f32 %v3277, %v3295
      %v3299 = vsub.f32 %v3278, %v3296
      %v3300 = vsub.f32 %v3279, %v3297
      %v3301 = vmul.f32 %v3298, %v3298
      %v3302 = vmul.f32 %v3299, %v3299
      %v3303 = vmul.f32 %v3300, %v3300
      %v3304 = vsel %vm1619, %v3301, 0.0
      %3305 = vadd.xlane.f32.xlu0 %v3304
      %v3306 = vpop.xlane.xlu0 %3305
      %v3307 = vsel %vm1619, %v3302, 0.0
      %3308 = vadd.xlane.f32.xlu0 %v3307
      %v3309 = vpop.xlane.xlu0 %3308
      %v3310 = vsel %vm1844, %v3303, 0.0
      %3311 = vadd.xlane.f32.xlu0 %v3310
      %v3312 = vpop.xlane.xlu0 %3311
      %v3313 = vmul.f32 %v3306, %v1854
      %v3314 = vmul.f32 %v3309, %v1854
      %v3315 = vmul.f32 %v3312, %v1854
      %v3316 = vadd.f32 %v3313, 1e-05
      %v3317 = vadd.f32 %v3314, 1e-05
      %v3318 = vadd.f32 %v3315, 1e-05
      %v3319 = vrsqrt.pop %v3316
      %v3320 = vmul.f32 %v3319, %v3316
      %v3321 = vmul.f32 %v3320, %v3319
      %v3322 = vmul.f32 0.5, %v3321
      %v3323 = vsub.f32 1.5, %v3322
      %v3324 = vmul.f32 %v3319, %v3323
      %vm3325 = vweird.f32 %v3316
      %vm3326 = vweird.f32 %v3319
      %vm3327 = vmor %vm3325, %vm3326
      %v3328 = vsel %vm3327, %v3319, %v3324
      %v3329 = vrsqrt.pop %v3317
      %v3330 = vmul.f32 %v3329, %v3317
      %v3331 = vmul.f32 %v3330, %v3329
      %v3332 = vmul.f32 0.5, %v3331
      %v3333 = vsub.f32 1.5, %v3332
      %v3334 = vmul.f32 %v3329, %v3333
      %vm3335 = vweird.f32 %v3317
      %vm3336 = vweird.f32 %v3329
      %vm3337 = vmor %vm3335, %vm3336
      %v3338 = vsel %vm3337, %v3329, %v3334
      %v3339 = vrsqrt.pop %v3318
      %v3340 = vmul.f32 %v3339, %v3318
      %v3341 = vmul.f32 %v3340, %v3339
      %v3342 = vmul.f32 0.5, %v3341
      %v3343 = vsub.f32 1.5, %v3342
      %v3344 = vmul.f32 %v3339, %v3343
      %vm3345 = vweird.f32 %v3318
      %vm3346 = vweird.f32 %v3339
      %vm3347 = vmor %vm3345, %vm3346
      %v3348 = vsel %vm3347, %v3339, %v3344
      %v3349 = vmul.f32 %v3298, %v3328
      %v3350 = vmul.f32 %v3299, %v3338
      %v3351 = vmul.f32 %v3300, %v3348
      %v3352 = vmul.f32 %v3349, %v3280
      %v3353 = vmul.f32 %v3350, %v3281
      %v3354 = vmul.f32 %v3351, %v3282
      %v3355 = vadd.f32 %v3352, %v3283
      %v3356 = vadd.f32 %v3353, %v3284
      %v3357 = vadd.f32 %v3354, %v3285
      %3358 = vst.msk [vmem:[%s1006] sm:$0xff] %vm1619, %v3355
      %3359 = vst.msk [vmem:[%s1006 + $0x8] sm:$0xff] %vm1619, %v3356
      %3360 = vst.msk [vmem:[%s1006 + $0x10] sm:$0x3f] %vm1844, %v3357
      %p3361 = scmp.lt.s32.totalorder %s76, 1
      %s3362 = scalar_select %p3361, %s76, 1
      %s3363 = smul.addr %s3362, 3
      %s3364 = smul.addr %s3363, 8
      %s3365 = scalar_lea.vmem %s65, %s3364
      // Predicated region
      $region149: #{tpu_custom_call.1} parent=147 // pred_check
        %p3366 = pneg %p776
      $region150: #{tpu_custom_call.1} parent=147 // pred_check_branch
        %3368 = sbr.rel (%p3366) target = $region152
      $region151: #{tpu_custom_call.1} parent=147 // pred_region
        _
      $region152: #{tpu_custom_call.1} parent=147 // pred_fallthru
        _
    $region148: #{tpu_custom_call.1} parent=5 // pred_fallthru
      _
    %p3369 = scmp.le.s32.totalorder 2, %s71
    // Predicated region
    $region153: #{tpu_custom_call.1} parent=5 // pred_check
      %p3370 = pneg %p3369
    $region154: #{tpu_custom_call.1} parent=5 // pred_check_branch
      %3372 = sbr.rel (%p3370) target = $region156
    $region155: #{tpu_custom_call.1} parent=5 // pred_region
      %s3373 = ssub.s32 %s71, 2
      // Predicated region
      $region157: #{tpu_custom_call.1} parent=155 // pred_check
        %p3374 = pneg %p782
      $region158: #{tpu_custom_call.1} parent=155 // pred_check_branch
        %3376 = sbr.rel (%p3374) target = $region160
      $region159: #{tpu_custom_call.1} parent=155 // pred_region
        %p3377 = scmp.lt.s32.totalorder %s77, 1
        %s3378 = scalar_select %p3377, %s77, 1
        %s3379 = smul.addr %s3378, 3
        %s3380 = smul.addr %s3379, 8
        %s3381 = scalar_lea.vmem %s65, %s3380
      $region160: #{tpu_custom_call.1} parent=155 // pred_fallthru
        _
    $region156: #{tpu_custom_call.1} parent=5 // pred_fallthru
      _
  $region6: #{tpu_custom_call.1} parent=0 // loop_footer
    %s75 = sadd.s32 1, %s71
  $region7: #{tpu_custom_call.1} parent=0 // loop_footer_branch
    %70 = sbr.rel target = $region3
  $region8: #{tpu_custom_call.1} parent=0 // loop_exit
    _

</llo_original>
